<compile_context>
chip_gen: v5e
topology: v5e:2x2
jax: 0.10.0
libtpu: 0.0.40
codegen_flags: <defaults>
</compile_context>

<pallas_src>
import functools

import jax
import jax.numpy as jnp
from jax.experimental import pallas as pl
from jax.experimental.pallas import tpu as pltpu


def _recurrent_kernel(s_ref, w_in0_ref, b_in0_ref,
                      w_ih_ref, w_hh_ref, b_ref,
                      fc2_w_ref, fc2_b_ref,
                      h0_ref, c0_ref,
                      logits_ref, h_out_ref, c_out_ref,
                      slab_ref):
    L, B, H = h0_ref.shape
    T = s_ref.shape[0] // B

    # Layer-0 input projection, hoisted over ALL timesteps.  fc1 is already fused
    # into (w_in0, b_in0), so this single (T*B, D) @ (D, 4H) matmul covers
    # fc1 + x_t @ W_ih + bias for every timestep of layer 0.
    proj = (jnp.dot(s_ref[...], w_in0_ref[...],
                    preferred_element_type=jnp.float32) + b_in0_ref[...])

    h = None
    for l in range(L):
        if l > 0:
            # Hoisted input projection for layer l: one (T*B, H) @ (H, 4H) matmul
            # over the previous layer's outputs; bias folded in once per layer.
            proj = (jnp.dot(slab_ref[...], w_ih_ref[l],
                            preferred_element_type=jnp.float32) + b_ref[l])

        w_hh = w_hh_ref[l]          # (H, 4H) bf16, resident in VMEM for all T steps
        h = h0_ref[l]               # (B, H) f32
        c = c0_ref[l]               # (B, H) f32

        for t in range(T):
            # Only the recurrent matmul remains on the serial per-step path.
            gates = proj[t * B:(t + 1) * B, :] + jnp.dot(
                h.astype(jnp.bfloat16), w_hh, preferred_element_type=jnp.float32)
            i = jax.nn.sigmoid(gates[:, 0 * H:1 * H])
            f = jax.nn.sigmoid(gates[:, 1 * H:2 * H])
            g = jnp.tanh(gates[:, 2 * H:3 * H])
            o = jax.nn.sigmoid(gates[:, 3 * H:4 * H])
            c = f * c + i * g
            h = o * jnp.tanh(c)
            if l < L - 1:
                # Stage this layer's output as next layer's (time-major) input slab.
                slab_ref[t * B:(t + 1) * B, :] = h.astype(jnp.bfloat16)

        h_out_ref[l] = h
        c_out_ref[l] = c

    # fc2 on the top layer's last-timestep hidden state.
    logits_ref[...] = (jnp.dot(h.astype(jnp.bfloat16), fc2_w_ref[...],
                               preferred_element_type=jnp.float32)
                       + fc2_b_ref[...])


def prepare_params(params):
    """One-time conversion of torch-layout params into kernel-ready params.

    Fuses fc1 into layer 0's input projection and casts MXU operands to bf16
    (accumulation and all elementwise math stay f32 inside the kernel).
    """
    hp = jax.lax.Precision.HIGHEST
    fc1_w, fc1_b = params["fc1_w"], params["fc1_b"]
    w_ih, w_hh, b = params["w_ih"], params["w_hh"], params["b"]
    w_in0 = jnp.dot(fc1_w, w_ih[0], precision=hp)                 # (D, 4H)
    b_in0 = jnp.dot(fc1_b, w_ih[0], precision=hp) + b[0]          # (1, 4H)
    return {
        "w_in0": w_in0.astype(jnp.bfloat16),
        "b_in0": b_in0.astype(jnp.float32),
        "w_ih": w_ih.astype(jnp.bfloat16),     # entry 0 unused (fused above)
        "w_hh": w_hh.astype(jnp.bfloat16),
        "b": b.astype(jnp.float32),
        "fc2_w": params["fc2_w"].astype(jnp.bfloat16),
        "fc2_b": params["fc2_b"].astype(jnp.float32),
    }


def recurrent_forward(s, kp, state=None):
    """JAX wrapper mirroring Recurrent.forward.

    s: [B, D] (eval mode) or [B, T, D] (train mode).
    state: optional dict with 'h','c' of shape [B, L, H].
    Returns (logits [B, A], {'h': [B, L, H], 'c': [B, L, H]}).
    """
    s = jnp.asarray(s, jnp.float32)
    if s.ndim == 2:
        s = s[:, None, :]                      # [bsz, dim] -> [bsz, 1, dim]
    B, T, D = s.shape
    L, H = kp["w_hh"].shape[0], kp["w_hh"].shape[1]
    A = kp["fc2_w"].shape[1]

    # Time-major flatten: row t*B + b holds (batch b, timestep t), so each
    # timestep is a contiguous B-row slice of the hoisted projection in-kernel.
    s_tm = jnp.transpose(s, (1, 0, 2)).reshape(T * B, D).astype(jnp.bfloat16)

    if state is None:
        h0 = jnp.zeros((L, B, H), jnp.float32)
        c0 = jnp.zeros((L, B, H), jnp.float32)
    else:
        h0 = jnp.transpose(state["h"], (1, 0, 2)).astype(jnp.float32)
        c0 = jnp.transpose(state["c"], (1, 0, 2)).astype(jnp.float32)

    vmem = functools.partial(pl.BlockSpec, memory_space=pltpu.MemorySpace.VMEM)
    logits, h_out, c_out = pl.pallas_call(
        _recurrent_kernel,
        out_shape=(
            jax.ShapeDtypeStruct((B, A), jnp.float32),
            jax.ShapeDtypeStruct((L, B, H), jnp.float32),
            jax.ShapeDtypeStruct((L, B, H), jnp.float32),
        ),
        in_specs=[vmem() for _ in range(10)],
        out_specs=(vmem(), vmem(), vmem()),
        scratch_shapes=[pltpu.VMEM((T * B, H), jnp.bfloat16)],   # inter-layer slab
        input_output_aliases={8: 1, 9: 2},      # h0 -> h_out, c0 -> c_out
    )(s_tm, kp["w_in0"], kp["b_in0"], kp["w_ih"], kp["w_hh"], kp["b"],
      kp["fc2_w"], kp["fc2_b"], h0, c0)

    return logits, {"h": jnp.transpose(h_out, (1, 0, 2)),
                    "c": jnp.transpose(c_out, (1, 0, 2))}


def init_params(key, state_dim, action_dim, layer_num, hidden):
    """Deterministic synthetic parameters (shapes match the torch module)."""
    ks = jax.random.split(key, 7)
    u = lambda k, shape, bound: jax.random.uniform(k, shape, jnp.float32, -bound, bound)
    H = hidden
    return {
        "fc1_w": u(ks[0], (state_dim, H), 1.0 / jnp.sqrt(state_dim)),
        "fc1_b": u(ks[1], (1, H), 1.0 / jnp.sqrt(state_dim)),
        # per-layer LSTM weights, stored transposed; combined bias = b_ih + b_hh
        "w_ih": u(ks[2], (layer_num, H, 4 * H), 1.0 / jnp.sqrt(H)),
        "w_hh": u(ks[3], (layer_num, H, 4 * H), 1.0 / jnp.sqrt(H)),
        "b":    u(ks[4], (layer_num, 1, 4 * H), 1.0 / jnp.sqrt(H)),
        "fc2_w": u(ks[5], (H, action_dim), 1.0 / jnp.sqrt(H)),
        "fc2_b": u(ks[6], (1, action_dim), 1.0 / jnp.sqrt(H)),
    }


def _reference_forward(s, params, state=None):
    """Pure-JAX f32 reference of the same math (for a sanity check)."""
    s = jnp.asarray(s, jnp.float32)
    if s.ndim == 2:
        s = s[:, None, :]
    B, T, _ = s.shape
    H = params["fc1_w"].shape[1]
    L = params["w_ih"].shape[0]
    x = s @ params["fc1_w"] + params["fc1_b"]
    if state is None:
        h0 = jnp.zeros((L, B, H)); c0 = jnp.zeros((L, B, H))
    else:
        h0 = jnp.transpose(state["h"], (1, 0, 2)); c0 = jnp.transpose(state["c"], (1, 0, 2))
    hs, cs = [], []
    layer_in = x
    for l in range(L):
        h, c = h0[l], c0[l]
        outs = []
        for t in range(T):
            g = layer_in[:, t, :] @ params["w_ih"][l] + h @ params["w_hh"][l] + params["b"][l]
            i = jax.nn.sigmoid(g[:, :H]); f = jax.nn.sigmoid(g[:, H:2 * H])
            gg = jnp.tanh(g[:, 2 * H:3 * H]); o = jax.nn.sigmoid(g[:, 3 * H:])
            c = f * c + i * gg
            h = o * jnp.tanh(c)
            outs.append(h)
        layer_in = jnp.stack(outs, axis=1)
        hs.append(h); cs.append(c)
    logits = layer_in[:, -1] @ params["fc2_w"] + params["fc2_b"]
    return logits, {"h": jnp.stack(hs, axis=1), "c": jnp.stack(cs, axis=1)}


if __name__ == "__main__":
    B, T, D, H, L, A = 2, 8, 16, 128, 2, 6   # batch, seq, state_dim, hidden, layers, actions
    key = jax.random.PRNGKey(0)
    pkey, skey, s2key = jax.random.split(key, 3)
    params = init_params(pkey, D, A, L, H)
    kparams = prepare_params(params)          # one-time fuse + bf16 cast
    s = jax.random.normal(skey, (B, T, D), jnp.float32)

    fwd = jax.jit(recurrent_forward)

    # training-mode pass: [bsz, len, dim]
    logits, new_state = fwd(s, kparams, None)
    jax.block_until_ready((logits, new_state["h"], new_state["c"]))

    ref_logits, ref_state = _reference_forward(s, params, None)
    assert logits.shape == (B, A)
    assert new_state["h"].shape == (B, L, H) and new_state["c"].shape == (B, L, H)
    tol = dict(atol=2e-2, rtol=2e-2)
    assert jnp.allclose(logits, ref_logits, **tol)
    assert jnp.allclose(new_state["h"], ref_state["h"], **tol)
    assert jnp.allclose(new_state["c"], ref_state["c"], **tol)

    # eval-mode pass: [bsz, dim] input, carrying the recurrent state forward
    s2 = jax.random.normal(s2key, (B, D), jnp.float32)
    logits2, state2 = fwd(s2, kparams, new_state)
    jax.block_until_ready((logits2, state2["h"], state2["c"]))
    ref_logits2, ref_state2 = _reference_forward(s2, params, new_state)
    assert jnp.allclose(logits2, ref_logits2, **tol)
    assert jnp.allclose(state2["h"], ref_state2["h"], **tol)
    assert jnp.allclose(state2["c"], ref_state2["c"], **tol)

    print("KERNEL_OK")
</pallas_src>

<mosaic_0001>
module attributes {stable_mosaic.version = 11 : i64} {
  func.func @_recurrent_kernel(%arg0: memref<16x16xbf16, #tpu.memory_space<vmem>>, %arg1: memref<16x512xbf16, #tpu.memory_space<vmem>>, %arg2: memref<1x512xf32, #tpu.memory_space<vmem>>, %arg3: memref<2x128x512xbf16, #tpu.memory_space<vmem>>, %arg4: memref<2x128x512xbf16, #tpu.memory_space<vmem>>, %arg5: memref<2x1x512xf32, #tpu.memory_space<vmem>>, %arg6: memref<128x6xbf16, #tpu.memory_space<vmem>>, %arg7: memref<1x6xf32, #tpu.memory_space<vmem>>, %arg8: memref<2x2x128xf32, #tpu.memory_space<vmem>>, %arg9: memref<2x2x128xf32, #tpu.memory_space<vmem>>, %arg10: memref<2x6xf32, #tpu.memory_space<vmem>>, %arg11: memref<2x2x128xf32, #tpu.memory_space<vmem>>, %arg12: memref<2x2x128xf32, #tpu.memory_space<vmem>>, %arg13: memref<16x128xbf16, #tpu.memory_space<vmem>>) attributes {dimension_semantics = [], scalar_prefetch = 0 : i64, scratch_operands = 1 : i64, tpu.core_type = #tpu.core_type<tc>} {
    %c0 = arith.constant 0 : index
    %c0_0 = arith.constant 0 : index
    %0 = vector.load %arg0[%c0, %c0_0] : memref<16x16xbf16, #tpu.memory_space<vmem>>, vector<16x16xbf16>
    %c0_1 = arith.constant 0 : index
    %c0_2 = arith.constant 0 : index
    %1 = vector.load %arg1[%c0_1, %c0_2] : memref<16x512xbf16, #tpu.memory_space<vmem>>, vector<16x512xbf16>
    %cst = arith.constant dense<0.000000e+00> : vector<16x512xf32>
    %2 = tpu.matmul %0, %1, %cst {dimension_numbers = #tpu.dot_dimension_numbers<[1], [0], [0], [1], [0, 0, 1, 1], [], []>} : vector<16x16xbf16>, vector<16x512xbf16>, vector<16x512xf32> -> vector<16x512xf32>
    %c0_3 = arith.constant 0 : index
    %c0_4 = arith.constant 0 : index
    %3 = vector.load %arg2[%c0_3, %c0_4] : memref<1x512xf32, #tpu.memory_space<vmem>>, vector<1x512xf32>
    %4 = vector.broadcast %3 : vector<1x512xf32> to vector<16x512xf32>
    %5 = arith.addf %2, %4 : vector<16x512xf32>
    %c0_5 = arith.constant 0 : index
    %c0_6 = arith.constant 0 : index
    %c0_7 = arith.constant 0 : index
    %6 = vector.load %arg4[%c0_5, %c0_6, %c0_7] : memref<2x128x512xbf16, #tpu.memory_space<vmem>>, vector<1x128x512xbf16>
    %7 = vector.shape_cast %6 : vector<1x128x512xbf16> to vector<128x512xbf16>
    %c0_8 = arith.constant 0 : index
    %c0_9 = arith.constant 0 : index
    %c0_10 = arith.constant 0 : index
    %8 = vector.load %arg8[%c0_8, %c0_9, %c0_10] : memref<2x2x128xf32, #tpu.memory_space<vmem>>, vector<1x2x128xf32>
    %9 = vector.shape_cast %8 : vector<1x2x128xf32> to vector<2x128xf32>
    %c0_11 = arith.constant 0 : index
    %c0_12 = arith.constant 0 : index
    %c0_13 = arith.constant 0 : index
    %10 = vector.load %arg9[%c0_11, %c0_12, %c0_13] : memref<2x2x128xf32, #tpu.memory_space<vmem>>, vector<1x2x128xf32>
    %11 = vector.shape_cast %10 : vector<1x2x128xf32> to vector<2x128xf32>
    %12 = vector.extract_strided_slice %5 {offsets = [0, 0], sizes = [2, 512], strides = [1, 1]} : vector<16x512xf32> to vector<2x512xf32>
    %13 = arith.truncf %9 : vector<2x128xf32> to vector<2x128xbf16>
    %cst_14 = arith.constant dense<0.000000e+00> : vector<2x512xf32>
    %14 = tpu.matmul %13, %7, %cst_14 {dimension_numbers = #tpu.dot_dimension_numbers<[1], [0], [0], [1], [0, 0, 1, 1], [], []>} : vector<2x128xbf16>, vector<128x512xbf16>, vector<2x512xf32> -> vector<2x512xf32>
    %15 = arith.addf %12, %14 : vector<2x512xf32>
    %16 = vector.extract_strided_slice %15 {offsets = [0, 0], sizes = [2, 128], strides = [1, 1]} : vector<2x512xf32> to vector<2x128xf32>
    %17 = arith.negf %16 : vector<2x128xf32>
    %18 = math.exp %17 : vector<2x128xf32>
    %cst_15 = arith.constant 1.000000e+00 : f32
    %19 = vector.broadcast %cst_15 : f32 to vector<2x128xf32>
    %20 = arith.addf %19, %18 : vector<2x128xf32>
    %21 = arith.divf %19, %20 : vector<2x128xf32>
    %22 = vector.extract_strided_slice %15 {offsets = [0, 128], sizes = [2, 128], strides = [1, 1]} : vector<2x512xf32> to vector<2x128xf32>
    %23 = arith.negf %22 : vector<2x128xf32>
    %24 = math.exp %23 : vector<2x128xf32>
    %cst_16 = arith.constant 1.000000e+00 : f32
    %25 = vector.broadcast %cst_16 : f32 to vector<2x128xf32>
    %26 = arith.addf %25, %24 : vector<2x128xf32>
    %27 = arith.divf %25, %26 : vector<2x128xf32>
    %28 = vector.extract_strided_slice %15 {offsets = [0, 256], sizes = [2, 128], strides = [1, 1]} : vector<2x512xf32> to vector<2x128xf32>
    %29 = math.tanh %28 : vector<2x128xf32>
    %30 = vector.extract_strided_slice %15 {offsets = [0, 384], sizes = [2, 128], strides = [1, 1]} : vector<2x512xf32> to vector<2x128xf32>
    %31 = arith.negf %30 : vector<2x128xf32>
    %32 = math.exp %31 : vector<2x128xf32>
    %cst_17 = arith.constant 1.000000e+00 : f32
    %33 = vector.broadcast %cst_17 : f32 to vector<2x128xf32>
    %34 = arith.addf %33, %32 : vector<2x128xf32>
    %35 = arith.divf %33, %34 : vector<2x128xf32>
    %36 = arith.mulf %27, %11 : vector<2x128xf32>
    %37 = arith.mulf %21, %29 : vector<2x128xf32>
    %38 = arith.addf %36, %37 : vector<2x128xf32>
    %39 = math.tanh %38 : vector<2x128xf32>
    %40 = arith.mulf %35, %39 : vector<2x128xf32>
    %41 = arith.truncf %40 : vector<2x128xf32> to vector<2x128xbf16>
    %c0_18 = arith.constant 0 : index
    %c0_19 = arith.constant 0 : index
    %42 = vector.load %arg13[%c0_18, %c0_19] : memref<16x128xbf16, #tpu.memory_space<vmem>>, vector<2x128xbf16>
    tpu.vector_store %arg13[%c0_18, %c0_19], %41 {strides = array<i32>} : memref<16x128xbf16, #tpu.memory_space<vmem>>, vector<2x128xbf16>,
    %43 = vector.extract_strided_slice %5 {offsets = [2, 0], sizes = [2, 512], strides = [1, 1]} : vector<16x512xf32> to vector<2x512xf32>
    %44 = arith.truncf %40 : vector<2x128xf32> to vector<2x128xbf16>
    %cst_20 = arith.constant dense<0.000000e+00> : vector<2x512xf32>
    %45 = tpu.matmul %44, %7, %cst_20 {dimension_numbers = #tpu.dot_dimension_numbers<[1], [0], [0], [1], [0, 0, 1, 1], [], []>} : vector<2x128xbf16>, vector<128x512xbf16>, vector<2x512xf32> -> vector<2x512xf32>
    %46 = arith.addf %43, %45 : vector<2x512xf32>
    %47 = vector.extract_strided_slice %46 {offsets = [0, 0], sizes = [2, 128], strides = [1, 1]} : vector<2x512xf32> to vector<2x128xf32>
    %48 = arith.negf %47 : vector<2x128xf32>
    %49 = math.exp %48 : vector<2x128xf32>
    %cst_21 = arith.constant 1.000000e+00 : f32
    %50 = vector.broadcast %cst_21 : f32 to vector<2x128xf32>
    %51 = arith.addf %50, %49 : vector<2x128xf32>
    %52 = arith.divf %50, %51 : vector<2x128xf32>
    %53 = vector.extract_strided_slice %46 {offsets = [0, 128], sizes = [2, 128], strides = [1, 1]} : vector<2x512xf32> to vector<2x128xf32>
    %54 = arith.negf %53 : vector<2x128xf32>
    %55 = math.exp %54 : vector<2x128xf32>
    %cst_22 = arith.constant 1.000000e+00 : f32
    %56 = vector.broadcast %cst_22 : f32 to vector<2x128xf32>
    %57 = arith.addf %56, %55 : vector<2x128xf32>
    %58 = arith.divf %56, %57 : vector<2x128xf32>
    %59 = vector.extract_strided_slice %46 {offsets = [0, 256], sizes = [2, 128], strides = [1, 1]} : vector<2x512xf32> to vector<2x128xf32>
    %60 = math.tanh %59 : vector<2x128xf32>
    %61 = vector.extract_strided_slice %46 {offsets = [0, 384], sizes = [2, 128], strides = [1, 1]} : vector<2x512xf32> to vector<2x128xf32>
    %62 = arith.negf %61 : vector<2x128xf32>
    %63 = math.exp %62 : vector<2x128xf32>
    %cst_23 = arith.constant 1.000000e+00 : f32
    %64 = vector.broadcast %cst_23 : f32 to vector<2x128xf32>
    %65 = arith.addf %64, %63 : vector<2x128xf32>
    %66 = arith.divf %64, %65 : vector<2x128xf32>
    %67 = arith.mulf %58, %38 : vector<2x128xf32>
    %68 = arith.mulf %52, %60 : vector<2x128xf32>
    %69 = arith.addf %67, %68 : vector<2x128xf32>
    %70 = math.tanh %69 : vector<2x128xf32>
    %71 = arith.mulf %66, %70 : vector<2x128xf32>
    %72 = arith.truncf %71 : vector<2x128xf32> to vector<2x128xbf16>
    %c2 = arith.constant 2 : index
    %c0_24 = arith.constant 0 : index
    %73 = vector.load %arg13[%c2, %c0_24] : memref<16x128xbf16, #tpu.memory_space<vmem>>, vector<2x128xbf16>
    tpu.vector_store %arg13[%c2, %c0_24], %72 {strides = array<i32>} : memref<16x128xbf16, #tpu.memory_space<vmem>>, vector<2x128xbf16>,
    %74 = vector.extract_strided_slice %5 {offsets = [4, 0], sizes = [2, 512], strides = [1, 1]} : vector<16x512xf32> to vector<2x512xf32>
    %75 = arith.truncf %71 : vector<2x128xf32> to vector<2x128xbf16>
    %cst_25 = arith.constant dense<0.000000e+00> : vector<2x512xf32>
    %76 = tpu.matmul %75, %7, %cst_25 {dimension_numbers = #tpu.dot_dimension_numbers<[1], [0], [0], [1], [0, 0, 1, 1], [], []>} : vector<2x128xbf16>, vector<128x512xbf16>, vector<2x512xf32> -> vector<2x512xf32>
    %77 = arith.addf %74, %76 : vector<2x512xf32>
    %78 = vector.extract_strided_slice %77 {offsets = [0, 0], sizes = [2, 128], strides = [1, 1]} : vector<2x512xf32> to vector<2x128xf32>
    %79 = arith.negf %78 : vector<2x128xf32>
    %80 = math.exp %79 : vector<2x128xf32>
    %cst_26 = arith.constant 1.000000e+00 : f32
    %81 = vector.broadcast %cst_26 : f32 to vector<2x128xf32>
    %82 = arith.addf %81, %80 : vector<2x128xf32>
    %83 = arith.divf %81, %82 : vector<2x128xf32>
    %84 = vector.extract_strided_slice %77 {offsets = [0, 128], sizes = [2, 128], strides = [1, 1]} : vector<2x512xf32> to vector<2x128xf32>
    %85 = arith.negf %84 : vector<2x128xf32>
    %86 = math.exp %85 : vector<2x128xf32>
    %cst_27 = arith.constant 1.000000e+00 : f32
    %87 = vector.broadcast %cst_27 : f32 to vector<2x128xf32>
    %88 = arith.addf %87, %86 : vector<2x128xf32>
    %89 = arith.divf %87, %88 : vector<2x128xf32>
    %90 = vector.extract_strided_slice %77 {offsets = [0, 256], sizes = [2, 128], strides = [1, 1]} : vector<2x512xf32> to vector<2x128xf32>
    %91 = math.tanh %90 : vector<2x128xf32>
    %92 = vector.extract_strided_slice %77 {offsets = [0, 384], sizes = [2, 128], strides = [1, 1]} : vector<2x512xf32> to vector<2x128xf32>
    %93 = arith.negf %92 : vector<2x128xf32>
    %94 = math.exp %93 : vector<2x128xf32>
    %cst_28 = arith.constant 1.000000e+00 : f32
    %95 = vector.broadcast %cst_28 : f32 to vector<2x128xf32>
    %96 = arith.addf %95, %94 : vector<2x128xf32>
    %97 = arith.divf %95, %96 : vector<2x128xf32>
    %98 = arith.mulf %89, %69 : vector<2x128xf32>
    %99 = arith.mulf %83, %91 : vector<2x128xf32>
    %100 = arith.addf %98, %99 : vector<2x128xf32>
    %101 = math.tanh %100 : vector<2x128xf32>
    %102 = arith.mulf %97, %101 : vector<2x128xf32>
    %103 = arith.truncf %102 : vector<2x128xf32> to vector<2x128xbf16>
    %c4 = arith.constant 4 : index
    %c0_29 = arith.constant 0 : index
    %104 = vector.load %arg13[%c4, %c0_29] : memref<16x128xbf16, #tpu.memory_space<vmem>>, vector<2x128xbf16>
    tpu.vector_store %arg13[%c4, %c0_29], %103 {strides = array<i32>} : memref<16x128xbf16, #tpu.memory_space<vmem>>, vector<2x128xbf16>,
    %105 = vector.extract_strided_slice %5 {offsets = [6, 0], sizes = [2, 512], strides = [1, 1]} : vector<16x512xf32> to vector<2x512xf32>
    %106 = arith.truncf %102 : vector<2x128xf32> to vector<2x128xbf16>
    %cst_30 = arith.constant dense<0.000000e+00> : vector<2x512xf32>
    %107 = tpu.matmul %106, %7, %cst_30 {dimension_numbers = #tpu.dot_dimension_numbers<[1], [0], [0], [1], [0, 0, 1, 1], [], []>} : vector<2x128xbf16>, vector<128x512xbf16>, vector<2x512xf32> -> vector<2x512xf32>
    %108 = arith.addf %105, %107 : vector<2x512xf32>
    %109 = vector.extract_strided_slice %108 {offsets = [0, 0], sizes = [2, 128], strides = [1, 1]} : vector<2x512xf32> to vector<2x128xf32>
    %110 = arith.negf %109 : vector<2x128xf32>
    %111 = math.exp %110 : vector<2x128xf32>
    %cst_31 = arith.constant 1.000000e+00 : f32
    %112 = vector.broadcast %cst_31 : f32 to vector<2x128xf32>
    %113 = arith.addf %112, %111 : vector<2x128xf32>
    %114 = arith.divf %112, %113 : vector<2x128xf32>
    %115 = vector.extract_strided_slice %108 {offsets = [0, 128], sizes = [2, 128], strides = [1, 1]} : vector<2x512xf32> to vector<2x128xf32>
    %116 = arith.negf %115 : vector<2x128xf32>
    %117 = math.exp %116 : vector<2x128xf32>
    %cst_32 = arith.constant 1.000000e+00 : f32
    %118 = vector.broadcast %cst_32 : f32 to vector<2x128xf32>
    %119 = arith.addf %118, %117 : vector<2x128xf32>
    %120 = arith.divf %118, %119 : vector<2x128xf32>
    %121 = vector.extract_strided_slice %108 {offsets = [0, 256], sizes = [2, 128], strides = [1, 1]} : vector<2x512xf32> to vector<2x128xf32>
    %122 = math.tanh %121 : vector<2x128xf32>
    %123 = vector.extract_strided_slice %108 {offsets = [0, 384], sizes = [2, 128], strides = [1, 1]} : vector<2x512xf32> to vector<2x128xf32>
    %124 = arith.negf %123 : vector<2x128xf32>
    %125 = math.exp %124 : vector<2x128xf32>
    %cst_33 = arith.constant 1.000000e+00 : f32
    %126 = vector.broadcast %cst_33 : f32 to vector<2x128xf32>
    %127 = arith.addf %126, %125 : vector<2x128xf32>
    %128 = arith.divf %126, %127 : vector<2x128xf32>
    %129 = arith.mulf %120, %100 : vector<2x128xf32>
    %130 = arith.mulf %114, %122 : vector<2x128xf32>
    %131 = arith.addf %129, %130 : vector<2x128xf32>
    %132 = math.tanh %131 : vector<2x128xf32>
    %133 = arith.mulf %128, %132 : vector<2x128xf32>
    %134 = arith.truncf %133 : vector<2x128xf32> to vector<2x128xbf16>
    %c6 = arith.constant 6 : index
    %c0_34 = arith.constant 0 : index
    %135 = vector.load %arg13[%c6, %c0_34] : memref<16x128xbf16, #tpu.memory_space<vmem>>, vector<2x128xbf16>
    tpu.vector_store %arg13[%c6, %c0_34], %134 {strides = array<i32>} : memref<16x128xbf16, #tpu.memory_space<vmem>>, vector<2x128xbf16>,
    %136 = vector.extract_strided_slice %5 {offsets = [8, 0], sizes = [2, 512], strides = [1, 1]} : vector<16x512xf32> to vector<2x512xf32>
    %137 = arith.truncf %133 : vector<2x128xf32> to vector<2x128xbf16>
    %cst_35 = arith.constant dense<0.000000e+00> : vector<2x512xf32>
    %138 = tpu.matmul %137, %7, %cst_35 {dimension_numbers = #tpu.dot_dimension_numbers<[1], [0], [0], [1], [0, 0, 1, 1], [], []>} : vector<2x128xbf16>, vector<128x512xbf16>, vector<2x512xf32> -> vector<2x512xf32>
    %139 = arith.addf %136, %138 : vector<2x512xf32>
    %140 = vector.extract_strided_slice %139 {offsets = [0, 0], sizes = [2, 128], strides = [1, 1]} : vector<2x512xf32> to vector<2x128xf32>
    %141 = arith.negf %140 : vector<2x128xf32>
    %142 = math.exp %141 : vector<2x128xf32>
    %cst_36 = arith.constant 1.000000e+00 : f32
    %143 = vector.broadcast %cst_36 : f32 to vector<2x128xf32>
    %144 = arith.addf %143, %142 : vector<2x128xf32>
    %145 = arith.divf %143, %144 : vector<2x128xf32>
    %146 = vector.extract_strided_slice %139 {offsets = [0, 128], sizes = [2, 128], strides = [1, 1]} : vector<2x512xf32> to vector<2x128xf32>
    %147 = arith.negf %146 : vector<2x128xf32>
    %148 = math.exp %147 : vector<2x128xf32>
    %cst_37 = arith.constant 1.000000e+00 : f32
    %149 = vector.broadcast %cst_37 : f32 to vector<2x128xf32>
    %150 = arith.addf %149, %148 : vector<2x128xf32>
    %151 = arith.divf %149, %150 : vector<2x128xf32>
    %152 = vector.extract_strided_slice %139 {offsets = [0, 256], sizes = [2, 128], strides = [1, 1]} : vector<2x512xf32> to vector<2x128xf32>
    %153 = math.tanh %152 : vector<2x128xf32>
    %154 = vector.extract_strided_slice %139 {offsets = [0, 384], sizes = [2, 128], strides = [1, 1]} : vector<2x512xf32> to vector<2x128xf32>
    %155 = arith.negf %154 : vector<2x128xf32>
    %156 = math.exp %155 : vector<2x128xf32>
    %cst_38 = arith.constant 1.000000e+00 : f32
    %157 = vector.broadcast %cst_38 : f32 to vector<2x128xf32>
    %158 = arith.addf %157, %156 : vector<2x128xf32>
    %159 = arith.divf %157, %158 : vector<2x128xf32>
    %160 = arith.mulf %151, %131 : vector<2x128xf32>
    %161 = arith.mulf %145, %153 : vector<2x128xf32>
    %162 = arith.addf %160, %161 : vector<2x128xf32>
    %163 = math.tanh %162 : vector<2x128xf32>
    %164 = arith.mulf %159, %163 : vector<2x128xf32>
    %165 = arith.truncf %164 : vector<2x128xf32> to vector<2x128xbf16>
    %c8 = arith.constant 8 : index
    %c0_39 = arith.constant 0 : index
    %166 = vector.load %arg13[%c8, %c0_39] : memref<16x128xbf16, #tpu.memory_space<vmem>>, vector<2x128xbf16>
    tpu.vector_store %arg13[%c8, %c0_39], %165 {strides = array<i32>} : memref<16x128xbf16, #tpu.memory_space<vmem>>, vector<2x128xbf16>,
    %167 = vector.extract_strided_slice %5 {offsets = [10, 0], sizes = [2, 512], strides = [1, 1]} : vector<16x512xf32> to vector<2x512xf32>
    %168 = arith.truncf %164 : vector<2x128xf32> to vector<2x128xbf16>
    %cst_40 = arith.constant dense<0.000000e+00> : vector<2x512xf32>
    %169 = tpu.matmul %168, %7, %cst_40 {dimension_numbers = #tpu.dot_dimension_numbers<[1], [0], [0], [1], [0, 0, 1, 1], [], []>} : vector<2x128xbf16>, vector<128x512xbf16>, vector<2x512xf32> -> vector<2x512xf32>
    %170 = arith.addf %167, %169 : vector<2x512xf32>
    %171 = vector.extract_strided_slice %170 {offsets = [0, 0], sizes = [2, 128], strides = [1, 1]} : vector<2x512xf32> to vector<2x128xf32>
    %172 = arith.negf %171 : vector<2x128xf32>
    %173 = math.exp %172 : vector<2x128xf32>
    %cst_41 = arith.constant 1.000000e+00 : f32
    %174 = vector.broadcast %cst_41 : f32 to vector<2x128xf32>
    %175 = arith.addf %174, %173 : vector<2x128xf32>
    %176 = arith.divf %174, %175 : vector<2x128xf32>
    %177 = vector.extract_strided_slice %170 {offsets = [0, 128], sizes = [2, 128], strides = [1, 1]} : vector<2x512xf32> to vector<2x128xf32>
    %178 = arith.negf %177 : vector<2x128xf32>
    %179 = math.exp %178 : vector<2x128xf32>
    %cst_42 = arith.constant 1.000000e+00 : f32
    %180 = vector.broadcast %cst_42 : f32 to vector<2x128xf32>
    %181 = arith.addf %180, %179 : vector<2x128xf32>
    %182 = arith.divf %180, %181 : vector<2x128xf32>
    %183 = vector.extract_strided_slice %170 {offsets = [0, 256], sizes = [2, 128], strides = [1, 1]} : vector<2x512xf32> to vector<2x128xf32>
    %184 = math.tanh %183 : vector<2x128xf32>
    %185 = vector.extract_strided_slice %170 {offsets = [0, 384], sizes = [2, 128], strides = [1, 1]} : vector<2x512xf32> to vector<2x128xf32>
    %186 = arith.negf %185 : vector<2x128xf32>
    %187 = math.exp %186 : vector<2x128xf32>
    %cst_43 = arith.constant 1.000000e+00 : f32
    %188 = vector.broadcast %cst_43 : f32 to vector<2x128xf32>
    %189 = arith.addf %188, %187 : vector<2x128xf32>
    %190 = arith.divf %188, %189 : vector<2x128xf32>
    %191 = arith.mulf %182, %162 : vector<2x128xf32>
    %192 = arith.mulf %176, %184 : vector<2x128xf32>
    %193 = arith.addf %191, %192 : vector<2x128xf32>
    %194 = math.tanh %193 : vector<2x128xf32>
    %195 = arith.mulf %190, %194 : vector<2x128xf32>
    %196 = arith.truncf %195 : vector<2x128xf32> to vector<2x128xbf16>
    %c10 = arith.constant 10 : index
    %c0_44 = arith.constant 0 : index
    %197 = vector.load %arg13[%c10, %c0_44] : memref<16x128xbf16, #tpu.memory_space<vmem>>, vector<2x128xbf16>
    tpu.vector_store %arg13[%c10, %c0_44], %196 {strides = array<i32>} : memref<16x128xbf16, #tpu.memory_space<vmem>>, vector<2x128xbf16>,
    %198 = vector.extract_strided_slice %5 {offsets = [12, 0], sizes = [2, 512], strides = [1, 1]} : vector<16x512xf32> to vector<2x512xf32>
    %199 = arith.truncf %195 : vector<2x128xf32> to vector<2x128xbf16>
    %cst_45 = arith.constant dense<0.000000e+00> : vector<2x512xf32>
    %200 = tpu.matmul %199, %7, %cst_45 {dimension_numbers = #tpu.dot_dimension_numbers<[1], [0], [0], [1], [0, 0, 1, 1], [], []>} : vector<2x128xbf16>, vector<128x512xbf16>, vector<2x512xf32> -> vector<2x512xf32>
    %201 = arith.addf %198, %200 : vector<2x512xf32>
    %202 = vector.extract_strided_slice %201 {offsets = [0, 0], sizes = [2, 128], strides = [1, 1]} : vector<2x512xf32> to vector<2x128xf32>
    %203 = arith.negf %202 : vector<2x128xf32>
    %204 = math.exp %203 : vector<2x128xf32>
    %cst_46 = arith.constant 1.000000e+00 : f32
    %205 = vector.broadcast %cst_46 : f32 to vector<2x128xf32>
    %206 = arith.addf %205, %204 : vector<2x128xf32>
    %207 = arith.divf %205, %206 : vector<2x128xf32>
    %208 = vector.extract_strided_slice %201 {offsets = [0, 128], sizes = [2, 128], strides = [1, 1]} : vector<2x512xf32> to vector<2x128xf32>
    %209 = arith.negf %208 : vector<2x128xf32>
    %210 = math.exp %209 : vector<2x128xf32>
    %cst_47 = arith.constant 1.000000e+00 : f32
    %211 = vector.broadcast %cst_47 : f32 to vector<2x128xf32>
    %212 = arith.addf %211, %210 : vector<2x128xf32>
    %213 = arith.divf %211, %212 : vector<2x128xf32>
    %214 = vector.extract_strided_slice %201 {offsets = [0, 256], sizes = [2, 128], strides = [1, 1]} : vector<2x512xf32> to vector<2x128xf32>
    %215 = math.tanh %214 : vector<2x128xf32>
    %216 = vector.extract_strided_slice %201 {offsets = [0, 384], sizes = [2, 128], strides = [1, 1]} : vector<2x512xf32> to vector<2x128xf32>
    %217 = arith.negf %216 : vector<2x128xf32>
    %218 = math.exp %217 : vector<2x128xf32>
    %cst_48 = arith.constant 1.000000e+00 : f32
    %219 = vector.broadcast %cst_48 : f32 to vector<2x128xf32>
    %220 = arith.addf %219, %218 : vector<2x128xf32>
    %221 = arith.divf %219, %220 : vector<2x128xf32>
    %222 = arith.mulf %213, %193 : vector<2x128xf32>
    %223 = arith.mulf %207, %215 : vector<2x128xf32>
    %224 = arith.addf %222, %223 : vector<2x128xf32>
    %225 = math.tanh %224 : vector<2x128xf32>
    %226 = arith.mulf %221, %225 : vector<2x128xf32>
    %227 = arith.truncf %226 : vector<2x128xf32> to vector<2x128xbf16>
    %c12 = arith.constant 12 : index
    %c0_49 = arith.constant 0 : index
    %228 = vector.load %arg13[%c12, %c0_49] : memref<16x128xbf16, #tpu.memory_space<vmem>>, vector<2x128xbf16>
    tpu.vector_store %arg13[%c12, %c0_49], %227 {strides = array<i32>} : memref<16x128xbf16, #tpu.memory_space<vmem>>, vector<2x128xbf16>,
    %229 = vector.extract_strided_slice %5 {offsets = [14, 0], sizes = [2, 512], strides = [1, 1]} : vector<16x512xf32> to vector<2x512xf32>
    %230 = arith.truncf %226 : vector<2x128xf32> to vector<2x128xbf16>
    %cst_50 = arith.constant dense<0.000000e+00> : vector<2x512xf32>
    %231 = tpu.matmul %230, %7, %cst_50 {dimension_numbers = #tpu.dot_dimension_numbers<[1], [0], [0], [1], [0, 0, 1, 1], [], []>} : vector<2x128xbf16>, vector<128x512xbf16>, vector<2x512xf32> -> vector<2x512xf32>
    %232 = arith.addf %229, %231 : vector<2x512xf32>
    %233 = vector.extract_strided_slice %232 {offsets = [0, 0], sizes = [2, 128], strides = [1, 1]} : vector<2x512xf32> to vector<2x128xf32>
    %234 = arith.negf %233 : vector<2x128xf32>
    %235 = math.exp %234 : vector<2x128xf32>
    %cst_51 = arith.constant 1.000000e+00 : f32
    %236 = vector.broadcast %cst_51 : f32 to vector<2x128xf32>
    %237 = arith.addf %236, %235 : vector<2x128xf32>
    %238 = arith.divf %236, %237 : vector<2x128xf32>
    %239 = vector.extract_strided_slice %232 {offsets = [0, 128], sizes = [2, 128], strides = [1, 1]} : vector<2x512xf32> to vector<2x128xf32>
    %240 = arith.negf %239 : vector<2x128xf32>
    %241 = math.exp %240 : vector<2x128xf32>
    %cst_52 = arith.constant 1.000000e+00 : f32
    %242 = vector.broadcast %cst_52 : f32 to vector<2x128xf32>
    %243 = arith.addf %242, %241 : vector<2x128xf32>
    %244 = arith.divf %242, %243 : vector<2x128xf32>
    %245 = vector.extract_strided_slice %232 {offsets = [0, 256], sizes = [2, 128], strides = [1, 1]} : vector<2x512xf32> to vector<2x128xf32>
    %246 = math.tanh %245 : vector<2x128xf32>
    %247 = vector.extract_strided_slice %232 {offsets = [0, 384], sizes = [2, 128], strides = [1, 1]} : vector<2x512xf32> to vector<2x128xf32>
    %248 = arith.negf %247 : vector<2x128xf32>
    %249 = math.exp %248 : vector<2x128xf32>
    %cst_53 = arith.constant 1.000000e+00 : f32
    %250 = vector.broadcast %cst_53 : f32 to vector<2x128xf32>
    %251 = arith.addf %250, %249 : vector<2x128xf32>
    %252 = arith.divf %250, %251 : vector<2x128xf32>
    %253 = arith.mulf %244, %224 : vector<2x128xf32>
    %254 = arith.mulf %238, %246 : vector<2x128xf32>
    %255 = arith.addf %253, %254 : vector<2x128xf32>
    %256 = math.tanh %255 : vector<2x128xf32>
    %257 = arith.mulf %252, %256 : vector<2x128xf32>
    %258 = arith.truncf %257 : vector<2x128xf32> to vector<2x128xbf16>
    %c14 = arith.constant 14 : index
    %c0_54 = arith.constant 0 : index
    %259 = vector.load %arg13[%c14, %c0_54] : memref<16x128xbf16, #tpu.memory_space<vmem>>, vector<2x128xbf16>
    tpu.vector_store %arg13[%c14, %c0_54], %258 {strides = array<i32>} : memref<16x128xbf16, #tpu.memory_space<vmem>>, vector<2x128xbf16>,
    %c0_55 = arith.constant 0 : index
    %c0_56 = arith.constant 0 : index
    %c0_57 = arith.constant 0 : index
    %260 = vector.load %arg11[%c0_55, %c0_56, %c0_57] : memref<2x2x128xf32, #tpu.memory_space<vmem>>, vector<1x2x128xf32>
    %261 = vector.shape_cast %260 : vector<1x2x128xf32> to vector<2x128xf32>
    %262 = vector.shape_cast %257 : vector<2x128xf32> to vector<1x2x128xf32>
    tpu.vector_store %arg11[%c0_55, %c0_56, %c0_57], %262 {strides = array<i32>} : memref<2x2x128xf32, #tpu.memory_space<vmem>>, vector<1x2x128xf32>,
    %c0_58 = arith.constant 0 : index
    %c0_59 = arith.constant 0 : index
    %c0_60 = arith.constant 0 : index
    %263 = vector.load %arg12[%c0_58, %c0_59, %c0_60] : memref<2x2x128xf32, #tpu.memory_space<vmem>>, vector<1x2x128xf32>
    %264 = vector.shape_cast %263 : vector<1x2x128xf32> to vector<2x128xf32>
    %265 = vector.shape_cast %255 : vector<2x128xf32> to vector<1x2x128xf32>
    tpu.vector_store %arg12[%c0_58, %c0_59, %c0_60], %265 {strides = array<i32>} : memref<2x2x128xf32, #tpu.memory_space<vmem>>, vector<1x2x128xf32>,
    %c0_61 = arith.constant 0 : index
    %c0_62 = arith.constant 0 : index
    %266 = vector.load %arg13[%c0_61, %c0_62] : memref<16x128xbf16, #tpu.memory_space<vmem>>, vector<16x128xbf16>
    %c1 = arith.constant 1 : index
    %c0_63 = arith.constant 0 : index
    %c0_64 = arith.constant 0 : index
    %267 = vector.load %arg3[%c1, %c0_63, %c0_64] : memref<2x128x512xbf16, #tpu.memory_space<vmem>>, vector<1x128x512xbf16>
    %268 = vector.shape_cast %267 : vector<1x128x512xbf16> to vector<128x512xbf16>
    %cst_65 = arith.constant dense<0.000000e+00> : vector<16x512xf32>
    %269 = tpu.matmul %266, %268, %cst_65 {dimension_numbers = #tpu.dot_dimension_numbers<[1], [0], [0], [1], [0, 0, 1, 1], [], []>} : vector<16x128xbf16>, vector<128x512xbf16>, vector<16x512xf32> -> vector<16x512xf32>
    %c1_66 = arith.constant 1 : index
    %c0_67 = arith.constant 0 : index
    %c0_68 = arith.constant 0 : index
    %270 = vector.load %arg5[%c1_66, %c0_67, %c0_68] : memref<2x1x512xf32, #tpu.memory_space<vmem>>, vector<1x1x512xf32>
    %271 = vector.shape_cast %270 : vector<1x1x512xf32> to vector<1x512xf32>
    %272 = vector.broadcast %271 : vector<1x512xf32> to vector<16x512xf32>
    %273 = arith.addf %269, %272 : vector<16x512xf32>
    %c1_69 = arith.constant 1 : index
    %c0_70 = arith.constant 0 : index
    %c0_71 = arith.constant 0 : index
    %274 = vector.load %arg4[%c1_69, %c0_70, %c0_71] : memref<2x128x512xbf16, #tpu.memory_space<vmem>>, vector<1x128x512xbf16>
    %275 = vector.shape_cast %274 : vector<1x128x512xbf16> to vector<128x512xbf16>
    %c1_72 = arith.constant 1 : index
    %c0_73 = arith.constant 0 : index
    %c0_74 = arith.constant 0 : index
    %276 = vector.load %arg8[%c1_72, %c0_73, %c0_74] : memref<2x2x128xf32, #tpu.memory_space<vmem>>, vector<1x2x128xf32>
    %277 = vector.shape_cast %276 : vector<1x2x128xf32> to vector<2x128xf32>
    %c1_75 = arith.constant 1 : index
    %c0_76 = arith.constant 0 : index
    %c0_77 = arith.constant 0 : index
    %278 = vector.load %arg9[%c1_75, %c0_76, %c0_77] : memref<2x2x128xf32, #tpu.memory_space<vmem>>, vector<1x2x128xf32>
    %279 = vector.shape_cast %278 : vector<1x2x128xf32> to vector<2x128xf32>
    %280 = vector.extract_strided_slice %273 {offsets = [0, 0], sizes = [2, 512], strides = [1, 1]} : vector<16x512xf32> to vector<2x512xf32>
    %281 = arith.truncf %277 : vector<2x128xf32> to vector<2x128xbf16>
    %cst_78 = arith.constant dense<0.000000e+00> : vector<2x512xf32>
    %282 = tpu.matmul %281, %275, %cst_78 {dimension_numbers = #tpu.dot_dimension_numbers<[1], [0], [0], [1], [0, 0, 1, 1], [], []>} : vector<2x128xbf16>, vector<128x512xbf16>, vector<2x512xf32> -> vector<2x512xf32>
    %283 = arith.addf %280, %282 : vector<2x512xf32>
    %284 = vector.extract_strided_slice %283 {offsets = [0, 0], sizes = [2, 128], strides = [1, 1]} : vector<2x512xf32> to vector<2x128xf32>
    %285 = arith.negf %284 : vector<2x128xf32>
    %286 = math.exp %285 : vector<2x128xf32>
    %cst_79 = arith.constant 1.000000e+00 : f32
    %287 = vector.broadcast %cst_79 : f32 to vector<2x128xf32>
    %288 = arith.addf %287, %286 : vector<2x128xf32>
    %289 = arith.divf %287, %288 : vector<2x128xf32>
    %290 = vector.extract_strided_slice %283 {offsets = [0, 128], sizes = [2, 128], strides = [1, 1]} : vector<2x512xf32> to vector<2x128xf32>
    %291 = arith.negf %290 : vector<2x128xf32>
    %292 = math.exp %291 : vector<2x128xf32>
    %cst_80 = arith.constant 1.000000e+00 : f32
    %293 = vector.broadcast %cst_80 : f32 to vector<2x128xf32>
    %294 = arith.addf %293, %292 : vector<2x128xf32>
    %295 = arith.divf %293, %294 : vector<2x128xf32>
    %296 = vector.extract_strided_slice %283 {offsets = [0, 256], sizes = [2, 128], strides = [1, 1]} : vector<2x512xf32> to vector<2x128xf32>
    %297 = math.tanh %296 : vector<2x128xf32>
    %298 = vector.extract_strided_slice %283 {offsets = [0, 384], sizes = [2, 128], strides = [1, 1]} : vector<2x512xf32> to vector<2x128xf32>
    %299 = arith.negf %298 : vector<2x128xf32>
    %300 = math.exp %299 : vector<2x128xf32>
    %cst_81 = arith.constant 1.000000e+00 : f32
    %301 = vector.broadcast %cst_81 : f32 to vector<2x128xf32>
    %302 = arith.addf %301, %300 : vector<2x128xf32>
    %303 = arith.divf %301, %302 : vector<2x128xf32>
    %304 = arith.mulf %295, %279 : vector<2x128xf32>
    %305 = arith.mulf %289, %297 : vector<2x128xf32>
    %306 = arith.addf %304, %305 : vector<2x128xf32>
    %307 = math.tanh %306 : vector<2x128xf32>
    %308 = arith.mulf %303, %307 : vector<2x128xf32>
    %309 = vector.extract_strided_slice %273 {offsets = [2, 0], sizes = [2, 512], strides = [1, 1]} : vector<16x512xf32> to vector<2x512xf32>
    %310 = arith.truncf %308 : vector<2x128xf32> to vector<2x128xbf16>
    %cst_82 = arith.constant dense<0.000000e+00> : vector<2x512xf32>
    %311 = tpu.matmul %310, %275, %cst_82 {dimension_numbers = #tpu.dot_dimension_numbers<[1], [0], [0], [1], [0, 0, 1, 1], [], []>} : vector<2x128xbf16>, vector<128x512xbf16>, vector<2x512xf32> -> vector<2x512xf32>
    %312 = arith.addf %309, %311 : vector<2x512xf32>
    %313 = vector.extract_strided_slice %312 {offsets = [0, 0], sizes = [2, 128], strides = [1, 1]} : vector<2x512xf32> to vector<2x128xf32>
    %314 = arith.negf %313 : vector<2x128xf32>
    %315 = math.exp %314 : vector<2x128xf32>
    %cst_83 = arith.constant 1.000000e+00 : f32
    %316 = vector.broadcast %cst_83 : f32 to vector<2x128xf32>
    %317 = arith.addf %316, %315 : vector<2x128xf32>
    %318 = arith.divf %316, %317 : vector<2x128xf32>
    %319 = vector.extract_strided_slice %312 {offsets = [0, 128], sizes = [2, 128], strides = [1, 1]} : vector<2x512xf32> to vector<2x128xf32>
    %320 = arith.negf %319 : vector<2x128xf32>
    %321 = math.exp %320 : vector<2x128xf32>
    %cst_84 = arith.constant 1.000000e+00 : f32
    %322 = vector.broadcast %cst_84 : f32 to vector<2x128xf32>
    %323 = arith.addf %322, %321 : vector<2x128xf32>
    %324 = arith.divf %322, %323 : vector<2x128xf32>
    %325 = vector.extract_strided_slice %312 {offsets = [0, 256], sizes = [2, 128], strides = [1, 1]} : vector<2x512xf32> to vector<2x128xf32>
    %326 = math.tanh %325 : vector<2x128xf32>
    %327 = vector.extract_strided_slice %312 {offsets = [0, 384], sizes = [2, 128], strides = [1, 1]} : vector<2x512xf32> to vector<2x128xf32>
    %328 = arith.negf %327 : vector<2x128xf32>
    %329 = math.exp %328 : vector<2x128xf32>
    %cst_85 = arith.constant 1.000000e+00 : f32
    %330 = vector.broadcast %cst_85 : f32 to vector<2x128xf32>
    %331 = arith.addf %330, %329 : vector<2x128xf32>
    %332 = arith.divf %330, %331 : vector<2x128xf32>
    %333 = arith.mulf %324, %306 : vector<2x128xf32>
    %334 = arith.mulf %318, %326 : vector<2x128xf32>
    %335 = arith.addf %333, %334 : vector<2x128xf32>
    %336 = math.tanh %335 : vector<2x128xf32>
    %337 = arith.mulf %332, %336 : vector<2x128xf32>
    %338 = vector.extract_strided_slice %273 {offsets = [4, 0], sizes = [2, 512], strides = [1, 1]} : vector<16x512xf32> to vector<2x512xf32>
    %339 = arith.truncf %337 : vector<2x128xf32> to vector<2x128xbf16>
    %cst_86 = arith.constant dense<0.000000e+00> : vector<2x512xf32>
    %340 = tpu.matmul %339, %275, %cst_86 {dimension_numbers = #tpu.dot_dimension_numbers<[1], [0], [0], [1], [0, 0, 1, 1], [], []>} : vector<2x128xbf16>, vector<128x512xbf16>, vector<2x512xf32> -> vector<2x512xf32>
    %341 = arith.addf %338, %340 : vector<2x512xf32>
    %342 = vector.extract_strided_slice %341 {offsets = [0, 0], sizes = [2, 128], strides = [1, 1]} : vector<2x512xf32> to vector<2x128xf32>
    %343 = arith.negf %342 : vector<2x128xf32>
    %344 = math.exp %343 : vector<2x128xf32>
    %cst_87 = arith.constant 1.000000e+00 : f32
    %345 = vector.broadcast %cst_87 : f32 to vector<2x128xf32>
    %346 = arith.addf %345, %344 : vector<2x128xf32>
    %347 = arith.divf %345, %346 : vector<2x128xf32>
    %348 = vector.extract_strided_slice %341 {offsets = [0, 128], sizes = [2, 128], strides = [1, 1]} : vector<2x512xf32> to vector<2x128xf32>
    %349 = arith.negf %348 : vector<2x128xf32>
    %350 = math.exp %349 : vector<2x128xf32>
    %cst_88 = arith.constant 1.000000e+00 : f32
    %351 = vector.broadcast %cst_88 : f32 to vector<2x128xf32>
    %352 = arith.addf %351, %350 : vector<2x128xf32>
    %353 = arith.divf %351, %352 : vector<2x128xf32>
    %354 = vector.extract_strided_slice %341 {offsets = [0, 256], sizes = [2, 128], strides = [1, 1]} : vector<2x512xf32> to vector<2x128xf32>
    %355 = math.tanh %354 : vector<2x128xf32>
    %356 = vector.extract_strided_slice %341 {offsets = [0, 384], sizes = [2, 128], strides = [1, 1]} : vector<2x512xf32> to vector<2x128xf32>
    %357 = arith.negf %356 : vector<2x128xf32>
    %358 = math.exp %357 : vector<2x128xf32>
    %cst_89 = arith.constant 1.000000e+00 : f32
    %359 = vector.broadcast %cst_89 : f32 to vector<2x128xf32>
    %360 = arith.addf %359, %358 : vector<2x128xf32>
    %361 = arith.divf %359, %360 : vector<2x128xf32>
    %362 = arith.mulf %353, %335 : vector<2x128xf32>
    %363 = arith.mulf %347, %355 : vector<2x128xf32>
    %364 = arith.addf %362, %363 : vector<2x128xf32>
    %365 = math.tanh %364 : vector<2x128xf32>
    %366 = arith.mulf %361, %365 : vector<2x128xf32>
    %367 = vector.extract_strided_slice %273 {offsets = [6, 0], sizes = [2, 512], strides = [1, 1]} : vector<16x512xf32> to vector<2x512xf32>
    %368 = arith.truncf %366 : vector<2x128xf32> to vector<2x128xbf16>
    %cst_90 = arith.constant dense<0.000000e+00> : vector<2x512xf32>
    %369 = tpu.matmul %368, %275, %cst_90 {dimension_numbers = #tpu.dot_dimension_numbers<[1], [0], [0], [1], [0, 0, 1, 1], [], []>} : vector<2x128xbf16>, vector<128x512xbf16>, vector<2x512xf32> -> vector<2x512xf32>
    %370 = arith.addf %367, %369 : vector<2x512xf32>
    %371 = vector.extract_strided_slice %370 {offsets = [0, 0], sizes = [2, 128], strides = [1, 1]} : vector<2x512xf32> to vector<2x128xf32>
    %372 = arith.negf %371 : vector<2x128xf32>
    %373 = math.exp %372 : vector<2x128xf32>
    %cst_91 = arith.constant 1.000000e+00 : f32
    %374 = vector.broadcast %cst_91 : f32 to vector<2x128xf32>
    %375 = arith.addf %374, %373 : vector<2x128xf32>
    %376 = arith.divf %374, %375 : vector<2x128xf32>
    %377 = vector.extract_strided_slice %370 {offsets = [0, 128], sizes = [2, 128], strides = [1, 1]} : vector<2x512xf32> to vector<2x128xf32>
    %378 = arith.negf %377 : vector<2x128xf32>
    %379 = math.exp %378 : vector<2x128xf32>
    %cst_92 = arith.constant 1.000000e+00 : f32
    %380 = vector.broadcast %cst_92 : f32 to vector<2x128xf32>
    %381 = arith.addf %380, %379 : vector<2x128xf32>
    %382 = arith.divf %380, %381 : vector<2x128xf32>
    %383 = vector.extract_strided_slice %370 {offsets = [0, 256], sizes = [2, 128], strides = [1, 1]} : vector<2x512xf32> to vector<2x128xf32>
    %384 = math.tanh %383 : vector<2x128xf32>
    %385 = vector.extract_strided_slice %370 {offsets = [0, 384], sizes = [2, 128], strides = [1, 1]} : vector<2x512xf32> to vector<2x128xf32>
    %386 = arith.negf %385 : vector<2x128xf32>
    %387 = math.exp %386 : vector<2x128xf32>
    %cst_93 = arith.constant 1.000000e+00 : f32
    %388 = vector.broadcast %cst_93 : f32 to vector<2x128xf32>
    %389 = arith.addf %388, %387 : vector<2x128xf32>
    %390 = arith.divf %388, %389 : vector<2x128xf32>
    %391 = arith.mulf %382, %364 : vector<2x128xf32>
    %392 = arith.mulf %376, %384 : vector<2x128xf32>
    %393 = arith.addf %391, %392 : vector<2x128xf32>
    %394 = math.tanh %393 : vector<2x128xf32>
    %395 = arith.mulf %390, %394 : vector<2x128xf32>
    %396 = vector.extract_strided_slice %273 {offsets = [8, 0], sizes = [2, 512], strides = [1, 1]} : vector<16x512xf32> to vector<2x512xf32>
    %397 = arith.truncf %395 : vector<2x128xf32> to vector<2x128xbf16>
    %cst_94 = arith.constant dense<0.000000e+00> : vector<2x512xf32>
    %398 = tpu.matmul %397, %275, %cst_94 {dimension_numbers = #tpu.dot_dimension_numbers<[1], [0], [0], [1], [0, 0, 1, 1], [], []>} : vector<2x128xbf16>, vector<128x512xbf16>, vector<2x512xf32> -> vector<2x512xf32>
    %399 = arith.addf %396, %398 : vector<2x512xf32>
    %400 = vector.extract_strided_slice %399 {offsets = [0, 0], sizes = [2, 128], strides = [1, 1]} : vector<2x512xf32> to vector<2x128xf32>
    %401 = arith.negf %400 : vector<2x128xf32>
    %402 = math.exp %401 : vector<2x128xf32>
    %cst_95 = arith.constant 1.000000e+00 : f32
    %403 = vector.broadcast %cst_95 : f32 to vector<2x128xf32>
    %404 = arith.addf %403, %402 : vector<2x128xf32>
    %405 = arith.divf %403, %404 : vector<2x128xf32>
    %406 = vector.extract_strided_slice %399 {offsets = [0, 128], sizes = [2, 128], strides = [1, 1]} : vector<2x512xf32> to vector<2x128xf32>
    %407 = arith.negf %406 : vector<2x128xf32>
    %408 = math.exp %407 : vector<2x128xf32>
    %cst_96 = arith.constant 1.000000e+00 : f32
    %409 = vector.broadcast %cst_96 : f32 to vector<2x128xf32>
    %410 = arith.addf %409, %408 : vector<2x128xf32>
    %411 = arith.divf %409, %410 : vector<2x128xf32>
    %412 = vector.extract_strided_slice %399 {offsets = [0, 256], sizes = [2, 128], strides = [1, 1]} : vector<2x512xf32> to vector<2x128xf32>
    %413 = math.tanh %412 : vector<2x128xf32>
    %414 = vector.extract_strided_slice %399 {offsets = [0, 384], sizes = [2, 128], strides = [1, 1]} : vector<2x512xf32> to vector<2x128xf32>
    %415 = arith.negf %414 : vector<2x128xf32>
    %416 = math.exp %415 : vector<2x128xf32>
    %cst_97 = arith.constant 1.000000e+00 : f32
    %417 = vector.broadcast %cst_97 : f32 to vector<2x128xf32>
    %418 = arith.addf %417, %416 : vector<2x128xf32>
    %419 = arith.divf %417, %418 : vector<2x128xf32>
    %420 = arith.mulf %411, %393 : vector<2x128xf32>
    %421 = arith.mulf %405, %413 : vector<2x128xf32>
    %422 = arith.addf %420, %421 : vector<2x128xf32>
    %423 = math.tanh %422 : vector<2x128xf32>
    %424 = arith.mulf %419, %423 : vector<2x128xf32>
    %425 = vector.extract_strided_slice %273 {offsets = [10, 0], sizes = [2, 512], strides = [1, 1]} : vector<16x512xf32> to vector<2x512xf32>
    %426 = arith.truncf %424 : vector<2x128xf32> to vector<2x128xbf16>
    %cst_98 = arith.constant dense<0.000000e+00> : vector<2x512xf32>
    %427 = tpu.matmul %426, %275, %cst_98 {dimension_numbers = #tpu.dot_dimension_numbers<[1], [0], [0], [1], [0, 0, 1, 1], [], []>} : vector<2x128xbf16>, vector<128x512xbf16>, vector<2x512xf32> -> vector<2x512xf32>
    %428 = arith.addf %425, %427 : vector<2x512xf32>
    %429 = vector.extract_strided_slice %428 {offsets = [0, 0], sizes = [2, 128], strides = [1, 1]} : vector<2x512xf32> to vector<2x128xf32>
    %430 = arith.negf %429 : vector<2x128xf32>
    %431 = math.exp %430 : vector<2x128xf32>
    %cst_99 = arith.constant 1.000000e+00 : f32
    %432 = vector.broadcast %cst_99 : f32 to vector<2x128xf32>
    %433 = arith.addf %432, %431 : vector<2x128xf32>
    %434 = arith.divf %432, %433 : vector<2x128xf32>
    %435 = vector.extract_strided_slice %428 {offsets = [0, 128], sizes = [2, 128], strides = [1, 1]} : vector<2x512xf32> to vector<2x128xf32>
    %436 = arith.negf %435 : vector<2x128xf32>
    %437 = math.exp %436 : vector<2x128xf32>
    %cst_100 = arith.constant 1.000000e+00 : f32
    %438 = vector.broadcast %cst_100 : f32 to vector<2x128xf32>
    %439 = arith.addf %438, %437 : vector<2x128xf32>
    %440 = arith.divf %438, %439 : vector<2x128xf32>
    %441 = vector.extract_strided_slice %428 {offsets = [0, 256], sizes = [2, 128], strides = [1, 1]} : vector<2x512xf32> to vector<2x128xf32>
    %442 = math.tanh %441 : vector<2x128xf32>
    %443 = vector.extract_strided_slice %428 {offsets = [0, 384], sizes = [2, 128], strides = [1, 1]} : vector<2x512xf32> to vector<2x128xf32>
    %444 = arith.negf %443 : vector<2x128xf32>
    %445 = math.exp %444 : vector<2x128xf32>
    %cst_101 = arith.constant 1.000000e+00 : f32
    %446 = vector.broadcast %cst_101 : f32 to vector<2x128xf32>
    %447 = arith.addf %446, %445 : vector<2x128xf32>
    %448 = arith.divf %446, %447 : vector<2x128xf32>
    %449 = arith.mulf %440, %422 : vector<2x128xf32>
    %450 = arith.mulf %434, %442 : vector<2x128xf32>
    %451 = arith.addf %449, %450 : vector<2x128xf32>
    %452 = math.tanh %451 : vector<2x128xf32>
    %453 = arith.mulf %448, %452 : vector<2x128xf32>
    %454 = vector.extract_strided_slice %273 {offsets = [12, 0], sizes = [2, 512], strides = [1, 1]} : vector<16x512xf32> to vector<2x512xf32>
    %455 = arith.truncf %453 : vector<2x128xf32> to vector<2x128xbf16>
    %cst_102 = arith.constant dense<0.000000e+00> : vector<2x512xf32>
    %456 = tpu.matmul %455, %275, %cst_102 {dimension_numbers = #tpu.dot_dimension_numbers<[1], [0], [0], [1], [0, 0, 1, 1], [], []>} : vector<2x128xbf16>, vector<128x512xbf16>, vector<2x512xf32> -> vector<2x512xf32>
    %457 = arith.addf %454, %456 : vector<2x512xf32>
    %458 = vector.extract_strided_slice %457 {offsets = [0, 0], sizes = [2, 128], strides = [1, 1]} : vector<2x512xf32> to vector<2x128xf32>
    %459 = arith.negf %458 : vector<2x128xf32>
    %460 = math.exp %459 : vector<2x128xf32>
    %cst_103 = arith.constant 1.000000e+00 : f32
    %461 = vector.broadcast %cst_103 : f32 to vector<2x128xf32>
    %462 = arith.addf %461, %460 : vector<2x128xf32>
    %463 = arith.divf %461, %462 : vector<2x128xf32>
    %464 = vector.extract_strided_slice %457 {offsets = [0, 128], sizes = [2, 128], strides = [1, 1]} : vector<2x512xf32> to vector<2x128xf32>
    %465 = arith.negf %464 : vector<2x128xf32>
    %466 = math.exp %465 : vector<2x128xf32>
    %cst_104 = arith.constant 1.000000e+00 : f32
    %467 = vector.broadcast %cst_104 : f32 to vector<2x128xf32>
    %468 = arith.addf %467, %466 : vector<2x128xf32>
    %469 = arith.divf %467, %468 : vector<2x128xf32>
    %470 = vector.extract_strided_slice %457 {offsets = [0, 256], sizes = [2, 128], strides = [1, 1]} : vector<2x512xf32> to vector<2x128xf32>
    %471 = math.tanh %470 : vector<2x128xf32>
    %472 = vector.extract_strided_slice %457 {offsets = [0, 384], sizes = [2, 128], strides = [1, 1]} : vector<2x512xf32> to vector<2x128xf32>
    %473 = arith.negf %472 : vector<2x128xf32>
    %474 = math.exp %473 : vector<2x128xf32>
    %cst_105 = arith.constant 1.000000e+00 : f32
    %475 = vector.broadcast %cst_105 : f32 to vector<2x128xf32>
    %476 = arith.addf %475, %474 : vector<2x128xf32>
    %477 = arith.divf %475, %476 : vector<2x128xf32>
    %478 = arith.mulf %469, %451 : vector<2x128xf32>
    %479 = arith.mulf %463, %471 : vector<2x128xf32>
    %480 = arith.addf %478, %479 : vector<2x128xf32>
    %481 = math.tanh %480 : vector<2x128xf32>
    %482 = arith.mulf %477, %481 : vector<2x128xf32>
    %483 = vector.extract_strided_slice %273 {offsets = [14, 0], sizes = [2, 512], strides = [1, 1]} : vector<16x512xf32> to vector<2x512xf32>
    %484 = arith.truncf %482 : vector<2x128xf32> to vector<2x128xbf16>
    %cst_106 = arith.constant dense<0.000000e+00> : vector<2x512xf32>
    %485 = tpu.matmul %484, %275, %cst_106 {dimension_numbers = #tpu.dot_dimension_numbers<[1], [0], [0], [1], [0, 0, 1, 1], [], []>} : vector<2x128xbf16>, vector<128x512xbf16>, vector<2x512xf32> -> vector<2x512xf32>
    %486 = arith.addf %483, %485 : vector<2x512xf32>
    %487 = vector.extract_strided_slice %486 {offsets = [0, 0], sizes = [2, 128], strides = [1, 1]} : vector<2x512xf32> to vector<2x128xf32>
    %488 = arith.negf %487 : vector<2x128xf32>
    %489 = math.exp %488 : vector<2x128xf32>
    %cst_107 = arith.constant 1.000000e+00 : f32
    %490 = vector.broadcast %cst_107 : f32 to vector<2x128xf32>
    %491 = arith.addf %490, %489 : vector<2x128xf32>
    %492 = arith.divf %490, %491 : vector<2x128xf32>
    %493 = vector.extract_strided_slice %486 {offsets = [0, 128], sizes = [2, 128], strides = [1, 1]} : vector<2x512xf32> to vector<2x128xf32>
    %494 = arith.negf %493 : vector<2x128xf32>
    %495 = math.exp %494 : vector<2x128xf32>
    %cst_108 = arith.constant 1.000000e+00 : f32
    %496 = vector.broadcast %cst_108 : f32 to vector<2x128xf32>
    %497 = arith.addf %496, %495 : vector<2x128xf32>
    %498 = arith.divf %496, %497 : vector<2x128xf32>
    %499 = vector.extract_strided_slice %486 {offsets = [0, 256], sizes = [2, 128], strides = [1, 1]} : vector<2x512xf32> to vector<2x128xf32>
    %500 = math.tanh %499 : vector<2x128xf32>
    %501 = vector.extract_strided_slice %486 {offsets = [0, 384], sizes = [2, 128], strides = [1, 1]} : vector<2x512xf32> to vector<2x128xf32>
    %502 = arith.negf %501 : vector<2x128xf32>
    %503 = math.exp %502 : vector<2x128xf32>
    %cst_109 = arith.constant 1.000000e+00 : f32
    %504 = vector.broadcast %cst_109 : f32 to vector<2x128xf32>
    %505 = arith.addf %504, %503 : vector<2x128xf32>
    %506 = arith.divf %504, %505 : vector<2x128xf32>
    %507 = arith.mulf %498, %480 : vector<2x128xf32>
    %508 = arith.mulf %492, %500 : vector<2x128xf32>
    %509 = arith.addf %507, %508 : vector<2x128xf32>
    %510 = math.tanh %509 : vector<2x128xf32>
    %511 = arith.mulf %506, %510 : vector<2x128xf32>
    %c1_110 = arith.constant 1 : index
    %c0_111 = arith.constant 0 : index
    %c0_112 = arith.constant 0 : index
    %512 = vector.load %arg11[%c1_110, %c0_111, %c0_112] : memref<2x2x128xf32, #tpu.memory_space<vmem>>, vector<1x2x128xf32>
    %513 = vector.shape_cast %512 : vector<1x2x128xf32> to vector<2x128xf32>
    %514 = vector.shape_cast %511 : vector<2x128xf32> to vector<1x2x128xf32>
    tpu.vector_store %arg11[%c1_110, %c0_111, %c0_112], %514 {strides = array<i32>} : memref<2x2x128xf32, #tpu.memory_space<vmem>>, vector<1x2x128xf32>,
    %c1_113 = arith.constant 1 : index
    %c0_114 = arith.constant 0 : index
    %c0_115 = arith.constant 0 : index
    %515 = vector.load %arg12[%c1_113, %c0_114, %c0_115] : memref<2x2x128xf32, #tpu.memory_space<vmem>>, vector<1x2x128xf32>
    %516 = vector.shape_cast %515 : vector<1x2x128xf32> to vector<2x128xf32>
    %517 = vector.shape_cast %509 : vector<2x128xf32> to vector<1x2x128xf32>
    tpu.vector_store %arg12[%c1_113, %c0_114, %c0_115], %517 {strides = array<i32>} : memref<2x2x128xf32, #tpu.memory_space<vmem>>, vector<1x2x128xf32>,
    %518 = arith.truncf %511 : vector<2x128xf32> to vector<2x128xbf16>
    %c0_116 = arith.constant 0 : index
    %c0_117 = arith.constant 0 : index
    %519 = vector.load %arg6[%c0_116, %c0_117] : memref<128x6xbf16, #tpu.memory_space<vmem>>, vector<128x6xbf16>
    %cst_118 = arith.constant dense<0.000000e+00> : vector<2x6xf32>
    %520 = tpu.matmul %518, %519, %cst_118 {dimension_numbers = #tpu.dot_dimension_numbers<[1], [0], [0], [1], [0, 0, 1, 1], [], []>} : vector<2x128xbf16>, vector<128x6xbf16>, vector<2x6xf32> -> vector<2x6xf32>
    %c0_119 = arith.constant 0 : index
    %c0_120 = arith.constant 0 : index
    %521 = vector.load %arg7[%c0_119, %c0_120] : memref<1x6xf32, #tpu.memory_space<vmem>>, vector<1x6xf32>
    %522 = vector.broadcast %521 : vector<1x6xf32> to vector<2x6xf32>
    %523 = arith.addf %520, %522 : vector<2x6xf32>
    %c0_121 = arith.constant 0 : index
    %c0_122 = arith.constant 0 : index
    %524 = vector.load %arg10[%c0_121, %c0_122] : memref<2x6xf32, #tpu.memory_space<vmem>>, vector<2x6xf32>
    tpu.vector_store %arg10[%c0_121, %c0_122], %523 {strides = array<i32>} : memref<2x6xf32, #tpu.memory_space<vmem>>, vector<2x6xf32>,
    return
  }
}

</mosaic_0001>

<llo_original>
// kernel: recurrent_forward.1
$region0: #{recurrent_forward.1}
  #allocation0 [shape = 'u32[]', space=smem, size = 0x4, offset = 0x4, fixed_abs, tag = 'smem constant byte address 0x4 - core index']
  #allocation1 [shape = 'u32[72,128]{1,0:T(1,128)}', space=vmem, size = 0x9000, scoped, tag = 'internal scratch']
  #allocation2 [shape = 'bf16[16,128]{1,0:T(8,128)(2,1)}', space=vmem, size = 0x1000, scoped, tag = 'scratch operand']
  %s0 = inlined_call_operand.vmem [shape: bf16[16,16], index: 0, kind: input, shape index: {}]
  %s1 = inlined_call_operand.vmem [shape: bf16[16,512], index: 1, kind: input, shape index: {}]
  %s2 = inlined_call_operand.vmem [shape: f32[1,512], index: 2, kind: input, shape index: {}]
  %s3 = inlined_call_operand.hbm [shape: bf16[2,128,512], index: 3, kind: input, shape index: {}]
  %s4 = inlined_call_operand.hbm [shape: bf16[2,128,512], index: 4, kind: input, shape index: {}]
  %s5 = inlined_call_operand.vmem [shape: f32[2,1,512], index: 5, kind: input, shape index: {}]
  %s6 = inlined_call_operand.vmem [shape: bf16[128,6], index: 6, kind: input, shape index: {}]
  %s7 = inlined_call_operand.vmem [shape: f32[1,6], index: 7, kind: input, shape index: {}]
  %s8 = inlined_call_operand.vmem [shape: f32[2,2,128], index: 8, kind: input, shape index: {}, may-alias: {8,11}]
  %s9 = inlined_call_operand.vmem [shape: f32[2,2,128], index: 9, kind: input, shape index: {}, may-alias: {9,12}]
  %s10 = inlined_call_operand.hbm [shape: f32[2,6], index: 10, kind: output, shape index: {0}]
  %s11 = inlined_call_operand.vmem [shape: f32[2,2,128], index: 11, kind: output, shape index: {1}, may-alias: {8,11}]
  %s12 = inlined_call_operand.vmem [shape: f32[2,2,128], index: 12, kind: output, shape index: {2}, may-alias: {9,12}]
  %13 = xla_tuple %s10, %s11, %s12
  %s14 = sld [smem:[#allocation0]]
  $region74: #{recurrent_forward.1} parent=0
    _
  %s16 = ssub.s32 1, %s14
  %s17 = scalar_select 0, %s16, %s14
  $region1: #{recurrent_forward.1} parent=0
    #allocation3 [shape = 'u8[262144]{0}', space=vmem, size = 0x40000, scoped, tag = 'input window, operand 3, single buffered']
    #allocation4 [shape = 's32[1]{0}', space=sflag, size = 0x4, scoped, tag = 'scoped memory for recurrent_forward.1']
    #allocation5 [shape = 's32[1]{0}', space=sflag, size = 0x4, scoped, tag = 'scoped memory for recurrent_forward.1']
    #allocation6 [shape = 'u8[262144]{0}', space=vmem, size = 0x40000, scoped, tag = 'input window, operand 4, single buffered']
    #allocation7 [shape = 's32[1]{0}', space=sflag, size = 0x4, scoped, tag = 'scoped memory for recurrent_forward.1']
    #allocation8 [shape = 'u8[1024]{0}', space=vmem, size = 0x400, scoped, tag = 'output window, operand 0, single buffered']
    %18 = vsyncpa [#allocation4], 0
    %19 = vsyncpa [#allocation7], 0
    %20 = vsyncpa [#allocation5], 0
    // Predicated region
    $region2: #{recurrent_forward.1} parent=1 // pred_check
      _
    $region3: #{recurrent_forward.1} parent=1 // pred_check_branch
      %22 = sbr.rel (0) target = $region5
    $region4: #{recurrent_forward.1} parent=1 // pred_region
      _
    $region5: #{recurrent_forward.1} parent=1 // pred_fallthru
      _
    // Predicated region
    $region6: #{recurrent_forward.1} parent=1 // pred_check
      _
    $region7: #{recurrent_forward.1} parent=1 // pred_check_branch
      %24 = sbr.rel (0) target = $region9
    $region8: #{recurrent_forward.1} parent=1 // pred_region
      _
    $region9: #{recurrent_forward.1} parent=1 // pred_fallthru
      _
    // Predicated region
    $region10: #{recurrent_forward.1} parent=1 // pred_check
      _
    $region11: #{recurrent_forward.1} parent=1 // pred_check_branch
      %26 = sbr.rel (0) target = $region13
    $region12: #{recurrent_forward.1} parent=1 // pred_region
      _
    $region13: #{recurrent_forward.1} parent=1 // pred_fallthru
      _
    // Predicated region
    $region14: #{recurrent_forward.1} parent=1 // pred_check
      _
    $region15: #{recurrent_forward.1} parent=1 // pred_check_branch
      %28 = sbr.rel (0) target = $region17
    $region16: #{recurrent_forward.1} parent=1 // pred_region
      %30 = vsyncadd [#allocation4], 0
      %s31 = sshll.u32 %s3, 4
      %s32 = int_to_ptr.hbm [resolvable:$true] %s31
      %s33 = sshll.u32 [#allocation3], 4
      %s34 = int_to_ptr.vmem [resolvable:$true] %s33
      %39 = dma.hbm_to_vmem [thread:$0]  %s32, 8192, %s34, [#allocation4], 256, 256, 16
    $region17: #{recurrent_forward.1} parent=1 // pred_fallthru
      _
    // Predicated region
    $region18: #{recurrent_forward.1} parent=1 // pred_check
      _
    $region19: #{recurrent_forward.1} parent=1 // pred_check_branch
      %41 = sbr.rel (0) target = $region21
    $region20: #{recurrent_forward.1} parent=1 // pred_region
      %43 = vsyncadd [#allocation7], 0
      %s44 = sshll.u32 %s4, 4
      %s45 = int_to_ptr.hbm [resolvable:$true] %s44
      %s46 = sshll.u32 [#allocation6], 4
      %s47 = int_to_ptr.vmem [resolvable:$true] %s46
      %52 = dma.hbm_to_vmem [thread:$0]  %s45, 8192, %s47, [#allocation7], 256, 256, 16
    $region21: #{recurrent_forward.1} parent=1 // pred_fallthru
      _
    // Predicated region
    $region22: #{recurrent_forward.1} parent=1 // pred_check
      _
    $region23: #{recurrent_forward.1} parent=1 // pred_check_branch
      %54 = sbr.rel (0) target = $region25
    $region24: #{recurrent_forward.1} parent=1 // pred_region
      _
    $region25: #{recurrent_forward.1} parent=1 // pred_fallthru
      _
    // Predicated region
    $region26: #{recurrent_forward.1} parent=1 // pred_check
      _
    $region27: #{recurrent_forward.1} parent=1 // pred_check_branch
      %56 = sbr.rel (0) target = $region29
    $region28: #{recurrent_forward.1} parent=1 // pred_region
      _
    $region29: #{recurrent_forward.1} parent=1 // pred_fallthru
      _
    // Predicated region
    $region30: #{recurrent_forward.1} parent=1 // pred_check
      _
    $region31: #{recurrent_forward.1} parent=1 // pred_check_branch
      %58 = sbr.rel (0) target = $region33
    $region32: #{recurrent_forward.1} parent=1 // pred_region
      _
    $region33: #{recurrent_forward.1} parent=1 // pred_fallthru
      _
    // Predicated region
    $region34: #{recurrent_forward.1} parent=1 // pred_check
      _
    $region35: #{recurrent_forward.1} parent=1 // pred_check_branch
      %60 = sbr.rel (0) target = $region37
    $region36: #{recurrent_forward.1} parent=1 // pred_region
      _
    $region37: #{recurrent_forward.1} parent=1 // pred_fallthru
      _
    // Predicated region
    $region38: #{recurrent_forward.1} parent=1 // pred_check
      _
    $region39: #{recurrent_forward.1} parent=1 // pred_check_branch
      %62 = sbr.rel (0) target = $region41
    $region40: #{recurrent_forward.1} parent=1 // pred_region
      _
    $region41: #{recurrent_forward.1} parent=1 // pred_fallthru
      _
    // Predicated region
    $region42: #{recurrent_forward.1} parent=1 // pred_check
      _
    $region43: #{recurrent_forward.1} parent=1 // pred_check_branch
      %64 = sbr.rel (0) target = $region45
    $region44: #{recurrent_forward.1} parent=1 // pred_region
      %66 = dma.done [#allocation4], 8192
    $region45: #{recurrent_forward.1} parent=1 // pred_fallthru
      _
    // Predicated region
    $region46: #{recurrent_forward.1} parent=1 // pred_check
      _
    $region47: #{recurrent_forward.1} parent=1 // pred_check_branch
      %68 = sbr.rel (0) target = $region49
    $region48: #{recurrent_forward.1} parent=1 // pred_region
      %70 = dma.done [#allocation7], 8192
    $region49: #{recurrent_forward.1} parent=1 // pred_fallthru
      _
    %v72 = vld [vmem:[%s0] sm:$0xf]
    %v73 = vld [vmem:[%s0 + $0x4] sm:$0xf]
    %v74 = vld [vmem:[%s1] sm:$0xff]
    %v75 = vld [vmem:[%s1 + $0x8] sm:$0xff]
    %v76 = vld [vmem:[%s1 + $0x10] sm:$0xff]
    %v77 = vld [vmem:[%s1 + $0x18] sm:$0xff]
    %v78 = vld [vmem:[%s2] sm:$0xf]
    %v80 = vperm.slane %v78, 0
    %v81 = vperm.slane %v78, 1
    %v82 = vperm.slane %v78, 2
    %v83 = vperm.slane %v78, 3
    %v90 = vunpack.c.l.b16 %v72
    %v91 = vunpack.c.l.b16 %v73
    %v92 = vpack.c.b16 %v91, %v90
    %v97 = vunpack.c.l.b16 %v74
    %v98 = vunpack.c.h.b16 %v74
    %v99 = vunpack.c.l.b16 %v75
    %v100 = vunpack.c.h.b16 %v75
    %v101 = vunpack.c.l.b16 %v76
    %v102 = vunpack.c.h.b16 %v76
    %v103 = vunpack.c.l.b16 %v77
    %v104 = vunpack.c.h.b16 %v77
    %v105 = vpack.c.b16 %v101, %v97
    %v106 = vpack.c.b16 %v102, %v98
    %v107 = vpack.c.b16 %v103, %v99
    %v108 = vpack.c.b16 %v104, %v100
    %vm113 = vcmask 130048
    %v115 = vsel %vm113, %v92, 0
    %117 = vmatpush.bf16.msra.mxu0 0
    %118 = vmatpush.bf16.msra.mxu0 0
    %119 = vmatpush.bf16.msra.mxu0 0
    %120 = vmatpush.bf16.msra.mxu0 0
    %121 = vmatpush.bf16.msra.mxu0 0
    %122 = vmatpush.bf16.msra.mxu0 0
    %123 = vmatpush.bf16.msra.mxu0 0
    %124 = vmatpush.bf16.msra.mxu0 %v105
    %125 = vmatmul.bf16.gmra.mxu0 %v115
    %v126 = vpop.f32.mrf.mxu0
    %v127 = vadd.f32 %v80, %v126
    %v128 = vpop.f32.mrf.mxu0
    %v129 = vadd.f32 %v80, %v128
    %130 = vdwg.mxu0
    %131 = vmatpush.bf16.msra.mxu0 0
    %132 = vmatpush.bf16.msra.mxu0 0
    %133 = vmatpush.bf16.msra.mxu0 0
    %134 = vmatpush.bf16.msra.mxu0 0
    %135 = vmatpush.bf16.msra.mxu0 0
    %136 = vmatpush.bf16.msra.mxu0 0
    %137 = vmatpush.bf16.msra.mxu0 0
    %138 = vmatpush.bf16.msra.mxu0 %v106
    %139 = vmatmul.bf16.gmra.mxu0 %v115
    %v140 = vpop.f32.mrf.mxu0
    %v141 = vadd.f32 %v81, %v140
    %v142 = vpop.f32.mrf.mxu0
    %v143 = vadd.f32 %v81, %v142
    %144 = vdwg.mxu0
    %145 = vmatpush.bf16.msra.mxu0 0
    %146 = vmatpush.bf16.msra.mxu0 0
    %147 = vmatpush.bf16.msra.mxu0 0
    %148 = vmatpush.bf16.msra.mxu0 0
    %149 = vmatpush.bf16.msra.mxu0 0
    %150 = vmatpush.bf16.msra.mxu0 0
    %151 = vmatpush.bf16.msra.mxu0 0
    %152 = vmatpush.bf16.msra.mxu0 %v107
    %153 = vmatmul.bf16.gmra.mxu0 %v115
    %v154 = vpop.f32.mrf.mxu0
    %v155 = vadd.f32 %v82, %v154
    %v156 = vpop.f32.mrf.mxu0
    %v157 = vadd.f32 %v82, %v156
    %158 = vdwg.mxu0
    %159 = vmatpush.bf16.msra.mxu0 0
    %160 = vmatpush.bf16.msra.mxu0 0
    %161 = vmatpush.bf16.msra.mxu0 0
    %162 = vmatpush.bf16.msra.mxu0 0
    %163 = vmatpush.bf16.msra.mxu0 0
    %164 = vmatpush.bf16.msra.mxu0 0
    %165 = vmatpush.bf16.msra.mxu0 0
    %166 = vmatpush.bf16.msra.mxu0 %v108
    %167 = vmatmul.bf16.gmra.mxu0 %v115
    %v168 = vpop.f32.mrf.mxu0
    %v169 = vadd.f32 %v83, %v168
    %v170 = vpop.f32.mrf.mxu0
    %v171 = vadd.f32 %v83, %v170
    %172 = vdwg.mxu0
    %v173 = vld [vmem:[#allocation6] sm:$0xff]
    %v174 = vld [vmem:[#allocation6 + $0x8] sm:$0xff]
    %v175 = vld [vmem:[#allocation6 + $0x10] sm:$0xff]
    %v176 = vld [vmem:[#allocation6 + $0x18] sm:$0xff]
    %v177 = vld [vmem:[#allocation6 + $0x20] sm:$0xff]
    %v178 = vld [vmem:[#allocation6 + $0x28] sm:$0xff]
    %v179 = vld [vmem:[#allocation6 + $0x30] sm:$0xff]
    %v180 = vld [vmem:[#allocation6 + $0x38] sm:$0xff]
    %v181 = vld [vmem:[#allocation6 + $0x40] sm:$0xff]
    %v182 = vld [vmem:[#allocation6 + $0x48] sm:$0xff]
    %v183 = vld [vmem:[#allocation6 + $0x50] sm:$0xff]
    %v184 = vld [vmem:[#allocation6 + $0x58] sm:$0xff]
    %v185 = vld [vmem:[#allocation6 + $0x60] sm:$0xff]
    %v186 = vld [vmem:[#allocation6 + $0x68] sm:$0xff]
    %v187 = vld [vmem:[#allocation6 + $0x70] sm:$0xff]
    %v188 = vld [vmem:[#allocation6 + $0x78] sm:$0xff]
    %v189 = vld [vmem:[#allocation6 + $0x80] sm:$0xff]
    %v190 = vld [vmem:[#allocation6 + $0x88] sm:$0xff]
    %v191 = vld [vmem:[#allocation6 + $0x90] sm:$0xff]
    %v192 = vld [vmem:[#allocation6 + $0x98] sm:$0xff]
    %v193 = vld [vmem:[#allocation6 + $0xa0] sm:$0xff]
    %v194 = vld [vmem:[#allocation6 + $0xa8] sm:$0xff]
    %v195 = vld [vmem:[#allocation6 + $0xb0] sm:$0xff]
    %v196 = vld [vmem:[#allocation6 + $0xb8] sm:$0xff]
    %v197 = vld [vmem:[#allocation6 + $0xc0] sm:$0xff]
    %v198 = vld [vmem:[#allocation6 + $0xc8] sm:$0xff]
    %v199 = vld [vmem:[#allocation6 + $0xd0] sm:$0xff]
    %v200 = vld [vmem:[#allocation6 + $0xd8] sm:$0xff]
    %v201 = vld [vmem:[#allocation6 + $0xe0] sm:$0xff]
    %v202 = vld [vmem:[#allocation6 + $0xe8] sm:$0xff]
    %v203 = vld [vmem:[#allocation6 + $0xf0] sm:$0xff]
    %v204 = vld [vmem:[#allocation6 + $0xf8] sm:$0xff]
    %v205 = vld [vmem:[%s8] sm:$0x3]
    %v206 = vld [vmem:[%s9] sm:$0x3]
    %v207 = vpack.c.bf16 %v205, %v205
    %v240 = vunpack.c.l.b16 %v173
    %v241 = vunpack.c.h.b16 %v173
    %v242 = vunpack.c.l.b16 %v174
    %v243 = vunpack.c.h.b16 %v174
    %v244 = vunpack.c.l.b16 %v175
    %v245 = vunpack.c.h.b16 %v175
    %v246 = vunpack.c.l.b16 %v176
    %v247 = vunpack.c.h.b16 %v176
    %v248 = vunpack.c.l.b16 %v177
    %v249 = vunpack.c.h.b16 %v177
    %v250 = vunpack.c.l.b16 %v178
    %v251 = vunpack.c.h.b16 %v178
    %v252 = vunpack.c.l.b16 %v179
    %v253 = vunpack.c.h.b16 %v179
    %v254 = vunpack.c.l.b16 %v180
    %v255 = vunpack.c.h.b16 %v180
    %v256 = vunpack.c.l.b16 %v181
    %v257 = vunpack.c.h.b16 %v181
    %v258 = vunpack.c.l.b16 %v182
    %v259 = vunpack.c.h.b16 %v182
    %v260 = vunpack.c.l.b16 %v183
    %v261 = vunpack.c.h.b16 %v183
    %v262 = vunpack.c.l.b16 %v184
    %v263 = vunpack.c.h.b16 %v184
    %v264 = vunpack.c.l.b16 %v185
    %v265 = vunpack.c.h.b16 %v185
    %v266 = vunpack.c.l.b16 %v186
    %v267 = vunpack.c.h.b16 %v186
    %v268 = vunpack.c.l.b16 %v187
    %v269 = vunpack.c.h.b16 %v187
    %v270 = vunpack.c.l.b16 %v188
    %v271 = vunpack.c.h.b16 %v188
    %v272 = vunpack.c.l.b16 %v189
    %v273 = vunpack.c.h.b16 %v189
    %v274 = vunpack.c.l.b16 %v190
    %v275 = vunpack.c.h.b16 %v190
    %v276 = vunpack.c.l.b16 %v191
    %v277 = vunpack.c.h.b16 %v191
    %v278 = vunpack.c.l.b16 %v192
    %v279 = vunpack.c.h.b16 %v192
    %v280 = vunpack.c.l.b16 %v193
    %v281 = vunpack.c.h.b16 %v193
    %v282 = vunpack.c.l.b16 %v194
    %v283 = vunpack.c.h.b16 %v194
    %v284 = vunpack.c.l.b16 %v195
    %v285 = vunpack.c.h.b16 %v195
    %v286 = vunpack.c.l.b16 %v196
    %v287 = vunpack.c.h.b16 %v196
    %v288 = vunpack.c.l.b16 %v197
    %v289 = vunpack.c.h.b16 %v197
    %v290 = vunpack.c.l.b16 %v198
    %v291 = vunpack.c.h.b16 %v198
    %v292 = vunpack.c.l.b16 %v199
    %v293 = vunpack.c.h.b16 %v199
    %v294 = vunpack.c.l.b16 %v200
    %v295 = vunpack.c.h.b16 %v200
    %v296 = vunpack.c.l.b16 %v201
    %v297 = vunpack.c.h.b16 %v201
    %v298 = vunpack.c.l.b16 %v202
    %v299 = vunpack.c.h.b16 %v202
    %v300 = vunpack.c.l.b16 %v203
    %v301 = vunpack.c.h.b16 %v203
    %v302 = vunpack.c.l.b16 %v204
    %v303 = vunpack.c.h.b16 %v204
    %v304 = vpack.c.b16 %v244, %v240
    %v305 = vpack.c.b16 %v245, %v241
    %v306 = vpack.c.b16 %v246, %v242
    %v307 = vpack.c.b16 %v247, %v243
    %v308 = vpack.c.b16 %v252, %v248
    %v309 = vpack.c.b16 %v253, %v249
    %v310 = vpack.c.b16 %v254, %v250
    %v311 = vpack.c.b16 %v255, %v251
    %v312 = vpack.c.b16 %v260, %v256
    %v313 = vpack.c.b16 %v261, %v257
    %v314 = vpack.c.b16 %v262, %v258
    %v315 = vpack.c.b16 %v263, %v259
    %v316 = vpack.c.b16 %v268, %v264
    %v317 = vpack.c.b16 %v269, %v265
    %v318 = vpack.c.b16 %v270, %v266
    %v319 = vpack.c.b16 %v271, %v267
    %v320 = vpack.c.b16 %v276, %v272
    %v321 = vpack.c.b16 %v277, %v273
    %v322 = vpack.c.b16 %v278, %v274
    %v323 = vpack.c.b16 %v279, %v275
    %v324 = vpack.c.b16 %v284, %v280
    %v325 = vpack.c.b16 %v285, %v281
    %v326 = vpack.c.b16 %v286, %v282
    %v327 = vpack.c.b16 %v287, %v283
    %v328 = vpack.c.b16 %v292, %v288
    %v329 = vpack.c.b16 %v293, %v289
    %v330 = vpack.c.b16 %v294, %v290
    %v331 = vpack.c.b16 %v295, %v291
    %v332 = vpack.c.b16 %v300, %v296
    %v333 = vpack.c.b16 %v301, %v297
    %v334 = vpack.c.b16 %v302, %v298
    %v335 = vpack.c.b16 %v303, %v299
    %368 = vmatpush.bf16.msra.mxu0 %v332
    %369 = vmatpush.bf16.msra.mxu0 %v328
    %370 = vmatpush.bf16.msra.mxu0 %v324
    %371 = vmatpush.bf16.msra.mxu0 %v320
    %372 = vmatpush.bf16.msra.mxu0 %v316
    %373 = vmatpush.bf16.msra.mxu0 %v312
    %374 = vmatpush.bf16.msra.mxu0 %v308
    %375 = vmatpush.bf16.msra.mxu0 %v304
    %376 = vmatmul.bf16.gmra.mxu0 %v207
    %v377 = vpop.f32.mrf.mxu0
    %v378 = vadd.f32 0.0, %v377
    %v379 = vpop.f32.mrf.mxu0
    %380 = vdwg.mxu0
    %381 = vmatpush.bf16.msra.mxu0 %v333
    %382 = vmatpush.bf16.msra.mxu0 %v329
    %383 = vmatpush.bf16.msra.mxu0 %v325
    %384 = vmatpush.bf16.msra.mxu0 %v321
    %385 = vmatpush.bf16.msra.mxu0 %v317
    %386 = vmatpush.bf16.msra.mxu0 %v313
    %387 = vmatpush.bf16.msra.mxu0 %v309
    %388 = vmatpush.bf16.msra.mxu0 %v305
    %389 = vmatmul.bf16.gmra.mxu0 %v207
    %v390 = vpop.f32.mrf.mxu0
    %v391 = vadd.f32 0.0, %v390
    %v392 = vpop.f32.mrf.mxu0
    %393 = vdwg.mxu0
    %394 = vmatpush.bf16.msra.mxu0 %v334
    %395 = vmatpush.bf16.msra.mxu0 %v330
    %396 = vmatpush.bf16.msra.mxu0 %v326
    %397 = vmatpush.bf16.msra.mxu0 %v322
    %398 = vmatpush.bf16.msra.mxu0 %v318
    %399 = vmatpush.bf16.msra.mxu0 %v314
    %400 = vmatpush.bf16.msra.mxu0 %v310
    %401 = vmatpush.bf16.msra.mxu0 %v306
    %402 = vmatmul.bf16.gmra.mxu0 %v207
    %v403 = vpop.f32.mrf.mxu0
    %v404 = vadd.f32 0.0, %v403
    %v405 = vpop.f32.mrf.mxu0
    %406 = vdwg.mxu0
    %407 = vmatpush.bf16.msra.mxu0 %v335
    %408 = vmatpush.bf16.msra.mxu0 %v331
    %409 = vmatpush.bf16.msra.mxu0 %v327
    %410 = vmatpush.bf16.msra.mxu0 %v323
    %411 = vmatpush.bf16.msra.mxu0 %v319
    %412 = vmatpush.bf16.msra.mxu0 %v315
    %413 = vmatpush.bf16.msra.mxu0 %v311
    %414 = vmatpush.bf16.msra.mxu0 %v307
    %415 = vmatmul.bf16.gmra.mxu0 %v207
    %v416 = vpop.f32.mrf.mxu0
    %v417 = vadd.f32 0.0, %v416
    %v418 = vpop.f32.mrf.mxu0
    %419 = vdwg.mxu0
    %v420 = vadd.f32 %v127, %v378
    %v421 = vadd.f32 %v141, %v391
    %v422 = vadd.f32 %v155, %v404
    %v423 = vadd.f32 %v169, %v417
    %v424 = vxor.u32 %v420, 2147483648
    %v425 = vmul.f32 %v424, 1.442695
    %v426 = vpow.pop %v425
    %v427 = vadd.f32 %v426, 1.0
    %v428 = vrcp.pop %v427
    %v429 = vmul.f32 %v427, %v428
    %v430 = vsub.f32 1.0, %v429
    %v431 = vmul.f32 %v428, %v430
    %v432 = vadd.f32 %v428, %v431
    %vm433 = vweird.f32 %v427
    %vm434 = vweird.f32 %v428
    %vm435 = vmor %vm433, %vm434
    %v436 = vsel %vm435, %v428, %v432
    %v437 = vand.u32 2147483647, %v427
    %vm438 = vcmp.eq.f32.partialorder %v437, 8.507059e+37
    %v439 = vand.u32 %v427, 2147483648
    %v440 = vor.u32 1.1754944e-38, %v439
    %v441 = vsel %vm438, %v440, %v436
    %v442 = vmul.f32 1.0, %v441
    %v443 = vxor.u32 %v421, 2147483648
    %v444 = vmul.f32 %v443, 1.442695
    %v445 = vpow.pop %v444
    %v446 = vadd.f32 %v445, 1.0
    %v447 = vrcp.pop %v446
    %v448 = vmul.f32 %v446, %v447
    %v449 = vsub.f32 1.0, %v448
    %v450 = vmul.f32 %v447, %v449
    %v451 = vadd.f32 %v447, %v450
    %vm452 = vweird.f32 %v446
    %vm453 = vweird.f32 %v447
    %vm454 = vmor %vm452, %vm453
    %v455 = vsel %vm454, %v447, %v451
    %v456 = vand.u32 2147483647, %v446
    %vm457 = vcmp.eq.f32.partialorder %v456, 8.507059e+37
    %v458 = vand.u32 %v446, 2147483648
    %v459 = vor.u32 1.1754944e-38, %v458
    %v460 = vsel %vm457, %v459, %v455
    %v461 = vmul.f32 1.0, %v460
    %v462 = vtanh.pop %v422
    %v463 = vxor.u32 %v423, 2147483648
    %v464 = vmul.f32 %v463, 1.442695
    %v465 = vpow.pop %v464
    %v466 = vadd.f32 %v465, 1.0
    %v467 = vrcp.pop %v466
    %v468 = vmul.f32 %v466, %v467
    %v469 = vsub.f32 1.0, %v468
    %v470 = vmul.f32 %v467, %v469
    %v471 = vadd.f32 %v467, %v470
    %vm472 = vweird.f32 %v466
    %vm473 = vweird.f32 %v467
    %vm474 = vmor %vm472, %vm473
    %v475 = vsel %vm474, %v467, %v471
    %v476 = vand.u32 2147483647, %v466
    %vm477 = vcmp.eq.f32.partialorder %v476, 8.507059e+37
    %v478 = vand.u32 %v466, 2147483648
    %v479 = vor.u32 1.1754944e-38, %v478
    %v480 = vsel %vm477, %v479, %v475
    %v481 = vmul.f32 1.0, %v480
    %v482 = vmul.f32 %v461, %v206
    %v483 = vmul.f32 %v442, %v462
    %v484 = vadd.f32 %v482, %v483
    %v485 = vtanh.pop %v484
    %v486 = vmul.f32 %v481, %v485
    %v487 = vpack.c.bf16 %v486, %v486
    %488 = vst [vmem:[#allocation2] sm:$0x1] %v487
    %489 = vmatpush.bf16.msra.mxu0 %v332
    %490 = vmatpush.bf16.msra.mxu0 %v328
    %491 = vmatpush.bf16.msra.mxu0 %v324
    %492 = vmatpush.bf16.msra.mxu0 %v320
    %493 = vmatpush.bf16.msra.mxu0 %v316
    %494 = vmatpush.bf16.msra.mxu0 %v312
    %495 = vmatpush.bf16.msra.mxu0 %v308
    %496 = vmatpush.bf16.msra.mxu0 %v304
    %497 = vmatmul.bf16.gmra.mxu0 %v487
    %v498 = vpop.f32.mrf.mxu0
    %v499 = vadd.f32 0.0, %v498
    %v500 = vpop.f32.mrf.mxu0
    %501 = vdwg.mxu0
    %502 = vmatpush.bf16.msra.mxu0 %v333
    %503 = vmatpush.bf16.msra.mxu0 %v329
    %504 = vmatpush.bf16.msra.mxu0 %v325
    %505 = vmatpush.bf16.msra.mxu0 %v321
    %506 = vmatpush.bf16.msra.mxu0 %v317
    %507 = vmatpush.bf16.msra.mxu0 %v313
    %508 = vmatpush.bf16.msra.mxu0 %v309
    %509 = vmatpush.bf16.msra.mxu0 %v305
    %510 = vmatmul.bf16.gmra.mxu0 %v487
    %v511 = vpop.f32.mrf.mxu0
    %v512 = vadd.f32 0.0, %v511
    %v513 = vpop.f32.mrf.mxu0
    %514 = vdwg.mxu0
    %515 = vmatpush.bf16.msra.mxu0 %v334
    %516 = vmatpush.bf16.msra.mxu0 %v330
    %517 = vmatpush.bf16.msra.mxu0 %v326
    %518 = vmatpush.bf16.msra.mxu0 %v322
    %519 = vmatpush.bf16.msra.mxu0 %v318
    %520 = vmatpush.bf16.msra.mxu0 %v314
    %521 = vmatpush.bf16.msra.mxu0 %v310
    %522 = vmatpush.bf16.msra.mxu0 %v306
    %523 = vmatmul.bf16.gmra.mxu0 %v487
    %v524 = vpop.f32.mrf.mxu0
    %v525 = vadd.f32 0.0, %v524
    %v526 = vpop.f32.mrf.mxu0
    %527 = vdwg.mxu0
    %528 = vmatpush.bf16.msra.mxu0 %v335
    %529 = vmatpush.bf16.msra.mxu0 %v331
    %530 = vmatpush.bf16.msra.mxu0 %v327
    %531 = vmatpush.bf16.msra.mxu0 %v323
    %532 = vmatpush.bf16.msra.mxu0 %v319
    %533 = vmatpush.bf16.msra.mxu0 %v315
    %534 = vmatpush.bf16.msra.mxu0 %v311
    %535 = vmatpush.bf16.msra.mxu0 %v307
    %536 = vmatmul.bf16.gmra.mxu0 %v487
    %v537 = vpop.f32.mrf.mxu0
    %v538 = vadd.f32 0.0, %v537
    %v539 = vpop.f32.mrf.mxu0
    %540 = vdwg.mxu0
    %v545 = vrot.slane %v499, 6
    %v546 = vrot.slane %v512, 6
    %v547 = vrot.slane %v525, 6
    %v548 = vrot.slane %v538, 6
    %v553 = vadd.f32 %v127, %v545
    %v554 = vadd.f32 %v141, %v546
    %v555 = vadd.f32 %v155, %v547
    %v556 = vadd.f32 %v169, %v548
    %v557 = vxor.u32 %v553, 2147483648
    %v558 = vmul.f32 %v557, 1.442695
    %v559 = vpow.pop %v558
    %v560 = vadd.f32 %v559, 1.0
    %v561 = vrcp.pop %v560
    %v562 = vmul.f32 %v560, %v561
    %v563 = vsub.f32 1.0, %v562
    %v564 = vmul.f32 %v561, %v563
    %v565 = vadd.f32 %v561, %v564
    %vm566 = vweird.f32 %v560
    %vm567 = vweird.f32 %v561
    %vm568 = vmor %vm566, %vm567
    %v569 = vsel %vm568, %v561, %v565
    %v570 = vand.u32 2147483647, %v560
    %vm571 = vcmp.eq.f32.partialorder %v570, 8.507059e+37
    %v572 = vand.u32 %v560, 2147483648
    %v573 = vor.u32 1.1754944e-38, %v572
    %v574 = vsel %vm571, %v573, %v569
    %v575 = vmul.f32 1.0, %v574
    %v576 = vxor.u32 %v554, 2147483648
    %v577 = vmul.f32 %v576, 1.442695
    %v578 = vpow.pop %v577
    %v579 = vadd.f32 %v578, 1.0
    %v580 = vrcp.pop %v579
    %v581 = vmul.f32 %v579, %v580
    %v582 = vsub.f32 1.0, %v581
    %v583 = vmul.f32 %v580, %v582
    %v584 = vadd.f32 %v580, %v583
    %vm585 = vweird.f32 %v579
    %vm586 = vweird.f32 %v580
    %vm587 = vmor %vm585, %vm586
    %v588 = vsel %vm587, %v580, %v584
    %v589 = vand.u32 2147483647, %v579
    %vm590 = vcmp.eq.f32.partialorder %v589, 8.507059e+37
    %v591 = vand.u32 %v579, 2147483648
    %v592 = vor.u32 1.1754944e-38, %v591
    %v593 = vsel %vm590, %v592, %v588
    %v594 = vmul.f32 1.0, %v593
    %v595 = vtanh.pop %v555
    %v596 = vxor.u32 %v556, 2147483648
    %v597 = vmul.f32 %v596, 1.442695
    %v598 = vpow.pop %v597
    %v599 = vadd.f32 %v598, 1.0
    %v600 = vrcp.pop %v599
    %v601 = vmul.f32 %v599, %v600
    %v602 = vsub.f32 1.0, %v601
    %v603 = vmul.f32 %v600, %v602
    %v604 = vadd.f32 %v600, %v603
    %vm605 = vweird.f32 %v599
    %vm606 = vweird.f32 %v600
    %vm607 = vmor %vm605, %vm606
    %v608 = vsel %vm607, %v600, %v604
    %v609 = vand.u32 2147483647, %v599
    %vm610 = vcmp.eq.f32.partialorder %v609, 8.507059e+37
    %v611 = vand.u32 %v599, 2147483648
    %v612 = vor.u32 1.1754944e-38, %v611
    %v613 = vsel %vm610, %v612, %v608
    %v614 = vmul.f32 1.0, %v613
    %v616 = vrot.slane %v484, 6
    %v618 = vmul.f32 %v594, %v616
    %v619 = vmul.f32 %v575, %v595
    %v620 = vadd.f32 %v618, %v619
    %v621 = vtanh.pop %v620
    %v622 = vmul.f32 %v614, %v621
    %v623 = vpack.c.bf16 %v622, %v622
    %624 = vst [vmem:[#allocation2] sm:$0x2] %v623
    %v626 = vunpack.c.l.b16 %v623
    %v627 = vpack.c.b16 %v626, %v626
    %v628 = vrot.slane %v627, 1
    %630 = vmatpush.bf16.msra.mxu0 %v332
    %631 = vmatpush.bf16.msra.mxu0 %v328
    %632 = vmatpush.bf16.msra.mxu0 %v324
    %633 = vmatpush.bf16.msra.mxu0 %v320
    %634 = vmatpush.bf16.msra.mxu0 %v316
    %635 = vmatpush.bf16.msra.mxu0 %v312
    %636 = vmatpush.bf16.msra.mxu0 %v308
    %637 = vmatpush.bf16.msra.mxu0 %v304
    %638 = vmatmul.bf16.gmra.mxu0 %v628
    %v639 = vpop.f32.mrf.mxu0
    %v640 = vadd.f32 0.0, %v639
    %v641 = vpop.f32.mrf.mxu0
    %642 = vdwg.mxu0
    %643 = vmatpush.bf16.msra.mxu0 %v333
    %644 = vmatpush.bf16.msra.mxu0 %v329
    %645 = vmatpush.bf16.msra.mxu0 %v325
    %646 = vmatpush.bf16.msra.mxu0 %v321
    %647 = vmatpush.bf16.msra.mxu0 %v317
    %648 = vmatpush.bf16.msra.mxu0 %v313
    %649 = vmatpush.bf16.msra.mxu0 %v309
    %650 = vmatpush.bf16.msra.mxu0 %v305
    %651 = vmatmul.bf16.gmra.mxu0 %v628
    %v652 = vpop.f32.mrf.mxu0
    %v653 = vadd.f32 0.0, %v652
    %v654 = vpop.f32.mrf.mxu0
    %655 = vdwg.mxu0
    %656 = vmatpush.bf16.msra.mxu0 %v334
    %657 = vmatpush.bf16.msra.mxu0 %v330
    %658 = vmatpush.bf16.msra.mxu0 %v326
    %659 = vmatpush.bf16.msra.mxu0 %v322
    %660 = vmatpush.bf16.msra.mxu0 %v318
    %661 = vmatpush.bf16.msra.mxu0 %v314
    %662 = vmatpush.bf16.msra.mxu0 %v310
    %663 = vmatpush.bf16.msra.mxu0 %v306
    %664 = vmatmul.bf16.gmra.mxu0 %v628
    %v665 = vpop.f32.mrf.mxu0
    %v666 = vadd.f32 0.0, %v665
    %v667 = vpop.f32.mrf.mxu0
    %668 = vdwg.mxu0
    %669 = vmatpush.bf16.msra.mxu0 %v335
    %670 = vmatpush.bf16.msra.mxu0 %v331
    %671 = vmatpush.bf16.msra.mxu0 %v327
    %672 = vmatpush.bf16.msra.mxu0 %v323
    %673 = vmatpush.bf16.msra.mxu0 %v319
    %674 = vmatpush.bf16.msra.mxu0 %v315
    %675 = vmatpush.bf16.msra.mxu0 %v311
    %676 = vmatpush.bf16.msra.mxu0 %v307
    %677 = vmatmul.bf16.gmra.mxu0 %v628
    %v678 = vpop.f32.mrf.mxu0
    %v679 = vadd.f32 0.0, %v678
    %v680 = vpop.f32.mrf.mxu0
    %681 = vdwg.mxu0
    %v686 = vrot.slane %v640, 4
    %v687 = vrot.slane %v653, 4
    %v688 = vrot.slane %v666, 4
    %v689 = vrot.slane %v679, 4
    %v694 = vadd.f32 %v127, %v686
    %v695 = vadd.f32 %v141, %v687
    %v696 = vadd.f32 %v155, %v688
    %v697 = vadd.f32 %v169, %v689
    %v698 = vxor.u32 %v694, 2147483648
    %v699 = vmul.f32 %v698, 1.442695
    %v700 = vpow.pop %v699
    %v701 = vadd.f32 %v700, 1.0
    %v702 = vrcp.pop %v701
    %v703 = vmul.f32 %v701, %v702
    %v704 = vsub.f32 1.0, %v703
    %v705 = vmul.f32 %v702, %v704
    %v706 = vadd.f32 %v702, %v705
    %vm707 = vweird.f32 %v701
    %vm708 = vweird.f32 %v702
    %vm709 = vmor %vm707, %vm708
    %v710 = vsel %vm709, %v702, %v706
    %v711 = vand.u32 2147483647, %v701
    %vm712 = vcmp.eq.f32.partialorder %v711, 8.507059e+37
    %v713 = vand.u32 %v701, 2147483648
    %v714 = vor.u32 1.1754944e-38, %v713
    %v715 = vsel %vm712, %v714, %v710
    %v716 = vmul.f32 1.0, %v715
    %v717 = vxor.u32 %v695, 2147483648
    %v718 = vmul.f32 %v717, 1.442695
    %v719 = vpow.pop %v718
    %v720 = vadd.f32 %v719, 1.0
    %v721 = vrcp.pop %v720
    %v722 = vmul.f32 %v720, %v721
    %v723 = vsub.f32 1.0, %v722
    %v724 = vmul.f32 %v721, %v723
    %v725 = vadd.f32 %v721, %v724
    %vm726 = vweird.f32 %v720
    %vm727 = vweird.f32 %v721
    %vm728 = vmor %vm726, %vm727
    %v729 = vsel %vm728, %v721, %v725
    %v730 = vand.u32 2147483647, %v720
    %vm731 = vcmp.eq.f32.partialorder %v730, 8.507059e+37
    %v732 = vand.u32 %v720, 2147483648
    %v733 = vor.u32 1.1754944e-38, %v732
    %v734 = vsel %vm731, %v733, %v729
    %v735 = vmul.f32 1.0, %v734
    %v736 = vtanh.pop %v696
    %v737 = vxor.u32 %v697, 2147483648
    %v738 = vmul.f32 %v737, 1.442695
    %v739 = vpow.pop %v738
    %v740 = vadd.f32 %v739, 1.0
    %v741 = vrcp.pop %v740
    %v742 = vmul.f32 %v740, %v741
    %v743 = vsub.f32 1.0, %v742
    %v744 = vmul.f32 %v741, %v743
    %v745 = vadd.f32 %v741, %v744
    %vm746 = vweird.f32 %v740
    %vm747 = vweird.f32 %v741
    %vm748 = vmor %vm746, %vm747
    %v749 = vsel %vm748, %v741, %v745
    %v750 = vand.u32 2147483647, %v740
    %vm751 = vcmp.eq.f32.partialorder %v750, 8.507059e+37
    %v752 = vand.u32 %v740, 2147483648
    %v753 = vor.u32 1.1754944e-38, %v752
    %v754 = vsel %vm751, %v753, %v749
    %v755 = vmul.f32 1.0, %v754
    %v757 = vrot.slane %v620, 6
    %v759 = vmul.f32 %v735, %v757
    %v760 = vmul.f32 %v716, %v736
    %v761 = vadd.f32 %v759, %v760
    %v762 = vtanh.pop %v761
    %v763 = vmul.f32 %v755, %v762
    %v764 = vpack.c.bf16 %v763, %v763
    %765 = vst [vmem:[#allocation2] sm:$0x4] %v764
    %v767 = vunpack.c.l.b16 %v764
    %v768 = vpack.c.b16 %v767, %v767
    %v769 = vrot.slane %v768, 2
    %771 = vmatpush.bf16.msra.mxu0 %v332
    %772 = vmatpush.bf16.msra.mxu0 %v328
    %773 = vmatpush.bf16.msra.mxu0 %v324
    %774 = vmatpush.bf16.msra.mxu0 %v320
    %775 = vmatpush.bf16.msra.mxu0 %v316
    %776 = vmatpush.bf16.msra.mxu0 %v312
    %777 = vmatpush.bf16.msra.mxu0 %v308
    %778 = vmatpush.bf16.msra.mxu0 %v304
    %779 = vmatmul.bf16.gmra.mxu0 %v769
    %v780 = vpop.f32.mrf.mxu0
    %v781 = vadd.f32 0.0, %v780
    %v782 = vpop.f32.mrf.mxu0
    %783 = vdwg.mxu0
    %784 = vmatpush.bf16.msra.mxu0 %v333
    %785 = vmatpush.bf16.msra.mxu0 %v329
    %786 = vmatpush.bf16.msra.mxu0 %v325
    %787 = vmatpush.bf16.msra.mxu0 %v321
    %788 = vmatpush.bf16.msra.mxu0 %v317
    %789 = vmatpush.bf16.msra.mxu0 %v313
    %790 = vmatpush.bf16.msra.mxu0 %v309
    %791 = vmatpush.bf16.msra.mxu0 %v305
    %792 = vmatmul.bf16.gmra.mxu0 %v769
    %v793 = vpop.f32.mrf.mxu0
    %v794 = vadd.f32 0.0, %v793
    %v795 = vpop.f32.mrf.mxu0
    %796 = vdwg.mxu0
    %797 = vmatpush.bf16.msra.mxu0 %v334
    %798 = vmatpush.bf16.msra.mxu0 %v330
    %799 = vmatpush.bf16.msra.mxu0 %v326
    %800 = vmatpush.bf16.msra.mxu0 %v322
    %801 = vmatpush.bf16.msra.mxu0 %v318
    %802 = vmatpush.bf16.msra.mxu0 %v314
    %803 = vmatpush.bf16.msra.mxu0 %v310
    %804 = vmatpush.bf16.msra.mxu0 %v306
    %805 = vmatmul.bf16.gmra.mxu0 %v769
    %v806 = vpop.f32.mrf.mxu0
    %v807 = vadd.f32 0.0, %v806
    %v808 = vpop.f32.mrf.mxu0
    %809 = vdwg.mxu0
    %810 = vmatpush.bf16.msra.mxu0 %v335
    %811 = vmatpush.bf16.msra.mxu0 %v331
    %812 = vmatpush.bf16.msra.mxu0 %v327
    %813 = vmatpush.bf16.msra.mxu0 %v323
    %814 = vmatpush.bf16.msra.mxu0 %v319
    %815 = vmatpush.bf16.msra.mxu0 %v315
    %816 = vmatpush.bf16.msra.mxu0 %v311
    %817 = vmatpush.bf16.msra.mxu0 %v307
    %818 = vmatmul.bf16.gmra.mxu0 %v769
    %v819 = vpop.f32.mrf.mxu0
    %v820 = vadd.f32 0.0, %v819
    %v821 = vpop.f32.mrf.mxu0
    %822 = vdwg.mxu0
    %v827 = vrot.slane %v781, 2
    %v828 = vrot.slane %v794, 2
    %v829 = vrot.slane %v807, 2
    %v830 = vrot.slane %v820, 2
    %v835 = vadd.f32 %v127, %v827
    %v836 = vadd.f32 %v141, %v828
    %v837 = vadd.f32 %v155, %v829
    %v838 = vadd.f32 %v169, %v830
    %v839 = vxor.u32 %v835, 2147483648
    %v840 = vmul.f32 %v839, 1.442695
    %v841 = vpow.pop %v840
    %v842 = vadd.f32 %v841, 1.0
    %v843 = vrcp.pop %v842
    %v844 = vmul.f32 %v842, %v843
    %v845 = vsub.f32 1.0, %v844
    %v846 = vmul.f32 %v843, %v845
    %v847 = vadd.f32 %v843, %v846
    %vm848 = vweird.f32 %v842
    %vm849 = vweird.f32 %v843
    %vm850 = vmor %vm848, %vm849
    %v851 = vsel %vm850, %v843, %v847
    %v852 = vand.u32 2147483647, %v842
    %vm853 = vcmp.eq.f32.partialorder %v852, 8.507059e+37
    %v854 = vand.u32 %v842, 2147483648
    %v855 = vor.u32 1.1754944e-38, %v854
    %v856 = vsel %vm853, %v855, %v851
    %v857 = vmul.f32 1.0, %v856
    %v858 = vxor.u32 %v836, 2147483648
    %v859 = vmul.f32 %v858, 1.442695
    %v860 = vpow.pop %v859
    %v861 = vadd.f32 %v860, 1.0
    %v862 = vrcp.pop %v861
    %v863 = vmul.f32 %v861, %v862
    %v864 = vsub.f32 1.0, %v863
    %v865 = vmul.f32 %v862, %v864
    %v866 = vadd.f32 %v862, %v865
    %vm867 = vweird.f32 %v861
    %vm868 = vweird.f32 %v862
    %vm869 = vmor %vm867, %vm868
    %v870 = vsel %vm869, %v862, %v866
    %v871 = vand.u32 2147483647, %v861
    %vm872 = vcmp.eq.f32.partialorder %v871, 8.507059e+37
    %v873 = vand.u32 %v861, 2147483648
    %v874 = vor.u32 1.1754944e-38, %v873
    %v875 = vsel %vm872, %v874, %v870
    %v876 = vmul.f32 1.0, %v875
    %v877 = vtanh.pop %v837
    %v878 = vxor.u32 %v838, 2147483648
    %v879 = vmul.f32 %v878, 1.442695
    %v880 = vpow.pop %v879
    %v881 = vadd.f32 %v880, 1.0
    %v882 = vrcp.pop %v881
    %v883 = vmul.f32 %v881, %v882
    %v884 = vsub.f32 1.0, %v883
    %v885 = vmul.f32 %v882, %v884
    %v886 = vadd.f32 %v882, %v885
    %vm887 = vweird.f32 %v881
    %vm888 = vweird.f32 %v882
    %vm889 = vmor %vm887, %vm888
    %v890 = vsel %vm889, %v882, %v886
    %v891 = vand.u32 2147483647, %v881
    %vm892 = vcmp.eq.f32.partialorder %v891, 8.507059e+37
    %v893 = vand.u32 %v881, 2147483648
    %v894 = vor.u32 1.1754944e-38, %v893
    %v895 = vsel %vm892, %v894, %v890
    %v896 = vmul.f32 1.0, %v895
    %v898 = vrot.slane %v761, 6
    %v900 = vmul.f32 %v876, %v898
    %v901 = vmul.f32 %v857, %v877
    %v902 = vadd.f32 %v900, %v901
    %v903 = vtanh.pop %v902
    %v904 = vmul.f32 %v896, %v903
    %v905 = vpack.c.bf16 %v904, %v904
    %906 = vst [vmem:[#allocation2] sm:$0x8] %v905
    %v908 = vunpack.c.l.b16 %v905
    %v909 = vpack.c.b16 %v908, %v908
    %v910 = vrot.slane %v909, 3
    %912 = vmatpush.bf16.msra.mxu0 %v332
    %913 = vmatpush.bf16.msra.mxu0 %v328
    %914 = vmatpush.bf16.msra.mxu0 %v324
    %915 = vmatpush.bf16.msra.mxu0 %v320
    %916 = vmatpush.bf16.msra.mxu0 %v316
    %917 = vmatpush.bf16.msra.mxu0 %v312
    %918 = vmatpush.bf16.msra.mxu0 %v308
    %919 = vmatpush.bf16.msra.mxu0 %v304
    %920 = vmatmul.bf16.gmra.mxu0 %v910
    %v921 = vpop.f32.mrf.mxu0
    %v922 = vadd.f32 0.0, %v921
    %v923 = vpop.f32.mrf.mxu0
    %924 = vdwg.mxu0
    %925 = vmatpush.bf16.msra.mxu0 %v333
    %926 = vmatpush.bf16.msra.mxu0 %v329
    %927 = vmatpush.bf16.msra.mxu0 %v325
    %928 = vmatpush.bf16.msra.mxu0 %v321
    %929 = vmatpush.bf16.msra.mxu0 %v317
    %930 = vmatpush.bf16.msra.mxu0 %v313
    %931 = vmatpush.bf16.msra.mxu0 %v309
    %932 = vmatpush.bf16.msra.mxu0 %v305
    %933 = vmatmul.bf16.gmra.mxu0 %v910
    %v934 = vpop.f32.mrf.mxu0
    %v935 = vadd.f32 0.0, %v934
    %v936 = vpop.f32.mrf.mxu0
    %937 = vdwg.mxu0
    %938 = vmatpush.bf16.msra.mxu0 %v334
    %939 = vmatpush.bf16.msra.mxu0 %v330
    %940 = vmatpush.bf16.msra.mxu0 %v326
    %941 = vmatpush.bf16.msra.mxu0 %v322
    %942 = vmatpush.bf16.msra.mxu0 %v318
    %943 = vmatpush.bf16.msra.mxu0 %v314
    %944 = vmatpush.bf16.msra.mxu0 %v310
    %945 = vmatpush.bf16.msra.mxu0 %v306
    %946 = vmatmul.bf16.gmra.mxu0 %v910
    %v947 = vpop.f32.mrf.mxu0
    %v948 = vadd.f32 0.0, %v947
    %v949 = vpop.f32.mrf.mxu0
    %950 = vdwg.mxu0
    %951 = vmatpush.bf16.msra.mxu0 %v335
    %952 = vmatpush.bf16.msra.mxu0 %v331
    %953 = vmatpush.bf16.msra.mxu0 %v327
    %954 = vmatpush.bf16.msra.mxu0 %v323
    %955 = vmatpush.bf16.msra.mxu0 %v319
    %956 = vmatpush.bf16.msra.mxu0 %v315
    %957 = vmatpush.bf16.msra.mxu0 %v311
    %958 = vmatpush.bf16.msra.mxu0 %v307
    %959 = vmatmul.bf16.gmra.mxu0 %v910
    %v960 = vpop.f32.mrf.mxu0
    %v961 = vadd.f32 0.0, %v960
    %v962 = vpop.f32.mrf.mxu0
    %963 = vdwg.mxu0
    %v964 = vadd.f32 %v129, %v922
    %v965 = vadd.f32 %v143, %v935
    %v966 = vadd.f32 %v157, %v948
    %v967 = vadd.f32 %v171, %v961
    %v968 = vxor.u32 %v964, 2147483648
    %v969 = vmul.f32 %v968, 1.442695
    %v970 = vpow.pop %v969
    %v971 = vadd.f32 %v970, 1.0
    %v972 = vrcp.pop %v971
    %v973 = vmul.f32 %v971, %v972
    %v974 = vsub.f32 1.0, %v973
    %v975 = vmul.f32 %v972, %v974
    %v976 = vadd.f32 %v972, %v975
    %vm977 = vweird.f32 %v971
    %vm978 = vweird.f32 %v972
    %vm979 = vmor %vm977, %vm978
    %v980 = vsel %vm979, %v972, %v976
    %v981 = vand.u32 2147483647, %v971
    %vm982 = vcmp.eq.f32.partialorder %v981, 8.507059e+37
    %v983 = vand.u32 %v971, 2147483648
    %v984 = vor.u32 1.1754944e-38, %v983
    %v985 = vsel %vm982, %v984, %v980
    %v986 = vmul.f32 1.0, %v985
    %v987 = vxor.u32 %v965, 2147483648
    %v988 = vmul.f32 %v987, 1.442695
    %v989 = vpow.pop %v988
    %v990 = vadd.f32 %v989, 1.0
    %v991 = vrcp.pop %v990
    %v992 = vmul.f32 %v990, %v991
    %v993 = vsub.f32 1.0, %v992
    %v994 = vmul.f32 %v991, %v993
    %v995 = vadd.f32 %v991, %v994
    %vm996 = vweird.f32 %v990
    %vm997 = vweird.f32 %v991
    %vm998 = vmor %vm996, %vm997
    %v999 = vsel %vm998, %v991, %v995
    %v1000 = vand.u32 2147483647, %v990
    %vm1001 = vcmp.eq.f32.partialorder %v1000, 8.507059e+37
    %v1002 = vand.u32 %v990, 2147483648
    %v1003 = vor.u32 1.1754944e-38, %v1002
    %v1004 = vsel %vm1001, %v1003, %v999
    %v1005 = vmul.f32 1.0, %v1004
    %v1006 = vtanh.pop %v966
    %v1007 = vxor.u32 %v967, 2147483648
    %v1008 = vmul.f32 %v1007, 1.442695
    %v1009 = vpow.pop %v1008
    %v1010 = vadd.f32 %v1009, 1.0
    %v1011 = vrcp.pop %v1010
    %v1012 = vmul.f32 %v1010, %v1011
    %v1013 = vsub.f32 1.0, %v1012
    %v1014 = vmul.f32 %v1011, %v1013
    %v1015 = vadd.f32 %v1011, %v1014
    %vm1016 = vweird.f32 %v1010
    %vm1017 = vweird.f32 %v1011
    %vm1018 = vmor %vm1016, %vm1017
    %v1019 = vsel %vm1018, %v1011, %v1015
    %v1020 = vand.u32 2147483647, %v1010
    %vm1021 = vcmp.eq.f32.partialorder %v1020, 8.507059e+37
    %v1022 = vand.u32 %v1010, 2147483648
    %v1023 = vor.u32 1.1754944e-38, %v1022
    %v1024 = vsel %vm1021, %v1023, %v1019
    %v1025 = vmul.f32 1.0, %v1024
    %v1027 = vrot.slane %v902, 6
    %v1029 = vmul.f32 %v1005, %v1027
    %v1030 = vmul.f32 %v986, %v1006
    %v1031 = vadd.f32 %v1029, %v1030
    %v1032 = vtanh.pop %v1031
    %v1033 = vmul.f32 %v1025, %v1032
    %v1034 = vpack.c.bf16 %v1033, %v1033
    %1035 = vst [vmem:[#allocation2 + $0x4] sm:$0x1] %v1034
    %1036 = vmatpush.bf16.msra.mxu0 %v332
    %1037 = vmatpush.bf16.msra.mxu0 %v328
    %1038 = vmatpush.bf16.msra.mxu0 %v324
    %1039 = vmatpush.bf16.msra.mxu0 %v320
    %1040 = vmatpush.bf16.msra.mxu0 %v316
    %1041 = vmatpush.bf16.msra.mxu0 %v312
    %1042 = vmatpush.bf16.msra.mxu0 %v308
    %1043 = vmatpush.bf16.msra.mxu0 %v304
    %1044 = vmatmul.bf16.gmra.mxu0 %v1034
    %v1045 = vpop.f32.mrf.mxu0
    %v1046 = vadd.f32 0.0, %v1045
    %v1047 = vpop.f32.mrf.mxu0
    %1048 = vdwg.mxu0
    %1049 = vmatpush.bf16.msra.mxu0 %v333
    %1050 = vmatpush.bf16.msra.mxu0 %v329
    %1051 = vmatpush.bf16.msra.mxu0 %v325
    %1052 = vmatpush.bf16.msra.mxu0 %v321
    %1053 = vmatpush.bf16.msra.mxu0 %v317
    %1054 = vmatpush.bf16.msra.mxu0 %v313
    %1055 = vmatpush.bf16.msra.mxu0 %v309
    %1056 = vmatpush.bf16.msra.mxu0 %v305
    %1057 = vmatmul.bf16.gmra.mxu0 %v1034
    %v1058 = vpop.f32.mrf.mxu0
    %v1059 = vadd.f32 0.0, %v1058
    %v1060 = vpop.f32.mrf.mxu0
    %1061 = vdwg.mxu0
    %1062 = vmatpush.bf16.msra.mxu0 %v334
    %1063 = vmatpush.bf16.msra.mxu0 %v330
    %1064 = vmatpush.bf16.msra.mxu0 %v326
    %1065 = vmatpush.bf16.msra.mxu0 %v322
    %1066 = vmatpush.bf16.msra.mxu0 %v318
    %1067 = vmatpush.bf16.msra.mxu0 %v314
    %1068 = vmatpush.bf16.msra.mxu0 %v310
    %1069 = vmatpush.bf16.msra.mxu0 %v306
    %1070 = vmatmul.bf16.gmra.mxu0 %v1034
    %v1071 = vpop.f32.mrf.mxu0
    %v1072 = vadd.f32 0.0, %v1071
    %v1073 = vpop.f32.mrf.mxu0
    %1074 = vdwg.mxu0
    %1075 = vmatpush.bf16.msra.mxu0 %v335
    %1076 = vmatpush.bf16.msra.mxu0 %v331
    %1077 = vmatpush.bf16.msra.mxu0 %v327
    %1078 = vmatpush.bf16.msra.mxu0 %v323
    %1079 = vmatpush.bf16.msra.mxu0 %v319
    %1080 = vmatpush.bf16.msra.mxu0 %v315
    %1081 = vmatpush.bf16.msra.mxu0 %v311
    %1082 = vmatpush.bf16.msra.mxu0 %v307
    %1083 = vmatmul.bf16.gmra.mxu0 %v1034
    %v1084 = vpop.f32.mrf.mxu0
    %v1085 = vadd.f32 0.0, %v1084
    %v1086 = vpop.f32.mrf.mxu0
    %1087 = vdwg.mxu0
    %v1092 = vrot.slane %v1046, 6
    %v1093 = vrot.slane %v1059, 6
    %v1094 = vrot.slane %v1072, 6
    %v1095 = vrot.slane %v1085, 6
    %v1100 = vadd.f32 %v129, %v1092
    %v1101 = vadd.f32 %v143, %v1093
    %v1102 = vadd.f32 %v157, %v1094
    %v1103 = vadd.f32 %v171, %v1095
    %v1104 = vxor.u32 %v1100, 2147483648
    %v1105 = vmul.f32 %v1104, 1.442695
    %v1106 = vpow.pop %v1105
    %v1107 = vadd.f32 %v1106, 1.0
    %v1108 = vrcp.pop %v1107
    %v1109 = vmul.f32 %v1107, %v1108
    %v1110 = vsub.f32 1.0, %v1109
    %v1111 = vmul.f32 %v1108, %v1110
    %v1112 = vadd.f32 %v1108, %v1111
    %vm1113 = vweird.f32 %v1107
    %vm1114 = vweird.f32 %v1108
    %vm1115 = vmor %vm1113, %vm1114
    %v1116 = vsel %vm1115, %v1108, %v1112
    %v1117 = vand.u32 2147483647, %v1107
    %vm1118 = vcmp.eq.f32.partialorder %v1117, 8.507059e+37
    %v1119 = vand.u32 %v1107, 2147483648
    %v1120 = vor.u32 1.1754944e-38, %v1119
    %v1121 = vsel %vm1118, %v1120, %v1116
    %v1122 = vmul.f32 1.0, %v1121
    %v1123 = vxor.u32 %v1101, 2147483648
    %v1124 = vmul.f32 %v1123, 1.442695
    %v1125 = vpow.pop %v1124
    %v1126 = vadd.f32 %v1125, 1.0
    %v1127 = vrcp.pop %v1126
    %v1128 = vmul.f32 %v1126, %v1127
    %v1129 = vsub.f32 1.0, %v1128
    %v1130 = vmul.f32 %v1127, %v1129
    %v1131 = vadd.f32 %v1127, %v1130
    %vm1132 = vweird.f32 %v1126
    %vm1133 = vweird.f32 %v1127
    %vm1134 = vmor %vm1132, %vm1133
    %v1135 = vsel %vm1134, %v1127, %v1131
    %v1136 = vand.u32 2147483647, %v1126
    %vm1137 = vcmp.eq.f32.partialorder %v1136, 8.507059e+37
    %v1138 = vand.u32 %v1126, 2147483648
    %v1139 = vor.u32 1.1754944e-38, %v1138
    %v1140 = vsel %vm1137, %v1139, %v1135
    %v1141 = vmul.f32 1.0, %v1140
    %v1142 = vtanh.pop %v1102
    %v1143 = vxor.u32 %v1103, 2147483648
    %v1144 = vmul.f32 %v1143, 1.442695
    %v1145 = vpow.pop %v1144
    %v1146 = vadd.f32 %v1145, 1.0
    %v1147 = vrcp.pop %v1146
    %v1148 = vmul.f32 %v1146, %v1147
    %v1149 = vsub.f32 1.0, %v1148
    %v1150 = vmul.f32 %v1147, %v1149
    %v1151 = vadd.f32 %v1147, %v1150
    %vm1152 = vweird.f32 %v1146
    %vm1153 = vweird.f32 %v1147
    %vm1154 = vmor %vm1152, %vm1153
    %v1155 = vsel %vm1154, %v1147, %v1151
    %v1156 = vand.u32 2147483647, %v1146
    %vm1157 = vcmp.eq.f32.partialorder %v1156, 8.507059e+37
    %v1158 = vand.u32 %v1146, 2147483648
    %v1159 = vor.u32 1.1754944e-38, %v1158
    %v1160 = vsel %vm1157, %v1159, %v1155
    %v1161 = vmul.f32 1.0, %v1160
    %v1163 = vrot.slane %v1031, 6
    %v1165 = vmul.f32 %v1141, %v1163
    %v1166 = vmul.f32 %v1122, %v1142
    %v1167 = vadd.f32 %v1165, %v1166
    %v1168 = vtanh.pop %v1167
    %v1169 = vmul.f32 %v1161, %v1168
    %v1170 = vpack.c.bf16 %v1169, %v1169
    %1171 = vst [vmem:[#allocation2 + $0x4] sm:$0x2] %v1170
    %v1173 = vunpack.c.l.b16 %v1170
    %v1174 = vpack.c.b16 %v1173, %v1173
    %v1175 = vrot.slane %v1174, 1
    %1177 = vmatpush.bf16.msra.mxu0 %v332
    %1178 = vmatpush.bf16.msra.mxu0 %v328
    %1179 = vmatpush.bf16.msra.mxu0 %v324
    %1180 = vmatpush.bf16.msra.mxu0 %v320
    %1181 = vmatpush.bf16.msra.mxu0 %v316
    %1182 = vmatpush.bf16.msra.mxu0 %v312
    %1183 = vmatpush.bf16.msra.mxu0 %v308
    %1184 = vmatpush.bf16.msra.mxu0 %v304
    %1185 = vmatmul.bf16.gmra.mxu0 %v1175
    %v1186 = vpop.f32.mrf.mxu0
    %v1187 = vadd.f32 0.0, %v1186
    %v1188 = vpop.f32.mrf.mxu0
    %1189 = vdwg.mxu0
    %1190 = vmatpush.bf16.msra.mxu0 %v333
    %1191 = vmatpush.bf16.msra.mxu0 %v329
    %1192 = vmatpush.bf16.msra.mxu0 %v325
    %1193 = vmatpush.bf16.msra.mxu0 %v321
    %1194 = vmatpush.bf16.msra.mxu0 %v317
    %1195 = vmatpush.bf16.msra.mxu0 %v313
    %1196 = vmatpush.bf16.msra.mxu0 %v309
    %1197 = vmatpush.bf16.msra.mxu0 %v305
    %1198 = vmatmul.bf16.gmra.mxu0 %v1175
    %v1199 = vpop.f32.mrf.mxu0
    %v1200 = vadd.f32 0.0, %v1199
    %v1201 = vpop.f32.mrf.mxu0
    %1202 = vdwg.mxu0
    %1203 = vmatpush.bf16.msra.mxu0 %v334
    %1204 = vmatpush.bf16.msra.mxu0 %v330
    %1205 = vmatpush.bf16.msra.mxu0 %v326
    %1206 = vmatpush.bf16.msra.mxu0 %v322
    %1207 = vmatpush.bf16.msra.mxu0 %v318
    %1208 = vmatpush.bf16.msra.mxu0 %v314
    %1209 = vmatpush.bf16.msra.mxu0 %v310
    %1210 = vmatpush.bf16.msra.mxu0 %v306
    %1211 = vmatmul.bf16.gmra.mxu0 %v1175
    %v1212 = vpop.f32.mrf.mxu0
    %v1213 = vadd.f32 0.0, %v1212
    %v1214 = vpop.f32.mrf.mxu0
    %1215 = vdwg.mxu0
    %1216 = vmatpush.bf16.msra.mxu0 %v335
    %1217 = vmatpush.bf16.msra.mxu0 %v331
    %1218 = vmatpush.bf16.msra.mxu0 %v327
    %1219 = vmatpush.bf16.msra.mxu0 %v323
    %1220 = vmatpush.bf16.msra.mxu0 %v319
    %1221 = vmatpush.bf16.msra.mxu0 %v315
    %1222 = vmatpush.bf16.msra.mxu0 %v311
    %1223 = vmatpush.bf16.msra.mxu0 %v307
    %1224 = vmatmul.bf16.gmra.mxu0 %v1175
    %v1225 = vpop.f32.mrf.mxu0
    %v1226 = vadd.f32 0.0, %v1225
    %v1227 = vpop.f32.mrf.mxu0
    %1228 = vdwg.mxu0
    %v1233 = vrot.slane %v1187, 4
    %v1234 = vrot.slane %v1200, 4
    %v1235 = vrot.slane %v1213, 4
    %v1236 = vrot.slane %v1226, 4
    %v1241 = vadd.f32 %v129, %v1233
    %v1242 = vadd.f32 %v143, %v1234
    %v1243 = vadd.f32 %v157, %v1235
    %v1244 = vadd.f32 %v171, %v1236
    %v1245 = vxor.u32 %v1241, 2147483648
    %v1246 = vmul.f32 %v1245, 1.442695
    %v1247 = vpow.pop %v1246
    %v1248 = vadd.f32 %v1247, 1.0
    %v1249 = vrcp.pop %v1248
    %v1250 = vmul.f32 %v1248, %v1249
    %v1251 = vsub.f32 1.0, %v1250
    %v1252 = vmul.f32 %v1249, %v1251
    %v1253 = vadd.f32 %v1249, %v1252
    %vm1254 = vweird.f32 %v1248
    %vm1255 = vweird.f32 %v1249
    %vm1256 = vmor %vm1254, %vm1255
    %v1257 = vsel %vm1256, %v1249, %v1253
    %v1258 = vand.u32 2147483647, %v1248
    %vm1259 = vcmp.eq.f32.partialorder %v1258, 8.507059e+37
    %v1260 = vand.u32 %v1248, 2147483648
    %v1261 = vor.u32 1.1754944e-38, %v1260
    %v1262 = vsel %vm1259, %v1261, %v1257
    %v1263 = vmul.f32 1.0, %v1262
    %v1264 = vxor.u32 %v1242, 2147483648
    %v1265 = vmul.f32 %v1264, 1.442695
    %v1266 = vpow.pop %v1265
    %v1267 = vadd.f32 %v1266, 1.0
    %v1268 = vrcp.pop %v1267
    %v1269 = vmul.f32 %v1267, %v1268
    %v1270 = vsub.f32 1.0, %v1269
    %v1271 = vmul.f32 %v1268, %v1270
    %v1272 = vadd.f32 %v1268, %v1271
    %vm1273 = vweird.f32 %v1267
    %vm1274 = vweird.f32 %v1268
    %vm1275 = vmor %vm1273, %vm1274
    %v1276 = vsel %vm1275, %v1268, %v1272
    %v1277 = vand.u32 2147483647, %v1267
    %vm1278 = vcmp.eq.f32.partialorder %v1277, 8.507059e+37
    %v1279 = vand.u32 %v1267, 2147483648
    %v1280 = vor.u32 1.1754944e-38, %v1279
    %v1281 = vsel %vm1278, %v1280, %v1276
    %v1282 = vmul.f32 1.0, %v1281
    %v1283 = vtanh.pop %v1243
    %v1284 = vxor.u32 %v1244, 2147483648
    %v1285 = vmul.f32 %v1284, 1.442695
    %v1286 = vpow.pop %v1285
    %v1287 = vadd.f32 %v1286, 1.0
    %v1288 = vrcp.pop %v1287
    %v1289 = vmul.f32 %v1287, %v1288
    %v1290 = vsub.f32 1.0, %v1289
    %v1291 = vmul.f32 %v1288, %v1290
    %v1292 = vadd.f32 %v1288, %v1291
    %vm1293 = vweird.f32 %v1287
    %vm1294 = vweird.f32 %v1288
    %vm1295 = vmor %vm1293, %vm1294
    %v1296 = vsel %vm1295, %v1288, %v1292
    %v1297 = vand.u32 2147483647, %v1287
    %vm1298 = vcmp.eq.f32.partialorder %v1297, 8.507059e+37
    %v1299 = vand.u32 %v1287, 2147483648
    %v1300 = vor.u32 1.1754944e-38, %v1299
    %v1301 = vsel %vm1298, %v1300, %v1296
    %v1302 = vmul.f32 1.0, %v1301
    %v1304 = vrot.slane %v1167, 6
    %v1306 = vmul.f32 %v1282, %v1304
    %v1307 = vmul.f32 %v1263, %v1283
    %v1308 = vadd.f32 %v1306, %v1307
    %v1309 = vtanh.pop %v1308
    %v1310 = vmul.f32 %v1302, %v1309
    %v1311 = vpack.c.bf16 %v1310, %v1310
    %1312 = vst [vmem:[#allocation2 + $0x4] sm:$0x4] %v1311
    %v1314 = vunpack.c.l.b16 %v1311
    %v1315 = vpack.c.b16 %v1314, %v1314
    %v1316 = vrot.slane %v1315, 2
    %1318 = vmatpush.bf16.msra.mxu0 %v332
    %1319 = vmatpush.bf16.msra.mxu0 %v328
    %1320 = vmatpush.bf16.msra.mxu0 %v324
    %1321 = vmatpush.bf16.msra.mxu0 %v320
    %1322 = vmatpush.bf16.msra.mxu0 %v316
    %1323 = vmatpush.bf16.msra.mxu0 %v312
    %1324 = vmatpush.bf16.msra.mxu0 %v308
    %1325 = vmatpush.bf16.msra.mxu0 %v304
    %1326 = vmatmul.bf16.gmra.mxu0 %v1316
    %v1327 = vpop.f32.mrf.mxu0
    %v1328 = vadd.f32 0.0, %v1327
    %v1329 = vpop.f32.mrf.mxu0
    %1330 = vdwg.mxu0
    %1331 = vmatpush.bf16.msra.mxu0 %v333
    %1332 = vmatpush.bf16.msra.mxu0 %v329
    %1333 = vmatpush.bf16.msra.mxu0 %v325
    %1334 = vmatpush.bf16.msra.mxu0 %v321
    %1335 = vmatpush.bf16.msra.mxu0 %v317
    %1336 = vmatpush.bf16.msra.mxu0 %v313
    %1337 = vmatpush.bf16.msra.mxu0 %v309
    %1338 = vmatpush.bf16.msra.mxu0 %v305
    %1339 = vmatmul.bf16.gmra.mxu0 %v1316
    %v1340 = vpop.f32.mrf.mxu0
    %v1341 = vadd.f32 0.0, %v1340
    %v1342 = vpop.f32.mrf.mxu0
    %1343 = vdwg.mxu0
    %1344 = vmatpush.bf16.msra.mxu0 %v334
    %1345 = vmatpush.bf16.msra.mxu0 %v330
    %1346 = vmatpush.bf16.msra.mxu0 %v326
    %1347 = vmatpush.bf16.msra.mxu0 %v322
    %1348 = vmatpush.bf16.msra.mxu0 %v318
    %1349 = vmatpush.bf16.msra.mxu0 %v314
    %1350 = vmatpush.bf16.msra.mxu0 %v310
    %1351 = vmatpush.bf16.msra.mxu0 %v306
    %1352 = vmatmul.bf16.gmra.mxu0 %v1316
    %v1353 = vpop.f32.mrf.mxu0
    %v1354 = vadd.f32 0.0, %v1353
    %v1355 = vpop.f32.mrf.mxu0
    %1356 = vdwg.mxu0
    %1357 = vmatpush.bf16.msra.mxu0 %v335
    %1358 = vmatpush.bf16.msra.mxu0 %v331
    %1359 = vmatpush.bf16.msra.mxu0 %v327
    %1360 = vmatpush.bf16.msra.mxu0 %v323
    %1361 = vmatpush.bf16.msra.mxu0 %v319
    %1362 = vmatpush.bf16.msra.mxu0 %v315
    %1363 = vmatpush.bf16.msra.mxu0 %v311
    %1364 = vmatpush.bf16.msra.mxu0 %v307
    %1365 = vmatmul.bf16.gmra.mxu0 %v1316
    %v1366 = vpop.f32.mrf.mxu0
    %v1367 = vadd.f32 0.0, %v1366
    %v1368 = vpop.f32.mrf.mxu0
    %1369 = vdwg.mxu0
    %v1374 = vrot.slane %v1328, 2
    %v1375 = vrot.slane %v1341, 2
    %v1376 = vrot.slane %v1354, 2
    %v1377 = vrot.slane %v1367, 2
    %v1382 = vadd.f32 %v129, %v1374
    %v1383 = vadd.f32 %v143, %v1375
    %v1384 = vadd.f32 %v157, %v1376
    %v1385 = vadd.f32 %v171, %v1377
    %v1386 = vxor.u32 %v1382, 2147483648
    %v1387 = vmul.f32 %v1386, 1.442695
    %v1388 = vpow.pop %v1387
    %v1389 = vadd.f32 %v1388, 1.0
    %v1390 = vrcp.pop %v1389
    %v1391 = vmul.f32 %v1389, %v1390
    %v1392 = vsub.f32 1.0, %v1391
    %v1393 = vmul.f32 %v1390, %v1392
    %v1394 = vadd.f32 %v1390, %v1393
    %vm1395 = vweird.f32 %v1389
    %vm1396 = vweird.f32 %v1390
    %vm1397 = vmor %vm1395, %vm1396
    %v1398 = vsel %vm1397, %v1390, %v1394
    %v1399 = vand.u32 2147483647, %v1389
    %vm1400 = vcmp.eq.f32.partialorder %v1399, 8.507059e+37
    %v1401 = vand.u32 %v1389, 2147483648
    %v1402 = vor.u32 1.1754944e-38, %v1401
    %v1403 = vsel %vm1400, %v1402, %v1398
    %v1404 = vmul.f32 1.0, %v1403
    %v1405 = vxor.u32 %v1383, 2147483648
    %v1406 = vmul.f32 %v1405, 1.442695
    %v1407 = vpow.pop %v1406
    %v1408 = vadd.f32 %v1407, 1.0
    %v1409 = vrcp.pop %v1408
    %v1410 = vmul.f32 %v1408, %v1409
    %v1411 = vsub.f32 1.0, %v1410
    %v1412 = vmul.f32 %v1409, %v1411
    %v1413 = vadd.f32 %v1409, %v1412
    %vm1414 = vweird.f32 %v1408
    %vm1415 = vweird.f32 %v1409
    %vm1416 = vmor %vm1414, %vm1415
    %v1417 = vsel %vm1416, %v1409, %v1413
    %v1418 = vand.u32 2147483647, %v1408
    %vm1419 = vcmp.eq.f32.partialorder %v1418, 8.507059e+37
    %v1420 = vand.u32 %v1408, 2147483648
    %v1421 = vor.u32 1.1754944e-38, %v1420
    %v1422 = vsel %vm1419, %v1421, %v1417
    %v1423 = vmul.f32 1.0, %v1422
    %v1424 = vtanh.pop %v1384
    %v1425 = vxor.u32 %v1385, 2147483648
    %v1426 = vmul.f32 %v1425, 1.442695
    %v1427 = vpow.pop %v1426
    %v1428 = vadd.f32 %v1427, 1.0
    %v1429 = vrcp.pop %v1428
    %v1430 = vmul.f32 %v1428, %v1429
    %v1431 = vsub.f32 1.0, %v1430
    %v1432 = vmul.f32 %v1429, %v1431
    %v1433 = vadd.f32 %v1429, %v1432
    %vm1434 = vweird.f32 %v1428
    %vm1435 = vweird.f32 %v1429
    %vm1436 = vmor %vm1434, %vm1435
    %v1437 = vsel %vm1436, %v1429, %v1433
    %v1438 = vand.u32 2147483647, %v1428
    %vm1439 = vcmp.eq.f32.partialorder %v1438, 8.507059e+37
    %v1440 = vand.u32 %v1428, 2147483648
    %v1441 = vor.u32 1.1754944e-38, %v1440
    %v1442 = vsel %vm1439, %v1441, %v1437
    %v1443 = vmul.f32 1.0, %v1442
    %v1445 = vrot.slane %v1308, 6
    %v1447 = vmul.f32 %v1423, %v1445
    %v1448 = vmul.f32 %v1404, %v1424
    %v1449 = vadd.f32 %v1447, %v1448
    %v1450 = vtanh.pop %v1449
    %v1451 = vmul.f32 %v1443, %v1450
    %v1452 = vpack.c.bf16 %v1451, %v1451
    %1453 = vst [vmem:[#allocation2 + $0x4] sm:$0x8] %v1452
    %1454 = vst [vmem:[%s11 - $0x6] sm:$0xc0] %v1451
    %1455 = vst [vmem:[%s12 - $0x6] sm:$0xc0] %v1449
    %v1456 = vld [vmem:[#allocation2] sm:$0xf]
    %v1457 = vld [vmem:[#allocation2 + $0x4] sm:$0xf]
    %s1458 = scalar_lea.vmem [#allocation3], 256
    %v1459 = vld [vmem:[%s1458] sm:$0xff]
    %v1460 = vld [vmem:[%s1458 + $0x8] sm:$0xff]
    %v1461 = vld [vmem:[%s1458 + $0x10] sm:$0xff]
    %v1462 = vld [vmem:[%s1458 + $0x18] sm:$0xff]
    %v1463 = vld [vmem:[%s1458 + $0x20] sm:$0xff]
    %v1464 = vld [vmem:[%s1458 + $0x28] sm:$0xff]
    %v1465 = vld [vmem:[%s1458 + $0x30] sm:$0xff]
    %v1466 = vld [vmem:[%s1458 + $0x38] sm:$0xff]
    %v1467 = vld [vmem:[%s1458 + $0x40] sm:$0xff]
    %v1468 = vld [vmem:[%s1458 + $0x48] sm:$0xff]
    %v1469 = vld [vmem:[%s1458 + $0x50] sm:$0xff]
    %v1470 = vld [vmem:[%s1458 + $0x58] sm:$0xff]
    %v1471 = vld [vmem:[%s1458 + $0x60] sm:$0xff]
    %v1472 = vld [vmem:[%s1458 + $0x68] sm:$0xff]
    %v1473 = vld [vmem:[%s1458 + $0x70] sm:$0xff]
    %v1474 = vld [vmem:[%s1458 + $0x78] sm:$0xff]
    %v1475 = vld [vmem:[%s1458 + $0x80] sm:$0xff]
    %v1476 = vld [vmem:[%s1458 + $0x88] sm:$0xff]
    %v1477 = vld [vmem:[%s1458 + $0x90] sm:$0xff]
    %v1478 = vld [vmem:[%s1458 + $0x98] sm:$0xff]
    %v1479 = vld [vmem:[%s1458 + $0xa0] sm:$0xff]
    %v1480 = vld [vmem:[%s1458 + $0xa8] sm:$0xff]
    %v1481 = vld [vmem:[%s1458 + $0xb0] sm:$0xff]
    %v1482 = vld [vmem:[%s1458 + $0xb8] sm:$0xff]
    %v1483 = vld [vmem:[%s1458 + $0xc0] sm:$0xff]
    %v1484 = vld [vmem:[%s1458 + $0xc8] sm:$0xff]
    %v1485 = vld [vmem:[%s1458 + $0xd0] sm:$0xff]
    %v1486 = vld [vmem:[%s1458 + $0xd8] sm:$0xff]
    %v1487 = vld [vmem:[%s1458 + $0xe0] sm:$0xff]
    %v1488 = vld [vmem:[%s1458 + $0xe8] sm:$0xff]
    %v1489 = vld [vmem:[%s1458 + $0xf0] sm:$0xff]
    %v1490 = vld [vmem:[%s1458 + $0xf8] sm:$0xff]
    %s1491 = scalar_lea.vmem %s5, 4
    %v1492 = vld [vmem:[%s1491] sm:$0xf]
    %v1494 = vperm.slane %v1492, 0
    %v1495 = vperm.slane %v1492, 1
    %v1496 = vperm.slane %v1492, 2
    %v1497 = vperm.slane %v1492, 3
    %v1504 = vunpack.c.l.b16 %v1456
    %v1505 = vunpack.c.l.b16 %v1457
    %v1506 = vpack.c.b16 %v1505, %v1504
    %v1540 = vunpack.c.l.b16 %v1459
    %v1541 = vunpack.c.h.b16 %v1459
    %v1542 = vunpack.c.l.b16 %v1460
    %v1543 = vunpack.c.h.b16 %v1460
    %v1544 = vunpack.c.l.b16 %v1461
    %v1545 = vunpack.c.h.b16 %v1461
    %v1546 = vunpack.c.l.b16 %v1462
    %v1547 = vunpack.c.h.b16 %v1462
    %v1548 = vunpack.c.l.b16 %v1463
    %v1549 = vunpack.c.h.b16 %v1463
    %v1550 = vunpack.c.l.b16 %v1464
    %v1551 = vunpack.c.h.b16 %v1464
    %v1552 = vunpack.c.l.b16 %v1465
    %v1553 = vunpack.c.h.b16 %v1465
    %v1554 = vunpack.c.l.b16 %v1466
    %v1555 = vunpack.c.h.b16 %v1466
    %v1556 = vunpack.c.l.b16 %v1467
    %v1557 = vunpack.c.h.b16 %v1467
    %v1558 = vunpack.c.l.b16 %v1468
    %v1559 = vunpack.c.h.b16 %v1468
    %v1560 = vunpack.c.l.b16 %v1469
    %v1561 = vunpack.c.h.b16 %v1469
    %v1562 = vunpack.c.l.b16 %v1470
    %v1563 = vunpack.c.h.b16 %v1470
    %v1564 = vunpack.c.l.b16 %v1471
    %v1565 = vunpack.c.h.b16 %v1471
    %v1566 = vunpack.c.l.b16 %v1472
    %v1567 = vunpack.c.h.b16 %v1472
    %v1568 = vunpack.c.l.b16 %v1473
    %v1569 = vunpack.c.h.b16 %v1473
    %v1570 = vunpack.c.l.b16 %v1474
    %v1571 = vunpack.c.h.b16 %v1474
    %v1572 = vunpack.c.l.b16 %v1475
    %v1573 = vunpack.c.h.b16 %v1475
    %v1574 = vunpack.c.l.b16 %v1476
    %v1575 = vunpack.c.h.b16 %v1476
    %v1576 = vunpack.c.l.b16 %v1477
    %v1577 = vunpack.c.h.b16 %v1477
    %v1578 = vunpack.c.l.b16 %v1478
    %v1579 = vunpack.c.h.b16 %v1478
    %v1580 = vunpack.c.l.b16 %v1479
    %v1581 = vunpack.c.h.b16 %v1479
    %v1582 = vunpack.c.l.b16 %v1480
    %v1583 = vunpack.c.h.b16 %v1480
    %v1584 = vunpack.c.l.b16 %v1481
    %v1585 = vunpack.c.h.b16 %v1481
    %v1586 = vunpack.c.l.b16 %v1482
    %v1587 = vunpack.c.h.b16 %v1482
    %v1588 = vunpack.c.l.b16 %v1483
    %v1589 = vunpack.c.h.b16 %v1483
    %v1590 = vunpack.c.l.b16 %v1484
    %v1591 = vunpack.c.h.b16 %v1484
    %v1592 = vunpack.c.l.b16 %v1485
    %v1593 = vunpack.c.h.b16 %v1485
    %v1594 = vunpack.c.l.b16 %v1486
    %v1595 = vunpack.c.h.b16 %v1486
    %v1596 = vunpack.c.l.b16 %v1487
    %v1597 = vunpack.c.h.b16 %v1487
    %v1598 = vunpack.c.l.b16 %v1488
    %v1599 = vunpack.c.h.b16 %v1488
    %v1600 = vunpack.c.l.b16 %v1489
    %v1601 = vunpack.c.h.b16 %v1489
    %v1602 = vunpack.c.l.b16 %v1490
    %v1603 = vunpack.c.h.b16 %v1490
    %v1604 = vpack.c.b16 %v1544, %v1540
    %v1605 = vpack.c.b16 %v1545, %v1541
    %v1606 = vpack.c.b16 %v1546, %v1542
    %v1607 = vpack.c.b16 %v1547, %v1543
    %v1608 = vpack.c.b16 %v1552, %v1548
    %v1609 = vpack.c.b16 %v1553, %v1549
    %v1610 = vpack.c.b16 %v1554, %v1550
    %v1611 = vpack.c.b16 %v1555, %v1551
    %v1612 = vpack.c.b16 %v1560, %v1556
    %v1613 = vpack.c.b16 %v1561, %v1557
    %v1614 = vpack.c.b16 %v1562, %v1558
    %v1615 = vpack.c.b16 %v1563, %v1559
    %v1616 = vpack.c.b16 %v1568, %v1564
    %v1617 = vpack.c.b16 %v1569, %v1565
    %v1618 = vpack.c.b16 %v1570, %v1566
    %v1619 = vpack.c.b16 %v1571, %v1567
    %v1620 = vpack.c.b16 %v1576, %v1572
    %v1621 = vpack.c.b16 %v1577, %v1573
    %v1622 = vpack.c.b16 %v1578, %v1574
    %v1623 = vpack.c.b16 %v1579, %v1575
    %v1624 = vpack.c.b16 %v1584, %v1580
    %v1625 = vpack.c.b16 %v1585, %v1581
    %v1626 = vpack.c.b16 %v1586, %v1582
    %v1627 = vpack.c.b16 %v1587, %v1583
    %v1628 = vpack.c.b16 %v1592, %v1588
    %v1629 = vpack.c.b16 %v1593, %v1589
    %v1630 = vpack.c.b16 %v1594, %v1590
    %v1631 = vpack.c.b16 %v1595, %v1591
    %v1632 = vpack.c.b16 %v1600, %v1596
    %v1633 = vpack.c.b16 %v1601, %v1597
    %v1634 = vpack.c.b16 %v1602, %v1598
    %v1635 = vpack.c.b16 %v1603, %v1599
    %1668 = vmatpush.bf16.msra.mxu0 %v1632
    %1669 = vmatpush.bf16.msra.mxu0 %v1628
    %1670 = vmatpush.bf16.msra.mxu0 %v1624
    %1671 = vmatpush.bf16.msra.mxu0 %v1620
    %1672 = vmatpush.bf16.msra.mxu0 %v1616
    %1673 = vmatpush.bf16.msra.mxu0 %v1612
    %1674 = vmatpush.bf16.msra.mxu0 %v1608
    %1675 = vmatpush.bf16.msra.mxu0 %v1604
    %1676 = vmatmul.bf16.gmra.mxu0 %v1506
    %v1677 = vpop.f32.mrf.mxu0
    %v1678 = vadd.f32 %v1494, %v1677
    %v1679 = vpop.f32.mrf.mxu0
    %v1680 = vadd.f32 %v1494, %v1679
    %1681 = vdwg.mxu0
    %1682 = vmatpush.bf16.msra.mxu0 %v1633
    %1683 = vmatpush.bf16.msra.mxu0 %v1629
    %1684 = vmatpush.bf16.msra.mxu0 %v1625
    %1685 = vmatpush.bf16.msra.mxu0 %v1621
    %1686 = vmatpush.bf16.msra.mxu0 %v1617
    %1687 = vmatpush.bf16.msra.mxu0 %v1613
    %1688 = vmatpush.bf16.msra.mxu0 %v1609
    %1689 = vmatpush.bf16.msra.mxu0 %v1605
    %1690 = vmatmul.bf16.gmra.mxu0 %v1506
    %v1691 = vpop.f32.mrf.mxu0
    %v1692 = vadd.f32 %v1495, %v1691
    %v1693 = vpop.f32.mrf.mxu0
    %v1694 = vadd.f32 %v1495, %v1693
    %1695 = vdwg.mxu0
    %1696 = vmatpush.bf16.msra.mxu0 %v1634
    %1697 = vmatpush.bf16.msra.mxu0 %v1630
    %1698 = vmatpush.bf16.msra.mxu0 %v1626
    %1699 = vmatpush.bf16.msra.mxu0 %v1622
    %1700 = vmatpush.bf16.msra.mxu0 %v1618
    %1701 = vmatpush.bf16.msra.mxu0 %v1614
    %1702 = vmatpush.bf16.msra.mxu0 %v1610
    %1703 = vmatpush.bf16.msra.mxu0 %v1606
    %1704 = vmatmul.bf16.gmra.mxu0 %v1506
    %v1705 = vpop.f32.mrf.mxu0
    %v1706 = vadd.f32 %v1496, %v1705
    %v1707 = vpop.f32.mrf.mxu0
    %v1708 = vadd.f32 %v1496, %v1707
    %1709 = vdwg.mxu0
    %1710 = vmatpush.bf16.msra.mxu0 %v1635
    %1711 = vmatpush.bf16.msra.mxu0 %v1631
    %1712 = vmatpush.bf16.msra.mxu0 %v1627
    %1713 = vmatpush.bf16.msra.mxu0 %v1623
    %1714 = vmatpush.bf16.msra.mxu0 %v1619
    %1715 = vmatpush.bf16.msra.mxu0 %v1615
    %1716 = vmatpush.bf16.msra.mxu0 %v1611
    %1717 = vmatpush.bf16.msra.mxu0 %v1607
    %1718 = vmatmul.bf16.gmra.mxu0 %v1506
    %v1719 = vpop.f32.mrf.mxu0
    %v1720 = vadd.f32 %v1497, %v1719
    %v1721 = vpop.f32.mrf.mxu0
    %v1722 = vadd.f32 %v1497, %v1721
    %1723 = vdwg.mxu0
    %s1724 = scalar_lea.vmem [#allocation6], 256
    %v1725 = vld [vmem:[%s1724] sm:$0xff]
    %v1726 = vld [vmem:[%s1724 + $0x8] sm:$0xff]
    %v1727 = vld [vmem:[%s1724 + $0x10] sm:$0xff]
    %v1728 = vld [vmem:[%s1724 + $0x18] sm:$0xff]
    %v1729 = vld [vmem:[%s1724 + $0x20] sm:$0xff]
    %v1730 = vld [vmem:[%s1724 + $0x28] sm:$0xff]
    %v1731 = vld [vmem:[%s1724 + $0x30] sm:$0xff]
    %v1732 = vld [vmem:[%s1724 + $0x38] sm:$0xff]
    %v1733 = vld [vmem:[%s1724 + $0x40] sm:$0xff]
    %v1734 = vld [vmem:[%s1724 + $0x48] sm:$0xff]
    %v1735 = vld [vmem:[%s1724 + $0x50] sm:$0xff]
    %v1736 = vld [vmem:[%s1724 + $0x58] sm:$0xff]
    %v1737 = vld [vmem:[%s1724 + $0x60] sm:$0xff]
    %v1738 = vld [vmem:[%s1724 + $0x68] sm:$0xff]
    %v1739 = vld [vmem:[%s1724 + $0x70] sm:$0xff]
    %v1740 = vld [vmem:[%s1724 + $0x78] sm:$0xff]
    %v1741 = vld [vmem:[%s1724 + $0x80] sm:$0xff]
    %v1742 = vld [vmem:[%s1724 + $0x88] sm:$0xff]
    %v1743 = vld [vmem:[%s1724 + $0x90] sm:$0xff]
    %v1744 = vld [vmem:[%s1724 + $0x98] sm:$0xff]
    %v1745 = vld [vmem:[%s1724 + $0xa0] sm:$0xff]
    %v1746 = vld [vmem:[%s1724 + $0xa8] sm:$0xff]
    %v1747 = vld [vmem:[%s1724 + $0xb0] sm:$0xff]
    %v1748 = vld [vmem:[%s1724 + $0xb8] sm:$0xff]
    %v1749 = vld [vmem:[%s1724 + $0xc0] sm:$0xff]
    %v1750 = vld [vmem:[%s1724 + $0xc8] sm:$0xff]
    %v1751 = vld [vmem:[%s1724 + $0xd0] sm:$0xff]
    %v1752 = vld [vmem:[%s1724 + $0xd8] sm:$0xff]
    %v1753 = vld [vmem:[%s1724 + $0xe0] sm:$0xff]
    %v1754 = vld [vmem:[%s1724 + $0xe8] sm:$0xff]
    %v1755 = vld [vmem:[%s1724 + $0xf0] sm:$0xff]
    %v1756 = vld [vmem:[%s1724 + $0xf8] sm:$0xff]
    %s1757 = scalar_lea.vmem %s8, 2
    %v1758 = vld [vmem:[%s1757] sm:$0x3]
    %s1759 = scalar_lea.vmem %s9, 2
    %v1760 = vld [vmem:[%s1759] sm:$0x3]
    %v1761 = vpack.c.bf16 %v1758, %v1758
    %v1794 = vunpack.c.l.b16 %v1725
    %v1795 = vunpack.c.h.b16 %v1725
    %v1796 = vunpack.c.l.b16 %v1726
    %v1797 = vunpack.c.h.b16 %v1726
    %v1798 = vunpack.c.l.b16 %v1727
    %v1799 = vunpack.c.h.b16 %v1727
    %v1800 = vunpack.c.l.b16 %v1728
    %v1801 = vunpack.c.h.b16 %v1728
    %v1802 = vunpack.c.l.b16 %v1729
    %v1803 = vunpack.c.h.b16 %v1729
    %v1804 = vunpack.c.l.b16 %v1730
    %v1805 = vunpack.c.h.b16 %v1730
    %v1806 = vunpack.c.l.b16 %v1731
    %v1807 = vunpack.c.h.b16 %v1731
    %v1808 = vunpack.c.l.b16 %v1732
    %v1809 = vunpack.c.h.b16 %v1732
    %v1810 = vunpack.c.l.b16 %v1733
    %v1811 = vunpack.c.h.b16 %v1733
    %v1812 = vunpack.c.l.b16 %v1734
    %v1813 = vunpack.c.h.b16 %v1734
    %v1814 = vunpack.c.l.b16 %v1735
    %v1815 = vunpack.c.h.b16 %v1735
    %v1816 = vunpack.c.l.b16 %v1736
    %v1817 = vunpack.c.h.b16 %v1736
    %v1818 = vunpack.c.l.b16 %v1737
    %v1819 = vunpack.c.h.b16 %v1737
    %v1820 = vunpack.c.l.b16 %v1738
    %v1821 = vunpack.c.h.b16 %v1738
    %v1822 = vunpack.c.l.b16 %v1739
    %v1823 = vunpack.c.h.b16 %v1739
    %v1824 = vunpack.c.l.b16 %v1740
    %v1825 = vunpack.c.h.b16 %v1740
    %v1826 = vunpack.c.l.b16 %v1741
    %v1827 = vunpack.c.h.b16 %v1741
    %v1828 = vunpack.c.l.b16 %v1742
    %v1829 = vunpack.c.h.b16 %v1742
    %v1830 = vunpack.c.l.b16 %v1743
    %v1831 = vunpack.c.h.b16 %v1743
    %v1832 = vunpack.c.l.b16 %v1744
    %v1833 = vunpack.c.h.b16 %v1744
    %v1834 = vunpack.c.l.b16 %v1745
    %v1835 = vunpack.c.h.b16 %v1745
    %v1836 = vunpack.c.l.b16 %v1746
    %v1837 = vunpack.c.h.b16 %v1746
    %v1838 = vunpack.c.l.b16 %v1747
    %v1839 = vunpack.c.h.b16 %v1747
    %v1840 = vunpack.c.l.b16 %v1748
    %v1841 = vunpack.c.h.b16 %v1748
    %v1842 = vunpack.c.l.b16 %v1749
    %v1843 = vunpack.c.h.b16 %v1749
    %v1844 = vunpack.c.l.b16 %v1750
    %v1845 = vunpack.c.h.b16 %v1750
    %v1846 = vunpack.c.l.b16 %v1751
    %v1847 = vunpack.c.h.b16 %v1751
    %v1848 = vunpack.c.l.b16 %v1752
    %v1849 = vunpack.c.h.b16 %v1752
    %v1850 = vunpack.c.l.b16 %v1753
    %v1851 = vunpack.c.h.b16 %v1753
    %v1852 = vunpack.c.l.b16 %v1754
    %v1853 = vunpack.c.h.b16 %v1754
    %v1854 = vunpack.c.l.b16 %v1755
    %v1855 = vunpack.c.h.b16 %v1755
    %v1856 = vunpack.c.l.b16 %v1756
    %v1857 = vunpack.c.h.b16 %v1756
    %v1858 = vpack.c.b16 %v1798, %v1794
    %v1859 = vpack.c.b16 %v1799, %v1795
    %v1860 = vpack.c.b16 %v1800, %v1796
    %v1861 = vpack.c.b16 %v1801, %v1797
    %v1862 = vpack.c.b16 %v1806, %v1802
    %v1863 = vpack.c.b16 %v1807, %v1803
    %v1864 = vpack.c.b16 %v1808, %v1804
    %v1865 = vpack.c.b16 %v1809, %v1805
    %v1866 = vpack.c.b16 %v1814, %v1810
    %v1867 = vpack.c.b16 %v1815, %v1811
    %v1868 = vpack.c.b16 %v1816, %v1812
    %v1869 = vpack.c.b16 %v1817, %v1813
    %v1870 = vpack.c.b16 %v1822, %v1818
    %v1871 = vpack.c.b16 %v1823, %v1819
    %v1872 = vpack.c.b16 %v1824, %v1820
    %v1873 = vpack.c.b16 %v1825, %v1821
    %v1874 = vpack.c.b16 %v1830, %v1826
    %v1875 = vpack.c.b16 %v1831, %v1827
    %v1876 = vpack.c.b16 %v1832, %v1828
    %v1877 = vpack.c.b16 %v1833, %v1829
    %v1878 = vpack.c.b16 %v1838, %v1834
    %v1879 = vpack.c.b16 %v1839, %v1835
    %v1880 = vpack.c.b16 %v1840, %v1836
    %v1881 = vpack.c.b16 %v1841, %v1837
    %v1882 = vpack.c.b16 %v1846, %v1842
    %v1883 = vpack.c.b16 %v1847, %v1843
    %v1884 = vpack.c.b16 %v1848, %v1844
    %v1885 = vpack.c.b16 %v1849, %v1845
    %v1886 = vpack.c.b16 %v1854, %v1850
    %v1887 = vpack.c.b16 %v1855, %v1851
    %v1888 = vpack.c.b16 %v1856, %v1852
    %v1889 = vpack.c.b16 %v1857, %v1853
    %1922 = vmatpush.bf16.msra.mxu0 %v1886
    %1923 = vmatpush.bf16.msra.mxu0 %v1882
    %1924 = vmatpush.bf16.msra.mxu0 %v1878
    %1925 = vmatpush.bf16.msra.mxu0 %v1874
    %1926 = vmatpush.bf16.msra.mxu0 %v1870
    %1927 = vmatpush.bf16.msra.mxu0 %v1866
    %1928 = vmatpush.bf16.msra.mxu0 %v1862
    %1929 = vmatpush.bf16.msra.mxu0 %v1858
    %1930 = vmatmul.bf16.gmra.mxu0 %v1761
    %v1931 = vpop.f32.mrf.mxu0
    %v1932 = vadd.f32 0.0, %v1931
    %v1933 = vpop.f32.mrf.mxu0
    %1934 = vdwg.mxu0
    %1935 = vmatpush.bf16.msra.mxu0 %v1887
    %1936 = vmatpush.bf16.msra.mxu0 %v1883
    %1937 = vmatpush.bf16.msra.mxu0 %v1879
    %1938 = vmatpush.bf16.msra.mxu0 %v1875
    %1939 = vmatpush.bf16.msra.mxu0 %v1871
    %1940 = vmatpush.bf16.msra.mxu0 %v1867
    %1941 = vmatpush.bf16.msra.mxu0 %v1863
    %1942 = vmatpush.bf16.msra.mxu0 %v1859
    %1943 = vmatmul.bf16.gmra.mxu0 %v1761
    %v1944 = vpop.f32.mrf.mxu0
    %v1945 = vadd.f32 0.0, %v1944
    %v1946 = vpop.f32.mrf.mxu0
    %1947 = vdwg.mxu0
    %1948 = vmatpush.bf16.msra.mxu0 %v1888
    %1949 = vmatpush.bf16.msra.mxu0 %v1884
    %1950 = vmatpush.bf16.msra.mxu0 %v1880
    %1951 = vmatpush.bf16.msra.mxu0 %v1876
    %1952 = vmatpush.bf16.msra.mxu0 %v1872
    %1953 = vmatpush.bf16.msra.mxu0 %v1868
    %1954 = vmatpush.bf16.msra.mxu0 %v1864
    %1955 = vmatpush.bf16.msra.mxu0 %v1860
    %1956 = vmatmul.bf16.gmra.mxu0 %v1761
    %v1957 = vpop.f32.mrf.mxu0
    %v1958 = vadd.f32 0.0, %v1957
    %v1959 = vpop.f32.mrf.mxu0
    %1960 = vdwg.mxu0
    %1961 = vmatpush.bf16.msra.mxu0 %v1889
    %1962 = vmatpush.bf16.msra.mxu0 %v1885
    %1963 = vmatpush.bf16.msra.mxu0 %v1881
    %1964 = vmatpush.bf16.msra.mxu0 %v1877
    %1965 = vmatpush.bf16.msra.mxu0 %v1873
    %1966 = vmatpush.bf16.msra.mxu0 %v1869
    %1967 = vmatpush.bf16.msra.mxu0 %v1865
    %1968 = vmatpush.bf16.msra.mxu0 %v1861
    %1969 = vmatmul.bf16.gmra.mxu0 %v1761
    %v1970 = vpop.f32.mrf.mxu0
    %v1971 = vadd.f32 0.0, %v1970
    %v1972 = vpop.f32.mrf.mxu0
    %1973 = vdwg.mxu0
    %v1974 = vadd.f32 %v1678, %v1932
    %v1975 = vadd.f32 %v1692, %v1945
    %v1976 = vadd.f32 %v1706, %v1958
    %v1977 = vadd.f32 %v1720, %v1971
    %v1978 = vxor.u32 %v1974, 2147483648
    %v1979 = vmul.f32 %v1978, 1.442695
    %v1980 = vpow.pop %v1979
    %v1981 = vadd.f32 %v1980, 1.0
    %v1982 = vrcp.pop %v1981
    %v1983 = vmul.f32 %v1981, %v1982
    %v1984 = vsub.f32 1.0, %v1983
    %v1985 = vmul.f32 %v1982, %v1984
    %v1986 = vadd.f32 %v1982, %v1985
    %vm1987 = vweird.f32 %v1981
    %vm1988 = vweird.f32 %v1982
    %vm1989 = vmor %vm1987, %vm1988
    %v1990 = vsel %vm1989, %v1982, %v1986
    %v1991 = vand.u32 2147483647, %v1981
    %vm1992 = vcmp.eq.f32.partialorder %v1991, 8.507059e+37
    %v1993 = vand.u32 %v1981, 2147483648
    %v1994 = vor.u32 1.1754944e-38, %v1993
    %v1995 = vsel %vm1992, %v1994, %v1990
    %v1996 = vmul.f32 1.0, %v1995
    %v1997 = vxor.u32 %v1975, 2147483648
    %v1998 = vmul.f32 %v1997, 1.442695
    %v1999 = vpow.pop %v1998
    %v2000 = vadd.f32 %v1999, 1.0
    %v2001 = vrcp.pop %v2000
    %v2002 = vmul.f32 %v2000, %v2001
    %v2003 = vsub.f32 1.0, %v2002
    %v2004 = vmul.f32 %v2001, %v2003
    %v2005 = vadd.f32 %v2001, %v2004
    %vm2006 = vweird.f32 %v2000
    %vm2007 = vweird.f32 %v2001
    %vm2008 = vmor %vm2006, %vm2007
    %v2009 = vsel %vm2008, %v2001, %v2005
    %v2010 = vand.u32 2147483647, %v2000
    %vm2011 = vcmp.eq.f32.partialorder %v2010, 8.507059e+37
    %v2012 = vand.u32 %v2000, 2147483648
    %v2013 = vor.u32 1.1754944e-38, %v2012
    %v2014 = vsel %vm2011, %v2013, %v2009
    %v2015 = vmul.f32 1.0, %v2014
    %v2016 = vtanh.pop %v1976
    %v2017 = vxor.u32 %v1977, 2147483648
    %v2018 = vmul.f32 %v2017, 1.442695
    %v2019 = vpow.pop %v2018
    %v2020 = vadd.f32 %v2019, 1.0
    %v2021 = vrcp.pop %v2020
    %v2022 = vmul.f32 %v2020, %v2021
    %v2023 = vsub.f32 1.0, %v2022
    %v2024 = vmul.f32 %v2021, %v2023
    %v2025 = vadd.f32 %v2021, %v2024
    %vm2026 = vweird.f32 %v2020
    %vm2027 = vweird.f32 %v2021
    %vm2028 = vmor %vm2026, %vm2027
    %v2029 = vsel %vm2028, %v2021, %v2025
    %v2030 = vand.u32 2147483647, %v2020
    %vm2031 = vcmp.eq.f32.partialorder %v2030, 8.507059e+37
    %v2032 = vand.u32 %v2020, 2147483648
    %v2033 = vor.u32 1.1754944e-38, %v2032
    %v2034 = vsel %vm2031, %v2033, %v2029
    %v2035 = vmul.f32 1.0, %v2034
    %v2036 = vmul.f32 %v2015, %v1760
    %v2037 = vmul.f32 %v1996, %v2016
    %v2038 = vadd.f32 %v2036, %v2037
    %v2039 = vtanh.pop %v2038
    %v2040 = vmul.f32 %v2035, %v2039
    %v2041 = vpack.c.bf16 %v2040, %v2040
    %2042 = vmatpush.bf16.msra.mxu0 %v1886
    %2043 = vmatpush.bf16.msra.mxu0 %v1882
    %2044 = vmatpush.bf16.msra.mxu0 %v1878
    %2045 = vmatpush.bf16.msra.mxu0 %v1874
    %2046 = vmatpush.bf16.msra.mxu0 %v1870
    %2047 = vmatpush.bf16.msra.mxu0 %v1866
    %2048 = vmatpush.bf16.msra.mxu0 %v1862
    %2049 = vmatpush.bf16.msra.mxu0 %v1858
    %2050 = vmatmul.bf16.gmra.mxu0 %v2041
    %v2051 = vpop.f32.mrf.mxu0
    %v2052 = vadd.f32 0.0, %v2051
    %v2053 = vpop.f32.mrf.mxu0
    %2054 = vdwg.mxu0
    %2055 = vmatpush.bf16.msra.mxu0 %v1887
    %2056 = vmatpush.bf16.msra.mxu0 %v1883
    %2057 = vmatpush.bf16.msra.mxu0 %v1879
    %2058 = vmatpush.bf16.msra.mxu0 %v1875
    %2059 = vmatpush.bf16.msra.mxu0 %v1871
    %2060 = vmatpush.bf16.msra.mxu0 %v1867
    %2061 = vmatpush.bf16.msra.mxu0 %v1863
    %2062 = vmatpush.bf16.msra.mxu0 %v1859
    %2063 = vmatmul.bf16.gmra.mxu0 %v2041
    %v2064 = vpop.f32.mrf.mxu0
    %v2065 = vadd.f32 0.0, %v2064
    %v2066 = vpop.f32.mrf.mxu0
    %2067 = vdwg.mxu0
    %2068 = vmatpush.bf16.msra.mxu0 %v1888
    %2069 = vmatpush.bf16.msra.mxu0 %v1884
    %2070 = vmatpush.bf16.msra.mxu0 %v1880
    %2071 = vmatpush.bf16.msra.mxu0 %v1876
    %2072 = vmatpush.bf16.msra.mxu0 %v1872
    %2073 = vmatpush.bf16.msra.mxu0 %v1868
    %2074 = vmatpush.bf16.msra.mxu0 %v1864
    %2075 = vmatpush.bf16.msra.mxu0 %v1860
    %2076 = vmatmul.bf16.gmra.mxu0 %v2041
    %v2077 = vpop.f32.mrf.mxu0
    %v2078 = vadd.f32 0.0, %v2077
    %v2079 = vpop.f32.mrf.mxu0
    %2080 = vdwg.mxu0
    %2081 = vmatpush.bf16.msra.mxu0 %v1889
    %2082 = vmatpush.bf16.msra.mxu0 %v1885
    %2083 = vmatpush.bf16.msra.mxu0 %v1881
    %2084 = vmatpush.bf16.msra.mxu0 %v1877
    %2085 = vmatpush.bf16.msra.mxu0 %v1873
    %2086 = vmatpush.bf16.msra.mxu0 %v1869
    %2087 = vmatpush.bf16.msra.mxu0 %v1865
    %2088 = vmatpush.bf16.msra.mxu0 %v1861
    %2089 = vmatmul.bf16.gmra.mxu0 %v2041
    %v2090 = vpop.f32.mrf.mxu0
    %v2091 = vadd.f32 0.0, %v2090
    %v2092 = vpop.f32.mrf.mxu0
    %2093 = vdwg.mxu0
    %v2098 = vrot.slane %v2052, 6
    %v2099 = vrot.slane %v2065, 6
    %v2100 = vrot.slane %v2078, 6
    %v2101 = vrot.slane %v2091, 6
    %v2106 = vadd.f32 %v1678, %v2098
    %v2107 = vadd.f32 %v1692, %v2099
    %v2108 = vadd.f32 %v1706, %v2100
    %v2109 = vadd.f32 %v1720, %v2101
    %v2110 = vxor.u32 %v2106, 2147483648
    %v2111 = vmul.f32 %v2110, 1.442695
    %v2112 = vpow.pop %v2111
    %v2113 = vadd.f32 %v2112, 1.0
    %v2114 = vrcp.pop %v2113
    %v2115 = vmul.f32 %v2113, %v2114
    %v2116 = vsub.f32 1.0, %v2115
    %v2117 = vmul.f32 %v2114, %v2116
    %v2118 = vadd.f32 %v2114, %v2117
    %vm2119 = vweird.f32 %v2113
    %vm2120 = vweird.f32 %v2114
    %vm2121 = vmor %vm2119, %vm2120
    %v2122 = vsel %vm2121, %v2114, %v2118
    %v2123 = vand.u32 2147483647, %v2113
    %vm2124 = vcmp.eq.f32.partialorder %v2123, 8.507059e+37
    %v2125 = vand.u32 %v2113, 2147483648
    %v2126 = vor.u32 1.1754944e-38, %v2125
    %v2127 = vsel %vm2124, %v2126, %v2122
    %v2128 = vmul.f32 1.0, %v2127
    %v2129 = vxor.u32 %v2107, 2147483648
    %v2130 = vmul.f32 %v2129, 1.442695
    %v2131 = vpow.pop %v2130
    %v2132 = vadd.f32 %v2131, 1.0
    %v2133 = vrcp.pop %v2132
    %v2134 = vmul.f32 %v2132, %v2133
    %v2135 = vsub.f32 1.0, %v2134
    %v2136 = vmul.f32 %v2133, %v2135
    %v2137 = vadd.f32 %v2133, %v2136
    %vm2138 = vweird.f32 %v2132
    %vm2139 = vweird.f32 %v2133
    %vm2140 = vmor %vm2138, %vm2139
    %v2141 = vsel %vm2140, %v2133, %v2137
    %v2142 = vand.u32 2147483647, %v2132
    %vm2143 = vcmp.eq.f32.partialorder %v2142, 8.507059e+37
    %v2144 = vand.u32 %v2132, 2147483648
    %v2145 = vor.u32 1.1754944e-38, %v2144
    %v2146 = vsel %vm2143, %v2145, %v2141
    %v2147 = vmul.f32 1.0, %v2146
    %v2148 = vtanh.pop %v2108
    %v2149 = vxor.u32 %v2109, 2147483648
    %v2150 = vmul.f32 %v2149, 1.442695
    %v2151 = vpow.pop %v2150
    %v2152 = vadd.f32 %v2151, 1.0
    %v2153 = vrcp.pop %v2152
    %v2154 = vmul.f32 %v2152, %v2153
    %v2155 = vsub.f32 1.0, %v2154
    %v2156 = vmul.f32 %v2153, %v2155
    %v2157 = vadd.f32 %v2153, %v2156
    %vm2158 = vweird.f32 %v2152
    %vm2159 = vweird.f32 %v2153
    %vm2160 = vmor %vm2158, %vm2159
    %v2161 = vsel %vm2160, %v2153, %v2157
    %v2162 = vand.u32 2147483647, %v2152
    %vm2163 = vcmp.eq.f32.partialorder %v2162, 8.507059e+37
    %v2164 = vand.u32 %v2152, 2147483648
    %v2165 = vor.u32 1.1754944e-38, %v2164
    %v2166 = vsel %vm2163, %v2165, %v2161
    %v2167 = vmul.f32 1.0, %v2166
    %v2169 = vrot.slane %v2038, 6
    %v2171 = vmul.f32 %v2147, %v2169
    %v2172 = vmul.f32 %v2128, %v2148
    %v2173 = vadd.f32 %v2171, %v2172
    %v2174 = vtanh.pop %v2173
    %v2175 = vmul.f32 %v2167, %v2174
    %v2176 = vpack.c.bf16 %v2175, %v2175
    %v2178 = vrot.slane %v2176, 1
    %2180 = vmatpush.bf16.msra.mxu0 %v1886
    %2181 = vmatpush.bf16.msra.mxu0 %v1882
    %2182 = vmatpush.bf16.msra.mxu0 %v1878
    %2183 = vmatpush.bf16.msra.mxu0 %v1874
    %2184 = vmatpush.bf16.msra.mxu0 %v1870
    %2185 = vmatpush.bf16.msra.mxu0 %v1866
    %2186 = vmatpush.bf16.msra.mxu0 %v1862
    %2187 = vmatpush.bf16.msra.mxu0 %v1858
    %2188 = vmatmul.bf16.gmra.mxu0 %v2178
    %v2189 = vpop.f32.mrf.mxu0
    %v2190 = vadd.f32 0.0, %v2189
    %v2191 = vpop.f32.mrf.mxu0
    %2192 = vdwg.mxu0
    %2193 = vmatpush.bf16.msra.mxu0 %v1887
    %2194 = vmatpush.bf16.msra.mxu0 %v1883
    %2195 = vmatpush.bf16.msra.mxu0 %v1879
    %2196 = vmatpush.bf16.msra.mxu0 %v1875
    %2197 = vmatpush.bf16.msra.mxu0 %v1871
    %2198 = vmatpush.bf16.msra.mxu0 %v1867
    %2199 = vmatpush.bf16.msra.mxu0 %v1863
    %2200 = vmatpush.bf16.msra.mxu0 %v1859
    %2201 = vmatmul.bf16.gmra.mxu0 %v2178
    %v2202 = vpop.f32.mrf.mxu0
    %v2203 = vadd.f32 0.0, %v2202
    %v2204 = vpop.f32.mrf.mxu0
    %2205 = vdwg.mxu0
    %2206 = vmatpush.bf16.msra.mxu0 %v1888
    %2207 = vmatpush.bf16.msra.mxu0 %v1884
    %2208 = vmatpush.bf16.msra.mxu0 %v1880
    %2209 = vmatpush.bf16.msra.mxu0 %v1876
    %2210 = vmatpush.bf16.msra.mxu0 %v1872
    %2211 = vmatpush.bf16.msra.mxu0 %v1868
    %2212 = vmatpush.bf16.msra.mxu0 %v1864
    %2213 = vmatpush.bf16.msra.mxu0 %v1860
    %2214 = vmatmul.bf16.gmra.mxu0 %v2178
    %v2215 = vpop.f32.mrf.mxu0
    %v2216 = vadd.f32 0.0, %v2215
    %v2217 = vpop.f32.mrf.mxu0
    %2218 = vdwg.mxu0
    %2219 = vmatpush.bf16.msra.mxu0 %v1889
    %2220 = vmatpush.bf16.msra.mxu0 %v1885
    %2221 = vmatpush.bf16.msra.mxu0 %v1881
    %2222 = vmatpush.bf16.msra.mxu0 %v1877
    %2223 = vmatpush.bf16.msra.mxu0 %v1873
    %2224 = vmatpush.bf16.msra.mxu0 %v1869
    %2225 = vmatpush.bf16.msra.mxu0 %v1865
    %2226 = vmatpush.bf16.msra.mxu0 %v1861
    %2227 = vmatmul.bf16.gmra.mxu0 %v2178
    %v2228 = vpop.f32.mrf.mxu0
    %v2229 = vadd.f32 0.0, %v2228
    %v2230 = vpop.f32.mrf.mxu0
    %2231 = vdwg.mxu0
    %v2236 = vrot.slane %v2190, 4
    %v2237 = vrot.slane %v2203, 4
    %v2238 = vrot.slane %v2216, 4
    %v2239 = vrot.slane %v2229, 4
    %v2244 = vadd.f32 %v1678, %v2236
    %v2245 = vadd.f32 %v1692, %v2237
    %v2246 = vadd.f32 %v1706, %v2238
    %v2247 = vadd.f32 %v1720, %v2239
    %v2248 = vxor.u32 %v2244, 2147483648
    %v2249 = vmul.f32 %v2248, 1.442695
    %v2250 = vpow.pop %v2249
    %v2251 = vadd.f32 %v2250, 1.0
    %v2252 = vrcp.pop %v2251
    %v2253 = vmul.f32 %v2251, %v2252
    %v2254 = vsub.f32 1.0, %v2253
    %v2255 = vmul.f32 %v2252, %v2254
    %v2256 = vadd.f32 %v2252, %v2255
    %vm2257 = vweird.f32 %v2251
    %vm2258 = vweird.f32 %v2252
    %vm2259 = vmor %vm2257, %vm2258
    %v2260 = vsel %vm2259, %v2252, %v2256
    %v2261 = vand.u32 2147483647, %v2251
    %vm2262 = vcmp.eq.f32.partialorder %v2261, 8.507059e+37
    %v2263 = vand.u32 %v2251, 2147483648
    %v2264 = vor.u32 1.1754944e-38, %v2263
    %v2265 = vsel %vm2262, %v2264, %v2260
    %v2266 = vmul.f32 1.0, %v2265
    %v2267 = vxor.u32 %v2245, 2147483648
    %v2268 = vmul.f32 %v2267, 1.442695
    %v2269 = vpow.pop %v2268
    %v2270 = vadd.f32 %v2269, 1.0
    %v2271 = vrcp.pop %v2270
    %v2272 = vmul.f32 %v2270, %v2271
    %v2273 = vsub.f32 1.0, %v2272
    %v2274 = vmul.f32 %v2271, %v2273
    %v2275 = vadd.f32 %v2271, %v2274
    %vm2276 = vweird.f32 %v2270
    %vm2277 = vweird.f32 %v2271
    %vm2278 = vmor %vm2276, %vm2277
    %v2279 = vsel %vm2278, %v2271, %v2275
    %v2280 = vand.u32 2147483647, %v2270
    %vm2281 = vcmp.eq.f32.partialorder %v2280, 8.507059e+37
    %v2282 = vand.u32 %v2270, 2147483648
    %v2283 = vor.u32 1.1754944e-38, %v2282
    %v2284 = vsel %vm2281, %v2283, %v2279
    %v2285 = vmul.f32 1.0, %v2284
    %v2286 = vtanh.pop %v2246
    %v2287 = vxor.u32 %v2247, 2147483648
    %v2288 = vmul.f32 %v2287, 1.442695
    %v2289 = vpow.pop %v2288
    %v2290 = vadd.f32 %v2289, 1.0
    %v2291 = vrcp.pop %v2290
    %v2292 = vmul.f32 %v2290, %v2291
    %v2293 = vsub.f32 1.0, %v2292
    %v2294 = vmul.f32 %v2291, %v2293
    %v2295 = vadd.f32 %v2291, %v2294
    %vm2296 = vweird.f32 %v2290
    %vm2297 = vweird.f32 %v2291
    %vm2298 = vmor %vm2296, %vm2297
    %v2299 = vsel %vm2298, %v2291, %v2295
    %v2300 = vand.u32 2147483647, %v2290
    %vm2301 = vcmp.eq.f32.partialorder %v2300, 8.507059e+37
    %v2302 = vand.u32 %v2290, 2147483648
    %v2303 = vor.u32 1.1754944e-38, %v2302
    %v2304 = vsel %vm2301, %v2303, %v2299
    %v2305 = vmul.f32 1.0, %v2304
    %v2307 = vrot.slane %v2173, 6
    %v2309 = vmul.f32 %v2285, %v2307
    %v2310 = vmul.f32 %v2266, %v2286
    %v2311 = vadd.f32 %v2309, %v2310
    %v2312 = vtanh.pop %v2311
    %v2313 = vmul.f32 %v2305, %v2312
    %v2314 = vpack.c.bf16 %v2313, %v2313
    %v2316 = vrot.slane %v2314, 2
    %2318 = vmatpush.bf16.msra.mxu0 %v1886
    %2319 = vmatpush.bf16.msra.mxu0 %v1882
    %2320 = vmatpush.bf16.msra.mxu0 %v1878
    %2321 = vmatpush.bf16.msra.mxu0 %v1874
    %2322 = vmatpush.bf16.msra.mxu0 %v1870
    %2323 = vmatpush.bf16.msra.mxu0 %v1866
    %2324 = vmatpush.bf16.msra.mxu0 %v1862
    %2325 = vmatpush.bf16.msra.mxu0 %v1858
    %2326 = vmatmul.bf16.gmra.mxu0 %v2316
    %v2327 = vpop.f32.mrf.mxu0
    %v2328 = vadd.f32 0.0, %v2327
    %v2329 = vpop.f32.mrf.mxu0
    %2330 = vdwg.mxu0
    %2331 = vmatpush.bf16.msra.mxu0 %v1887
    %2332 = vmatpush.bf16.msra.mxu0 %v1883
    %2333 = vmatpush.bf16.msra.mxu0 %v1879
    %2334 = vmatpush.bf16.msra.mxu0 %v1875
    %2335 = vmatpush.bf16.msra.mxu0 %v1871
    %2336 = vmatpush.bf16.msra.mxu0 %v1867
    %2337 = vmatpush.bf16.msra.mxu0 %v1863
    %2338 = vmatpush.bf16.msra.mxu0 %v1859
    %2339 = vmatmul.bf16.gmra.mxu0 %v2316
    %v2340 = vpop.f32.mrf.mxu0
    %v2341 = vadd.f32 0.0, %v2340
    %v2342 = vpop.f32.mrf.mxu0
    %2343 = vdwg.mxu0
    %2344 = vmatpush.bf16.msra.mxu0 %v1888
    %2345 = vmatpush.bf16.msra.mxu0 %v1884
    %2346 = vmatpush.bf16.msra.mxu0 %v1880
    %2347 = vmatpush.bf16.msra.mxu0 %v1876
    %2348 = vmatpush.bf16.msra.mxu0 %v1872
    %2349 = vmatpush.bf16.msra.mxu0 %v1868
    %2350 = vmatpush.bf16.msra.mxu0 %v1864
    %2351 = vmatpush.bf16.msra.mxu0 %v1860
    %2352 = vmatmul.bf16.gmra.mxu0 %v2316
    %v2353 = vpop.f32.mrf.mxu0
    %v2354 = vadd.f32 0.0, %v2353
    %v2355 = vpop.f32.mrf.mxu0
    %2356 = vdwg.mxu0
    %2357 = vmatpush.bf16.msra.mxu0 %v1889
    %2358 = vmatpush.bf16.msra.mxu0 %v1885
    %2359 = vmatpush.bf16.msra.mxu0 %v1881
    %2360 = vmatpush.bf16.msra.mxu0 %v1877
    %2361 = vmatpush.bf16.msra.mxu0 %v1873
    %2362 = vmatpush.bf16.msra.mxu0 %v1869
    %2363 = vmatpush.bf16.msra.mxu0 %v1865
    %2364 = vmatpush.bf16.msra.mxu0 %v1861
    %2365 = vmatmul.bf16.gmra.mxu0 %v2316
    %v2366 = vpop.f32.mrf.mxu0
    %v2367 = vadd.f32 0.0, %v2366
    %v2368 = vpop.f32.mrf.mxu0
    %2369 = vdwg.mxu0
    %v2374 = vrot.slane %v2328, 2
    %v2375 = vrot.slane %v2341, 2
    %v2376 = vrot.slane %v2354, 2
    %v2377 = vrot.slane %v2367, 2
    %v2382 = vadd.f32 %v1678, %v2374
    %v2383 = vadd.f32 %v1692, %v2375
    %v2384 = vadd.f32 %v1706, %v2376
    %v2385 = vadd.f32 %v1720, %v2377
    %v2386 = vxor.u32 %v2382, 2147483648
    %v2387 = vmul.f32 %v2386, 1.442695
    %v2388 = vpow.pop %v2387
    %v2389 = vadd.f32 %v2388, 1.0
    %v2390 = vrcp.pop %v2389
    %v2391 = vmul.f32 %v2389, %v2390
    %v2392 = vsub.f32 1.0, %v2391
    %v2393 = vmul.f32 %v2390, %v2392
    %v2394 = vadd.f32 %v2390, %v2393
    %vm2395 = vweird.f32 %v2389
    %vm2396 = vweird.f32 %v2390
    %vm2397 = vmor %vm2395, %vm2396
    %v2398 = vsel %vm2397, %v2390, %v2394
    %v2399 = vand.u32 2147483647, %v2389
    %vm2400 = vcmp.eq.f32.partialorder %v2399, 8.507059e+37
    %v2401 = vand.u32 %v2389, 2147483648
    %v2402 = vor.u32 1.1754944e-38, %v2401
    %v2403 = vsel %vm2400, %v2402, %v2398
    %v2404 = vmul.f32 1.0, %v2403
    %v2405 = vxor.u32 %v2383, 2147483648
    %v2406 = vmul.f32 %v2405, 1.442695
    %v2407 = vpow.pop %v2406
    %v2408 = vadd.f32 %v2407, 1.0
    %v2409 = vrcp.pop %v2408
    %v2410 = vmul.f32 %v2408, %v2409
    %v2411 = vsub.f32 1.0, %v2410
    %v2412 = vmul.f32 %v2409, %v2411
    %v2413 = vadd.f32 %v2409, %v2412
    %vm2414 = vweird.f32 %v2408
    %vm2415 = vweird.f32 %v2409
    %vm2416 = vmor %vm2414, %vm2415
    %v2417 = vsel %vm2416, %v2409, %v2413
    %v2418 = vand.u32 2147483647, %v2408
    %vm2419 = vcmp.eq.f32.partialorder %v2418, 8.507059e+37
    %v2420 = vand.u32 %v2408, 2147483648
    %v2421 = vor.u32 1.1754944e-38, %v2420
    %v2422 = vsel %vm2419, %v2421, %v2417
    %v2423 = vmul.f32 1.0, %v2422
    %v2424 = vtanh.pop %v2384
    %v2425 = vxor.u32 %v2385, 2147483648
    %v2426 = vmul.f32 %v2425, 1.442695
    %v2427 = vpow.pop %v2426
    %v2428 = vadd.f32 %v2427, 1.0
    %v2429 = vrcp.pop %v2428
    %v2430 = vmul.f32 %v2428, %v2429
    %v2431 = vsub.f32 1.0, %v2430
    %v2432 = vmul.f32 %v2429, %v2431
    %v2433 = vadd.f32 %v2429, %v2432
    %vm2434 = vweird.f32 %v2428
    %vm2435 = vweird.f32 %v2429
    %vm2436 = vmor %vm2434, %vm2435
    %v2437 = vsel %vm2436, %v2429, %v2433
    %v2438 = vand.u32 2147483647, %v2428
    %vm2439 = vcmp.eq.f32.partialorder %v2438, 8.507059e+37
    %v2440 = vand.u32 %v2428, 2147483648
    %v2441 = vor.u32 1.1754944e-38, %v2440
    %v2442 = vsel %vm2439, %v2441, %v2437
    %v2443 = vmul.f32 1.0, %v2442
    %v2445 = vrot.slane %v2311, 6
    %v2447 = vmul.f32 %v2423, %v2445
    %v2448 = vmul.f32 %v2404, %v2424
    %v2449 = vadd.f32 %v2447, %v2448
    %v2450 = vtanh.pop %v2449
    %v2451 = vmul.f32 %v2443, %v2450
    %v2452 = vpack.c.bf16 %v2451, %v2451
    %v2454 = vrot.slane %v2452, 3
    %2456 = vmatpush.bf16.msra.mxu0 %v1886
    %2457 = vmatpush.bf16.msra.mxu0 %v1882
    %2458 = vmatpush.bf16.msra.mxu0 %v1878
    %2459 = vmatpush.bf16.msra.mxu0 %v1874
    %2460 = vmatpush.bf16.msra.mxu0 %v1870
    %2461 = vmatpush.bf16.msra.mxu0 %v1866
    %2462 = vmatpush.bf16.msra.mxu0 %v1862
    %2463 = vmatpush.bf16.msra.mxu0 %v1858
    %2464 = vmatmul.bf16.gmra.mxu0 %v2454
    %v2465 = vpop.f32.mrf.mxu0
    %v2466 = vadd.f32 0.0, %v2465
    %v2467 = vpop.f32.mrf.mxu0
    %2468 = vdwg.mxu0
    %2469 = vmatpush.bf16.msra.mxu0 %v1887
    %2470 = vmatpush.bf16.msra.mxu0 %v1883
    %2471 = vmatpush.bf16.msra.mxu0 %v1879
    %2472 = vmatpush.bf16.msra.mxu0 %v1875
    %2473 = vmatpush.bf16.msra.mxu0 %v1871
    %2474 = vmatpush.bf16.msra.mxu0 %v1867
    %2475 = vmatpush.bf16.msra.mxu0 %v1863
    %2476 = vmatpush.bf16.msra.mxu0 %v1859
    %2477 = vmatmul.bf16.gmra.mxu0 %v2454
    %v2478 = vpop.f32.mrf.mxu0
    %v2479 = vadd.f32 0.0, %v2478
    %v2480 = vpop.f32.mrf.mxu0
    %2481 = vdwg.mxu0
    %2482 = vmatpush.bf16.msra.mxu0 %v1888
    %2483 = vmatpush.bf16.msra.mxu0 %v1884
    %2484 = vmatpush.bf16.msra.mxu0 %v1880
    %2485 = vmatpush.bf16.msra.mxu0 %v1876
    %2486 = vmatpush.bf16.msra.mxu0 %v1872
    %2487 = vmatpush.bf16.msra.mxu0 %v1868
    %2488 = vmatpush.bf16.msra.mxu0 %v1864
    %2489 = vmatpush.bf16.msra.mxu0 %v1860
    %2490 = vmatmul.bf16.gmra.mxu0 %v2454
    %v2491 = vpop.f32.mrf.mxu0
    %v2492 = vadd.f32 0.0, %v2491
    %v2493 = vpop.f32.mrf.mxu0
    %2494 = vdwg.mxu0
    %2495 = vmatpush.bf16.msra.mxu0 %v1889
    %2496 = vmatpush.bf16.msra.mxu0 %v1885
    %2497 = vmatpush.bf16.msra.mxu0 %v1881
    %2498 = vmatpush.bf16.msra.mxu0 %v1877
    %2499 = vmatpush.bf16.msra.mxu0 %v1873
    %2500 = vmatpush.bf16.msra.mxu0 %v1869
    %2501 = vmatpush.bf16.msra.mxu0 %v1865
    %2502 = vmatpush.bf16.msra.mxu0 %v1861
    %2503 = vmatmul.bf16.gmra.mxu0 %v2454
    %v2504 = vpop.f32.mrf.mxu0
    %v2505 = vadd.f32 0.0, %v2504
    %v2506 = vpop.f32.mrf.mxu0
    %2507 = vdwg.mxu0
    %v2508 = vadd.f32 %v1680, %v2466
    %v2509 = vadd.f32 %v1694, %v2479
    %v2510 = vadd.f32 %v1708, %v2492
    %v2511 = vadd.f32 %v1722, %v2505
    %v2512 = vxor.u32 %v2508, 2147483648
    %v2513 = vmul.f32 %v2512, 1.442695
    %v2514 = vpow.pop %v2513
    %v2515 = vadd.f32 %v2514, 1.0
    %v2516 = vrcp.pop %v2515
    %v2517 = vmul.f32 %v2515, %v2516
    %v2518 = vsub.f32 1.0, %v2517
    %v2519 = vmul.f32 %v2516, %v2518
    %v2520 = vadd.f32 %v2516, %v2519
    %vm2521 = vweird.f32 %v2515
    %vm2522 = vweird.f32 %v2516
    %vm2523 = vmor %vm2521, %vm2522
    %v2524 = vsel %vm2523, %v2516, %v2520
    %v2525 = vand.u32 2147483647, %v2515
    %vm2526 = vcmp.eq.f32.partialorder %v2525, 8.507059e+37
    %v2527 = vand.u32 %v2515, 2147483648
    %v2528 = vor.u32 1.1754944e-38, %v2527
    %v2529 = vsel %vm2526, %v2528, %v2524
    %v2530 = vmul.f32 1.0, %v2529
    %v2531 = vxor.u32 %v2509, 2147483648
    %v2532 = vmul.f32 %v2531, 1.442695
    %v2533 = vpow.pop %v2532
    %v2534 = vadd.f32 %v2533, 1.0
    %v2535 = vrcp.pop %v2534
    %v2536 = vmul.f32 %v2534, %v2535
    %v2537 = vsub.f32 1.0, %v2536
    %v2538 = vmul.f32 %v2535, %v2537
    %v2539 = vadd.f32 %v2535, %v2538
    %vm2540 = vweird.f32 %v2534
    %vm2541 = vweird.f32 %v2535
    %vm2542 = vmor %vm2540, %vm2541
    %v2543 = vsel %vm2542, %v2535, %v2539
    %v2544 = vand.u32 2147483647, %v2534
    %vm2545 = vcmp.eq.f32.partialorder %v2544, 8.507059e+37
    %v2546 = vand.u32 %v2534, 2147483648
    %v2547 = vor.u32 1.1754944e-38, %v2546
    %v2548 = vsel %vm2545, %v2547, %v2543
    %v2549 = vmul.f32 1.0, %v2548
    %v2550 = vtanh.pop %v2510
    %v2551 = vxor.u32 %v2511, 2147483648
    %v2552 = vmul.f32 %v2551, 1.442695
    %v2553 = vpow.pop %v2552
    %v2554 = vadd.f32 %v2553, 1.0
    %v2555 = vrcp.pop %v2554
    %v2556 = vmul.f32 %v2554, %v2555
    %v2557 = vsub.f32 1.0, %v2556
    %v2558 = vmul.f32 %v2555, %v2557
    %v2559 = vadd.f32 %v2555, %v2558
    %vm2560 = vweird.f32 %v2554
    %vm2561 = vweird.f32 %v2555
    %vm2562 = vmor %vm2560, %vm2561
    %v2563 = vsel %vm2562, %v2555, %v2559
    %v2564 = vand.u32 2147483647, %v2554
    %vm2565 = vcmp.eq.f32.partialorder %v2564, 8.507059e+37
    %v2566 = vand.u32 %v2554, 2147483648
    %v2567 = vor.u32 1.1754944e-38, %v2566
    %v2568 = vsel %vm2565, %v2567, %v2563
    %v2569 = vmul.f32 1.0, %v2568
    %v2571 = vrot.slane %v2449, 6
    %v2573 = vmul.f32 %v2549, %v2571
    %v2574 = vmul.f32 %v2530, %v2550
    %v2575 = vadd.f32 %v2573, %v2574
    %v2576 = vtanh.pop %v2575
    %v2577 = vmul.f32 %v2569, %v2576
    %v2578 = vpack.c.bf16 %v2577, %v2577
    %2579 = vmatpush.bf16.msra.mxu0 %v1886
    %2580 = vmatpush.bf16.msra.mxu0 %v1882
    %2581 = vmatpush.bf16.msra.mxu0 %v1878
    %2582 = vmatpush.bf16.msra.mxu0 %v1874
    %2583 = vmatpush.bf16.msra.mxu0 %v1870
    %2584 = vmatpush.bf16.msra.mxu0 %v1866
    %2585 = vmatpush.bf16.msra.mxu0 %v1862
    %2586 = vmatpush.bf16.msra.mxu0 %v1858
    %2587 = vmatmul.bf16.gmra.mxu0 %v2578
    %v2588 = vpop.f32.mrf.mxu0
    %v2589 = vadd.f32 0.0, %v2588
    %v2590 = vpop.f32.mrf.mxu0
    %2591 = vdwg.mxu0
    %2592 = vmatpush.bf16.msra.mxu0 %v1887
    %2593 = vmatpush.bf16.msra.mxu0 %v1883
    %2594 = vmatpush.bf16.msra.mxu0 %v1879
    %2595 = vmatpush.bf16.msra.mxu0 %v1875
    %2596 = vmatpush.bf16.msra.mxu0 %v1871
    %2597 = vmatpush.bf16.msra.mxu0 %v1867
    %2598 = vmatpush.bf16.msra.mxu0 %v1863
    %2599 = vmatpush.bf16.msra.mxu0 %v1859
    %2600 = vmatmul.bf16.gmra.mxu0 %v2578
    %v2601 = vpop.f32.mrf.mxu0
    %v2602 = vadd.f32 0.0, %v2601
    %v2603 = vpop.f32.mrf.mxu0
    %2604 = vdwg.mxu0
    %2605 = vmatpush.bf16.msra.mxu0 %v1888
    %2606 = vmatpush.bf16.msra.mxu0 %v1884
    %2607 = vmatpush.bf16.msra.mxu0 %v1880
    %2608 = vmatpush.bf16.msra.mxu0 %v1876
    %2609 = vmatpush.bf16.msra.mxu0 %v1872
    %2610 = vmatpush.bf16.msra.mxu0 %v1868
    %2611 = vmatpush.bf16.msra.mxu0 %v1864
    %2612 = vmatpush.bf16.msra.mxu0 %v1860
    %2613 = vmatmul.bf16.gmra.mxu0 %v2578
    %v2614 = vpop.f32.mrf.mxu0
    %v2615 = vadd.f32 0.0, %v2614
    %v2616 = vpop.f32.mrf.mxu0
    %2617 = vdwg.mxu0
    %2618 = vmatpush.bf16.msra.mxu0 %v1889
    %2619 = vmatpush.bf16.msra.mxu0 %v1885
    %2620 = vmatpush.bf16.msra.mxu0 %v1881
    %2621 = vmatpush.bf16.msra.mxu0 %v1877
    %2622 = vmatpush.bf16.msra.mxu0 %v1873
    %2623 = vmatpush.bf16.msra.mxu0 %v1869
    %2624 = vmatpush.bf16.msra.mxu0 %v1865
    %2625 = vmatpush.bf16.msra.mxu0 %v1861
    %2626 = vmatmul.bf16.gmra.mxu0 %v2578
    %v2627 = vpop.f32.mrf.mxu0
    %v2628 = vadd.f32 0.0, %v2627
    %v2629 = vpop.f32.mrf.mxu0
    %2630 = vdwg.mxu0
    %v2635 = vrot.slane %v2589, 6
    %v2636 = vrot.slane %v2602, 6
    %v2637 = vrot.slane %v2615, 6
    %v2638 = vrot.slane %v2628, 6
    %v2643 = vadd.f32 %v1680, %v2635
    %v2644 = vadd.f32 %v1694, %v2636
    %v2645 = vadd.f32 %v1708, %v2637
    %v2646 = vadd.f32 %v1722, %v2638
    %v2647 = vxor.u32 %v2643, 2147483648
    %v2648 = vmul.f32 %v2647, 1.442695
    %v2649 = vpow.pop %v2648
    %v2650 = vadd.f32 %v2649, 1.0
    %v2651 = vrcp.pop %v2650
    %v2652 = vmul.f32 %v2650, %v2651
    %v2653 = vsub.f32 1.0, %v2652
    %v2654 = vmul.f32 %v2651, %v2653
    %v2655 = vadd.f32 %v2651, %v2654
    %vm2656 = vweird.f32 %v2650
    %vm2657 = vweird.f32 %v2651
    %vm2658 = vmor %vm2656, %vm2657
    %v2659 = vsel %vm2658, %v2651, %v2655
    %v2660 = vand.u32 2147483647, %v2650
    %vm2661 = vcmp.eq.f32.partialorder %v2660, 8.507059e+37
    %v2662 = vand.u32 %v2650, 2147483648
    %v2663 = vor.u32 1.1754944e-38, %v2662
    %v2664 = vsel %vm2661, %v2663, %v2659
    %v2665 = vmul.f32 1.0, %v2664
    %v2666 = vxor.u32 %v2644, 2147483648
    %v2667 = vmul.f32 %v2666, 1.442695
    %v2668 = vpow.pop %v2667
    %v2669 = vadd.f32 %v2668, 1.0
    %v2670 = vrcp.pop %v2669
    %v2671 = vmul.f32 %v2669, %v2670
    %v2672 = vsub.f32 1.0, %v2671
    %v2673 = vmul.f32 %v2670, %v2672
    %v2674 = vadd.f32 %v2670, %v2673
    %vm2675 = vweird.f32 %v2669
    %vm2676 = vweird.f32 %v2670
    %vm2677 = vmor %vm2675, %vm2676
    %v2678 = vsel %vm2677, %v2670, %v2674
    %v2679 = vand.u32 2147483647, %v2669
    %vm2680 = vcmp.eq.f32.partialorder %v2679, 8.507059e+37
    %v2681 = vand.u32 %v2669, 2147483648
    %v2682 = vor.u32 1.1754944e-38, %v2681
    %v2683 = vsel %vm2680, %v2682, %v2678
    %v2684 = vmul.f32 1.0, %v2683
    %v2685 = vtanh.pop %v2645
    %v2686 = vxor.u32 %v2646, 2147483648
    %v2687 = vmul.f32 %v2686, 1.442695
    %v2688 = vpow.pop %v2687
    %v2689 = vadd.f32 %v2688, 1.0
    %v2690 = vrcp.pop %v2689
    %v2691 = vmul.f32 %v2689, %v2690
    %v2692 = vsub.f32 1.0, %v2691
    %v2693 = vmul.f32 %v2690, %v2692
    %v2694 = vadd.f32 %v2690, %v2693
    %vm2695 = vweird.f32 %v2689
    %vm2696 = vweird.f32 %v2690
    %vm2697 = vmor %vm2695, %vm2696
    %v2698 = vsel %vm2697, %v2690, %v2694
    %v2699 = vand.u32 2147483647, %v2689
    %vm2700 = vcmp.eq.f32.partialorder %v2699, 8.507059e+37
    %v2701 = vand.u32 %v2689, 2147483648
    %v2702 = vor.u32 1.1754944e-38, %v2701
    %v2703 = vsel %vm2700, %v2702, %v2698
    %v2704 = vmul.f32 1.0, %v2703
    %v2706 = vrot.slane %v2575, 6
    %v2708 = vmul.f32 %v2684, %v2706
    %v2709 = vmul.f32 %v2665, %v2685
    %v2710 = vadd.f32 %v2708, %v2709
    %v2711 = vtanh.pop %v2710
    %v2712 = vmul.f32 %v2704, %v2711
    %v2713 = vpack.c.bf16 %v2712, %v2712
    %v2715 = vrot.slane %v2713, 1
    %2717 = vmatpush.bf16.msra.mxu0 %v1886
    %2718 = vmatpush.bf16.msra.mxu0 %v1882
    %2719 = vmatpush.bf16.msra.mxu0 %v1878
    %2720 = vmatpush.bf16.msra.mxu0 %v1874
    %2721 = vmatpush.bf16.msra.mxu0 %v1870
    %2722 = vmatpush.bf16.msra.mxu0 %v1866
    %2723 = vmatpush.bf16.msra.mxu0 %v1862
    %2724 = vmatpush.bf16.msra.mxu0 %v1858
    %2725 = vmatmul.bf16.gmra.mxu0 %v2715
    %v2726 = vpop.f32.mrf.mxu0
    %v2727 = vadd.f32 0.0, %v2726
    %v2728 = vpop.f32.mrf.mxu0
    %2729 = vdwg.mxu0
    %2730 = vmatpush.bf16.msra.mxu0 %v1887
    %2731 = vmatpush.bf16.msra.mxu0 %v1883
    %2732 = vmatpush.bf16.msra.mxu0 %v1879
    %2733 = vmatpush.bf16.msra.mxu0 %v1875
    %2734 = vmatpush.bf16.msra.mxu0 %v1871
    %2735 = vmatpush.bf16.msra.mxu0 %v1867
    %2736 = vmatpush.bf16.msra.mxu0 %v1863
    %2737 = vmatpush.bf16.msra.mxu0 %v1859
    %2738 = vmatmul.bf16.gmra.mxu0 %v2715
    %v2739 = vpop.f32.mrf.mxu0
    %v2740 = vadd.f32 0.0, %v2739
    %v2741 = vpop.f32.mrf.mxu0
    %2742 = vdwg.mxu0
    %2743 = vmatpush.bf16.msra.mxu0 %v1888
    %2744 = vmatpush.bf16.msra.mxu0 %v1884
    %2745 = vmatpush.bf16.msra.mxu0 %v1880
    %2746 = vmatpush.bf16.msra.mxu0 %v1876
    %2747 = vmatpush.bf16.msra.mxu0 %v1872
    %2748 = vmatpush.bf16.msra.mxu0 %v1868
    %2749 = vmatpush.bf16.msra.mxu0 %v1864
    %2750 = vmatpush.bf16.msra.mxu0 %v1860
    %2751 = vmatmul.bf16.gmra.mxu0 %v2715
    %v2752 = vpop.f32.mrf.mxu0
    %v2753 = vadd.f32 0.0, %v2752
    %v2754 = vpop.f32.mrf.mxu0
    %2755 = vdwg.mxu0
    %2756 = vmatpush.bf16.msra.mxu0 %v1889
    %2757 = vmatpush.bf16.msra.mxu0 %v1885
    %2758 = vmatpush.bf16.msra.mxu0 %v1881
    %2759 = vmatpush.bf16.msra.mxu0 %v1877
    %2760 = vmatpush.bf16.msra.mxu0 %v1873
    %2761 = vmatpush.bf16.msra.mxu0 %v1869
    %2762 = vmatpush.bf16.msra.mxu0 %v1865
    %2763 = vmatpush.bf16.msra.mxu0 %v1861
    %2764 = vmatmul.bf16.gmra.mxu0 %v2715
    %v2765 = vpop.f32.mrf.mxu0
    %v2766 = vadd.f32 0.0, %v2765
    %v2767 = vpop.f32.mrf.mxu0
    %2768 = vdwg.mxu0
    %v2773 = vrot.slane %v2727, 4
    %v2774 = vrot.slane %v2740, 4
    %v2775 = vrot.slane %v2753, 4
    %v2776 = vrot.slane %v2766, 4
    %v2781 = vadd.f32 %v1680, %v2773
    %v2782 = vadd.f32 %v1694, %v2774
    %v2783 = vadd.f32 %v1708, %v2775
    %v2784 = vadd.f32 %v1722, %v2776
    %v2785 = vxor.u32 %v2781, 2147483648
    %v2786 = vmul.f32 %v2785, 1.442695
    %v2787 = vpow.pop %v2786
    %v2788 = vadd.f32 %v2787, 1.0
    %v2789 = vrcp.pop %v2788
    %v2790 = vmul.f32 %v2788, %v2789
    %v2791 = vsub.f32 1.0, %v2790
    %v2792 = vmul.f32 %v2789, %v2791
    %v2793 = vadd.f32 %v2789, %v2792
    %vm2794 = vweird.f32 %v2788
    %vm2795 = vweird.f32 %v2789
    %vm2796 = vmor %vm2794, %vm2795
    %v2797 = vsel %vm2796, %v2789, %v2793
    %v2798 = vand.u32 2147483647, %v2788
    %vm2799 = vcmp.eq.f32.partialorder %v2798, 8.507059e+37
    %v2800 = vand.u32 %v2788, 2147483648
    %v2801 = vor.u32 1.1754944e-38, %v2800
    %v2802 = vsel %vm2799, %v2801, %v2797
    %v2803 = vmul.f32 1.0, %v2802
    %v2804 = vxor.u32 %v2782, 2147483648
    %v2805 = vmul.f32 %v2804, 1.442695
    %v2806 = vpow.pop %v2805
    %v2807 = vadd.f32 %v2806, 1.0
    %v2808 = vrcp.pop %v2807
    %v2809 = vmul.f32 %v2807, %v2808
    %v2810 = vsub.f32 1.0, %v2809
    %v2811 = vmul.f32 %v2808, %v2810
    %v2812 = vadd.f32 %v2808, %v2811
    %vm2813 = vweird.f32 %v2807
    %vm2814 = vweird.f32 %v2808
    %vm2815 = vmor %vm2813, %vm2814
    %v2816 = vsel %vm2815, %v2808, %v2812
    %v2817 = vand.u32 2147483647, %v2807
    %vm2818 = vcmp.eq.f32.partialorder %v2817, 8.507059e+37
    %v2819 = vand.u32 %v2807, 2147483648
    %v2820 = vor.u32 1.1754944e-38, %v2819
    %v2821 = vsel %vm2818, %v2820, %v2816
    %v2822 = vmul.f32 1.0, %v2821
    %v2823 = vtanh.pop %v2783
    %v2824 = vxor.u32 %v2784, 2147483648
    %v2825 = vmul.f32 %v2824, 1.442695
    %v2826 = vpow.pop %v2825
    %v2827 = vadd.f32 %v2826, 1.0
    %v2828 = vrcp.pop %v2827
    %v2829 = vmul.f32 %v2827, %v2828
    %v2830 = vsub.f32 1.0, %v2829
    %v2831 = vmul.f32 %v2828, %v2830
    %v2832 = vadd.f32 %v2828, %v2831
    %vm2833 = vweird.f32 %v2827
    %vm2834 = vweird.f32 %v2828
    %vm2835 = vmor %vm2833, %vm2834
    %v2836 = vsel %vm2835, %v2828, %v2832
    %v2837 = vand.u32 2147483647, %v2827
    %vm2838 = vcmp.eq.f32.partialorder %v2837, 8.507059e+37
    %v2839 = vand.u32 %v2827, 2147483648
    %v2840 = vor.u32 1.1754944e-38, %v2839
    %v2841 = vsel %vm2838, %v2840, %v2836
    %v2842 = vmul.f32 1.0, %v2841
    %v2844 = vrot.slane %v2710, 6
    %v2846 = vmul.f32 %v2822, %v2844
    %v2847 = vmul.f32 %v2803, %v2823
    %v2848 = vadd.f32 %v2846, %v2847
    %v2849 = vtanh.pop %v2848
    %v2850 = vmul.f32 %v2842, %v2849
    %v2851 = vpack.c.bf16 %v2850, %v2850
    %v2853 = vrot.slane %v2851, 2
    %2855 = vmatpush.bf16.msra.mxu0 %v1886
    %2856 = vmatpush.bf16.msra.mxu0 %v1882
    %2857 = vmatpush.bf16.msra.mxu0 %v1878
    %2858 = vmatpush.bf16.msra.mxu0 %v1874
    %2859 = vmatpush.bf16.msra.mxu0 %v1870
    %2860 = vmatpush.bf16.msra.mxu0 %v1866
    %2861 = vmatpush.bf16.msra.mxu0 %v1862
    %2862 = vmatpush.bf16.msra.mxu0 %v1858
    %2863 = vmatmul.bf16.gmra.mxu0 %v2853
    %v2864 = vpop.f32.mrf.mxu0
    %v2865 = vadd.f32 0.0, %v2864
    %v2866 = vpop.f32.mrf.mxu0
    %2867 = vdwg.mxu0
    %2868 = vmatpush.bf16.msra.mxu0 %v1887
    %2869 = vmatpush.bf16.msra.mxu0 %v1883
    %2870 = vmatpush.bf16.msra.mxu0 %v1879
    %2871 = vmatpush.bf16.msra.mxu0 %v1875
    %2872 = vmatpush.bf16.msra.mxu0 %v1871
    %2873 = vmatpush.bf16.msra.mxu0 %v1867
    %2874 = vmatpush.bf16.msra.mxu0 %v1863
    %2875 = vmatpush.bf16.msra.mxu0 %v1859
    %2876 = vmatmul.bf16.gmra.mxu0 %v2853
    %v2877 = vpop.f32.mrf.mxu0
    %v2878 = vadd.f32 0.0, %v2877
    %v2879 = vpop.f32.mrf.mxu0
    %2880 = vdwg.mxu0
    %2881 = vmatpush.bf16.msra.mxu0 %v1888
    %2882 = vmatpush.bf16.msra.mxu0 %v1884
    %2883 = vmatpush.bf16.msra.mxu0 %v1880
    %2884 = vmatpush.bf16.msra.mxu0 %v1876
    %2885 = vmatpush.bf16.msra.mxu0 %v1872
    %2886 = vmatpush.bf16.msra.mxu0 %v1868
    %2887 = vmatpush.bf16.msra.mxu0 %v1864
    %2888 = vmatpush.bf16.msra.mxu0 %v1860
    %2889 = vmatmul.bf16.gmra.mxu0 %v2853
    %v2890 = vpop.f32.mrf.mxu0
    %v2891 = vadd.f32 0.0, %v2890
    %v2892 = vpop.f32.mrf.mxu0
    %2893 = vdwg.mxu0
    %2894 = vmatpush.bf16.msra.mxu0 %v1889
    %2895 = vmatpush.bf16.msra.mxu0 %v1885
    %2896 = vmatpush.bf16.msra.mxu0 %v1881
    %2897 = vmatpush.bf16.msra.mxu0 %v1877
    %2898 = vmatpush.bf16.msra.mxu0 %v1873
    %2899 = vmatpush.bf16.msra.mxu0 %v1869
    %2900 = vmatpush.bf16.msra.mxu0 %v1865
    %2901 = vmatpush.bf16.msra.mxu0 %v1861
    %2902 = vmatmul.bf16.gmra.mxu0 %v2853
    %v2903 = vpop.f32.mrf.mxu0
    %v2904 = vadd.f32 0.0, %v2903
    %v2905 = vpop.f32.mrf.mxu0
    %2906 = vdwg.mxu0
    %v2911 = vrot.slane %v2865, 2
    %v2912 = vrot.slane %v2878, 2
    %v2913 = vrot.slane %v2891, 2
    %v2914 = vrot.slane %v2904, 2
    %v2919 = vadd.f32 %v1680, %v2911
    %v2920 = vadd.f32 %v1694, %v2912
    %v2921 = vadd.f32 %v1708, %v2913
    %v2922 = vadd.f32 %v1722, %v2914
    %v2923 = vxor.u32 %v2919, 2147483648
    %v2924 = vmul.f32 %v2923, 1.442695
    %v2925 = vpow.pop %v2924
    %v2926 = vadd.f32 %v2925, 1.0
    %v2927 = vrcp.pop %v2926
    %v2928 = vmul.f32 %v2926, %v2927
    %v2929 = vsub.f32 1.0, %v2928
    %v2930 = vmul.f32 %v2927, %v2929
    %v2931 = vadd.f32 %v2927, %v2930
    %vm2932 = vweird.f32 %v2926
    %vm2933 = vweird.f32 %v2927
    %vm2934 = vmor %vm2932, %vm2933
    %v2935 = vsel %vm2934, %v2927, %v2931
    %v2936 = vand.u32 2147483647, %v2926
    %vm2937 = vcmp.eq.f32.partialorder %v2936, 8.507059e+37
    %v2938 = vand.u32 %v2926, 2147483648
    %v2939 = vor.u32 1.1754944e-38, %v2938
    %v2940 = vsel %vm2937, %v2939, %v2935
    %v2941 = vmul.f32 1.0, %v2940
    %v2942 = vxor.u32 %v2920, 2147483648
    %v2943 = vmul.f32 %v2942, 1.442695
    %v2944 = vpow.pop %v2943
    %v2945 = vadd.f32 %v2944, 1.0
    %v2946 = vrcp.pop %v2945
    %v2947 = vmul.f32 %v2945, %v2946
    %v2948 = vsub.f32 1.0, %v2947
    %v2949 = vmul.f32 %v2946, %v2948
    %v2950 = vadd.f32 %v2946, %v2949
    %vm2951 = vweird.f32 %v2945
    %vm2952 = vweird.f32 %v2946
    %vm2953 = vmor %vm2951, %vm2952
    %v2954 = vsel %vm2953, %v2946, %v2950
    %v2955 = vand.u32 2147483647, %v2945
    %vm2956 = vcmp.eq.f32.partialorder %v2955, 8.507059e+37
    %v2957 = vand.u32 %v2945, 2147483648
    %v2958 = vor.u32 1.1754944e-38, %v2957
    %v2959 = vsel %vm2956, %v2958, %v2954
    %v2960 = vmul.f32 1.0, %v2959
    %v2961 = vtanh.pop %v2921
    %v2962 = vxor.u32 %v2922, 2147483648
    %v2963 = vmul.f32 %v2962, 1.442695
    %v2964 = vpow.pop %v2963
    %v2965 = vadd.f32 %v2964, 1.0
    %v2966 = vrcp.pop %v2965
    %v2967 = vmul.f32 %v2965, %v2966
    %v2968 = vsub.f32 1.0, %v2967
    %v2969 = vmul.f32 %v2966, %v2968
    %v2970 = vadd.f32 %v2966, %v2969
    %vm2971 = vweird.f32 %v2965
    %vm2972 = vweird.f32 %v2966
    %vm2973 = vmor %vm2971, %vm2972
    %v2974 = vsel %vm2973, %v2966, %v2970
    %v2975 = vand.u32 2147483647, %v2965
    %vm2976 = vcmp.eq.f32.partialorder %v2975, 8.507059e+37
    %v2977 = vand.u32 %v2965, 2147483648
    %v2978 = vor.u32 1.1754944e-38, %v2977
    %v2979 = vsel %vm2976, %v2978, %v2974
    %v2980 = vmul.f32 1.0, %v2979
    %v2982 = vrot.slane %v2848, 6
    %v2984 = vmul.f32 %v2960, %v2982
    %v2985 = vmul.f32 %v2941, %v2961
    %v2986 = vadd.f32 %v2984, %v2985
    %v2987 = vtanh.pop %v2986
    %v2988 = vmul.f32 %v2980, %v2987
    %s2989 = scalar_lea.vmem %s11, 2
    %2990 = vst [vmem:[%s2989 - $0x6] sm:$0xc0] %v2988
    %s2991 = scalar_lea.vmem %s12, 2
    %2992 = vst [vmem:[%s2991 - $0x6] sm:$0xc0] %v2986
    %v2993 = vpack.c.bf16 %v2988, %v2988
    %v2994 = vld [vmem:[%s6] sm:$0xf]
    %v2995 = vld [vmem:[%s6 + $0x4] sm:$0xf]
    %v2996 = vld [vmem:[%s6 + $0x8] sm:$0xf]
    %v2997 = vld [vmem:[%s6 + $0xc] sm:$0xf]
    %v2998 = vld [vmem:[%s6 + $0x10] sm:$0xf]
    %v2999 = vld [vmem:[%s6 + $0x14] sm:$0xf]
    %v3000 = vld [vmem:[%s6 + $0x18] sm:$0xf]
    %v3001 = vld [vmem:[%s6 + $0x1c] sm:$0xf]
    %v3002 = vld [vmem:[%s6 + $0x20] sm:$0xf]
    %v3003 = vld [vmem:[%s6 + $0x24] sm:$0xf]
    %v3004 = vld [vmem:[%s6 + $0x28] sm:$0xf]
    %v3005 = vld [vmem:[%s6 + $0x2c] sm:$0xf]
    %v3006 = vld [vmem:[%s6 + $0x30] sm:$0xf]
    %v3007 = vld [vmem:[%s6 + $0x34] sm:$0xf]
    %v3008 = vld [vmem:[%s6 + $0x38] sm:$0xf]
    %v3009 = vld [vmem:[%s6 + $0x3c] sm:$0xf]
    %v3010 = vld [vmem:[%s7] sm:$0x1]
    %v3012 = vperm.slane %v3010, 0
    %v3015 = vrot.slane %v2993, 3
    %v3033 = vunpack.c.l.b16 %v2994
    %v3034 = vunpack.c.l.b16 %v2995
    %v3035 = vunpack.c.l.b16 %v2996
    %v3036 = vunpack.c.l.b16 %v2997
    %v3037 = vunpack.c.l.b16 %v2998
    %v3038 = vunpack.c.l.b16 %v2999
    %v3039 = vunpack.c.l.b16 %v3000
    %v3040 = vunpack.c.l.b16 %v3001
    %v3041 = vunpack.c.l.b16 %v3002
    %v3042 = vunpack.c.l.b16 %v3003
    %v3043 = vunpack.c.l.b16 %v3004
    %v3044 = vunpack.c.l.b16 %v3005
    %v3045 = vunpack.c.l.b16 %v3006
    %v3046 = vunpack.c.l.b16 %v3007
    %v3047 = vunpack.c.l.b16 %v3008
    %v3048 = vunpack.c.l.b16 %v3009
    %v3049 = vpack.c.b16 %v3034, %v3033
    %v3050 = vpack.c.b16 %v3036, %v3035
    %v3051 = vpack.c.b16 %v3038, %v3037
    %v3052 = vpack.c.b16 %v3040, %v3039
    %v3053 = vpack.c.b16 %v3042, %v3041
    %v3054 = vpack.c.b16 %v3044, %v3043
    %v3055 = vpack.c.b16 %v3046, %v3045
    %v3056 = vpack.c.b16 %v3048, %v3047
    %3065 = vmatpush.bf16.msra.mxu0 %v3056
    %3066 = vmatpush.bf16.msra.mxu0 %v3055
    %3067 = vmatpush.bf16.msra.mxu0 %v3054
    %3068 = vmatpush.bf16.msra.mxu0 %v3053
    %3069 = vmatpush.bf16.msra.mxu0 %v3052
    %3070 = vmatpush.bf16.msra.mxu0 %v3051
    %3071 = vmatpush.bf16.msra.mxu0 %v3050
    %3072 = vmatpush.bf16.msra.mxu0 %v3049
    %3073 = vmatmul.bf16.gmra.mxu0 %v3015
    %v3074 = vpop.f32.mrf.mxu0
    %v3075 = vadd.f32 %v3012, %v3074
    %v3076 = vpop.f32.mrf.mxu0
    %3077 = vdwg.mxu0
    %vm3078 = vcmask 41984
    %3079 = vst.msk [vmem:[#allocation8] sm:$0x3] %vm3078, %v3075
    // Predicated region
    $region50: #{recurrent_forward.1} parent=1 // pred_check
      _
    $region51: #{recurrent_forward.1} parent=1 // pred_check_branch
      %3081 = sbr.rel (0) target = $region53
    $region52: #{recurrent_forward.1} parent=1 // pred_region
      %3083 = vsyncadd [#allocation5], 0
      %s3085 = sshll.u32 [#allocation8], 4
      %s3086 = int_to_ptr.vmem [resolvable:$true] %s3085
      %s3087 = sshll.u32 %s10, 4
      %s3088 = int_to_ptr.hbm [resolvable:$true] %s3087
      %3090 = dma.vmem_to_hbm [thread:$0]  %s3086, 32, %s3088, [#allocation5]
    $region53: #{recurrent_forward.1} parent=1 // pred_fallthru
      _
    // Predicated region
    $region54: #{recurrent_forward.1} parent=1 // pred_check
      _
    $region55: #{recurrent_forward.1} parent=1 // pred_check_branch
      %3092 = sbr.rel (0) target = $region57
    $region56: #{recurrent_forward.1} parent=1 // pred_region
      _
    $region57: #{recurrent_forward.1} parent=1 // pred_fallthru
      _
    // Predicated region
    $region58: #{recurrent_forward.1} parent=1 // pred_check
      _
    $region59: #{recurrent_forward.1} parent=1 // pred_check_branch
      %3094 = sbr.rel (0) target = $region61
    $region60: #{recurrent_forward.1} parent=1 // pred_region
      _
    $region61: #{recurrent_forward.1} parent=1 // pred_fallthru
      _
    // Predicated region
    $region62: #{recurrent_forward.1} parent=1 // pred_check
      _
    $region63: #{recurrent_forward.1} parent=1 // pred_check_branch
      %3096 = sbr.rel (0) target = $region65
    $region64: #{recurrent_forward.1} parent=1 // pred_region
      %3098 = dma.done [#allocation5], 32
    $region65: #{recurrent_forward.1} parent=1 // pred_fallthru
      _
    // Predicated region
    $region66: #{recurrent_forward.1} parent=1 // pred_check
      _
    $region67: #{recurrent_forward.1} parent=1 // pred_check_branch
      %3100 = sbr.rel (0) target = $region69
    $region68: #{recurrent_forward.1} parent=1 // pred_region
      _
    $region69: #{recurrent_forward.1} parent=1 // pred_fallthru
      _
    // Predicated region
    $region70: #{recurrent_forward.1} parent=1 // pred_check
      _
    $region71: #{recurrent_forward.1} parent=1 // pred_check_branch
      %3102 = sbr.rel (0) target = $region73
    $region72: #{recurrent_forward.1} parent=1 // pred_region
      _
    $region73: #{recurrent_forward.1} parent=1 // pred_fallthru
      _
    %3103 = vsyncpa [#allocation4], 1
    %3104 = vsyncpa [#allocation7], 1
    %3105 = vsyncpa [#allocation5], 1

</llo_original>
